<compile_context>
chip_gen: v6e
topology: v6e:2x2x1
jax: 0.10.0
libtpu: 0.0.40
codegen_flags: <defaults>
</compile_context>

<pallas_src>
import functools

import jax
import jax.numpy as jnp
from jax.experimental import pallas as pl
from jax.experimental.pallas import tpu as pltpu


def _round_up(v, m):
    return ((v + m - 1) // m) * m


# ----------------------------------------------------------------------------
# Fused kernel: one grid step = full forward pass for a block of `block_b`
# images.  Activation layout: [channels (sublanes), block_b * seg_w (lanes)].
#
# refs = (a0,
#         [conv_w_folded, conv_b] * n_conv,
#         fc1_w_expanded, fc1_b, [fc_w, fc_b] * (n_fc - 1),
#         out,
#         [stack_scratch_i, act_scratch_i] * n_conv, flat_scratch)
# ----------------------------------------------------------------------------
def _fused_forward_kernel(*refs, n_conv, n_fc, img_w, ksizes, cin_pads,
                          seg_w, grid_p, block_b, slope):
    idx = 0
    a0_ref = refs[idx]; idx += 1
    conv_refs = refs[idx:idx + 2 * n_conv]; idx += 2 * n_conv
    fc_refs = refs[idx:idx + 2 * n_fc]; idx += 2 * n_fc
    out_ref = refs[idx]; idx += 1
    scratch = refs[idx:]
    stack_refs = [scratch[2 * i] for i in range(n_conv)]
    act_refs = [scratch[2 * i + 1] for i in range(n_conv)]
    flat_ref = scratch[2 * n_conv]

    def leaky(v):
        return jnp.where(v >= 0, v, slope * v)

    # ---- conv stack: fold the k*k taps into one [O, Cin*k*k] @ [Cin*k*k, L]
    # matmul per layer (accumulation inside the MXU). ----
    for layer in range(n_conv):
        w_ref, b_ref = conv_refs[2 * layer], conv_refs[2 * layer + 1]
        stk, dst = stack_refs[layer], act_refs[layer]
        cin, ksz = cin_pads[layer], ksizes[layer]
        out_len = dst.shape[1]
        for k in range(ksz * ksz):                 # sublane-stack shifted taps
            s = (k // ksz) * img_w + (k % ksz)     # static lane offset of tap k
            if layer == 0:
                blk = a0_ref[0, :, s:s + out_len]
            else:
                blk = act_refs[layer - 1][:, s:s + out_len]
            stk[k * cin:(k + 1) * cin, :] = blk
        y = jnp.dot(w_ref[...], stk[...], preferred_element_type=jnp.float32)
        dst[...] = leaky(y + b_ref[...])           # bias [O,1] broadcasts on lanes

    # ---- conv -> fc layout change: per (image, channel) aligned 256-lane row
    # copies into [B, C_last*grid_p].  Invalid grid positions are neutralized
    # by zero rows of the expanded fc1 weight. ----
    last = act_refs[n_conv - 1]
    c_last = last.shape[0]
    for b in range(block_b):
        for c in range(c_last):
            flat_ref[b:b + 1, c * grid_p:(c + 1) * grid_p] = (
                last[c:c + 1, b * seg_w:b * seg_w + grid_p])

    # ---- fc stack: fc1 is a single [B, C_last*grid_p] @ [.., F1] matmul ----
    h = jnp.dot(flat_ref[...], fc_refs[0][...],
                preferred_element_type=jnp.float32) + fc_refs[1][...]
    if n_fc > 1:
        h = leaky(h)
    for i in range(1, n_fc):
        w_ref, b_ref = fc_refs[2 * i], fc_refs[2 * i + 1]
        h = jnp.dot(h, w_ref[...], preferred_element_type=jnp.float32) + b_ref[...]
        if i < n_fc - 1:                           # last Linear has no LeakyReLU
            h = leaky(h)
    out_ref[0, :, :] = h.astype(out_ref.dtype)     # one store / one DMA per block


# ----------------------------------------------------------------------------
# Wrapper: one-time (plain JAX) weight/layout prep + single pallas_call.
# ----------------------------------------------------------------------------
def energy_function_forward(x, conv_params, fc_params, l=0.2, block_batch=8):
    """x: [N, C, H, W]; conv_params: [(w[O,C,k,k], b[O])]; fc_params: [(w[fin,fout], b[fout])]."""
    n, c0, hh, ww = x.shape
    n_conv, n_fc = len(conv_params), len(fc_params)
    assert n_conv >= 1 and n_fc >= 1
    grid_p = hh * ww                         # per-image spatial grid size
    seg_w = _round_up(grid_p, 128)           # per-image lane stride (128-aligned)

    ksizes = []
    for (w, _) in conv_params:
        assert w.shape[2] == w.shape[3], "square kernels only (stride=1, pad=0)"
        ksizes.append(int(w.shape[2]))
    shifts = [(k - 1) * ww + (k - 1) for k in ksizes]   # max tap lane offset

    # ---- batch blocking ----
    bb = max(1, min(block_batch, n))
    num_blocks = -(-n // bb)
    n_pad = num_blocks * bb

    # ---- per-layer lane lengths (last -> first), each a multiple of 128 ----
    lane_lens = [0] * n_conv
    lane_lens[-1] = bb * seg_w
    for i in range(n_conv - 2, -1, -1):
        lane_lens[i] = _round_up(lane_lens[i + 1] + shifts[i + 1], 128)
    in_len = _round_up(lane_lens[0] + shifts[0], 128)

    # ---- input: [num_blocks, c0_pad, in_len]; images packed along lanes ----
    c0_pad = _round_up(c0, 8)
    a0 = x.reshape(n, c0, grid_p)
    a0 = jnp.pad(a0, ((0, n_pad - n), (0, c0_pad - c0), (0, seg_w - grid_p)))
    a0 = a0.reshape(num_blocks, bb, c0_pad, seg_w).transpose(0, 2, 1, 3)
    a0 = a0.reshape(num_blocks, c0_pad, bb * seg_w)
    a0 = jnp.pad(a0, ((0, 0), (0, 0), (0, in_len - bb * seg_w)))

    args = [a0]
    in_specs = [pl.BlockSpec((1, c0_pad, in_len), lambda g: (g, 0, 0))]

    def add_const(arr):
        args.append(arr)
        rank = arr.ndim
        in_specs.append(pl.BlockSpec(arr.shape, lambda g, _r=rank: (0,) * _r))

    # ---- conv weights folded to [O, k*k*Cin_pad]; row = tap*Cin_pad + c ----
    cin_pads = []
    cur_c = c0_pad
    oh, ow = hh, ww
    for (w, b) in conv_params:
        o, ci, kh, kw = w.shape
        assert ci <= cur_c
        cin_pads.append(cur_c)
        w2 = jnp.pad(w, ((0, 0), (0, cur_c - ci), (0, 0), (0, 0)))
        wf = w2.transpose(0, 2, 3, 1).reshape(o, kh * kw * cur_c)
        add_const(wf)
        add_const(b.reshape(o, 1))
        cur_c = o
        oh, ow = oh - kh + 1, ow - kw + 1

    # ---- fc1: rows scattered onto the HxW grid (zeros at invalid positions),
    # flattened to [C_last*grid_p, F1] so fc1 is one big matmul in-kernel ----
    c_last = cur_c
    w1, b1 = fc_params[0]
    f1 = int(w1.shape[1])
    assert w1.shape[0] == c_last * oh * ow
    w1r = w1.reshape(c_last, oh, ow, f1)                      # torch NCHW flatten order
    w1exp = jnp.zeros((c_last, hh, ww, f1), w1.dtype).at[:, :oh, :ow, :].set(w1r)
    add_const(w1exp.reshape(c_last * grid_p, f1))
    add_const(b1.reshape(1, f1))
    for (w, b) in fc_params[1:]:
        add_const(w)
        add_const(b.reshape(1, -1))
    f_last = int(fc_params[-1][0].shape[1])

    # ---- VMEM scratch: per conv layer a stacked-tap block + its output; plus
    # the flattened activation used by fc1 ----
    scratch_shapes = []
    for li in range(n_conv):
        o = int(conv_params[li][0].shape[0])
        k = ksizes[li]
        scratch_shapes.append(pltpu.VMEM((cin_pads[li] * k * k, lane_lens[li]), jnp.float32))
        scratch_shapes.append(pltpu.VMEM((o, lane_lens[li]), jnp.float32))
    scratch_shapes.append(pltpu.VMEM((bb, c_last * grid_p), jnp.float32))

    kernel = functools.partial(
        _fused_forward_kernel,
        n_conv=n_conv, n_fc=n_fc, img_w=ww, ksizes=tuple(ksizes),
        cin_pads=tuple(cin_pads), seg_w=seg_w, grid_p=grid_p,
        block_b=bb, slope=l)

    out = pl.pallas_call(
        kernel,
        out_shape=jax.ShapeDtypeStruct((num_blocks, bb, f_last), x.dtype),
        grid=(num_blocks,),
        in_specs=in_specs,
        out_specs=pl.BlockSpec((1, bb, f_last), lambda g: (g, 0, 0)),
        scratch_shapes=scratch_shapes,
        compiler_params=pltpu.CompilerParams(
            dimension_semantics=("parallel",),        # batch blocks shard across TCs
            vmem_limit_bytes=32 * 1024 * 1024,        # safe on v5e/v6e/v7x
        ),
    )(*args)
    out = out.reshape(num_blocks * bb, f_last)[:n]
    return jnp.squeeze(out)


# ----------------------------------------------------------------------------
# Pure-JAX reference for correctness check
# ----------------------------------------------------------------------------
def reference_forward(x, conv_params, fc_params, l=0.2):
    def leaky(v):
        return jnp.where(v >= 0, v, l * v)

    for (w, b) in conv_params:
        y = jax.lax.conv_general_dilated(
            x, w, window_strides=(1, 1), padding="VALID",
            dimension_numbers=("NCHW", "OIHW", "NCHW"))
        x = leaky(y + b.reshape(1, -1, 1, 1))
    n = x.shape[0]
    x = x.reshape(n, -1)
    num_fc = len(fc_params)
    for idx, (w, b) in enumerate(fc_params):
        x = x @ w + b
        if idx < num_fc - 1:
            x = leaky(x)
    return jnp.squeeze(x)


if __name__ == "__main__":
    key = jax.random.PRNGKey(0)

    conv_layer_params = [(4, 8, 3), (8, 16, 3)]          # (in_ch, out_ch, kernel)
    # input 16x16 -> 14x14 -> 12x12 ; flatten dim = 16*12*12 = 2304
    fc_layer_params = [(16 * 12 * 12, 32), (32, 1)]
    l = 0.2

    keys = jax.random.split(key, 1 + 2 * (len(conv_layer_params) + len(fc_layer_params)))
    kidx = 0

    x = jax.random.normal(keys[kidx], (2, 4, 16, 16), dtype=jnp.float32)
    kidx += 1

    conv_params = []
    for (cin, cout, k) in conv_layer_params:
        w = 0.1 * jax.random.normal(keys[kidx], (cout, cin, k, k), dtype=jnp.float32)
        kidx += 1
        b = 0.1 * jax.random.normal(keys[kidx], (cout,), dtype=jnp.float32)
        kidx += 1
        conv_params.append((w, b))

    fc_params = []
    for (fin, fout) in fc_layer_params:
        w = 0.05 * jax.random.normal(keys[kidx], (fin, fout), dtype=jnp.float32)
        kidx += 1
        b = 0.05 * jax.random.normal(keys[kidx], (fout,), dtype=jnp.float32)
        kidx += 1
        fc_params.append((w, b))

    out = energy_function_forward(x, conv_params, fc_params, l=l)
    out = jax.block_until_ready(out)

    ref = reference_forward(x, conv_params, fc_params, l=l)
    assert out.shape == ref.shape == (2,), (out.shape, ref.shape)
    assert jnp.allclose(out, ref, atol=1e-4, rtol=1e-4), (out, ref)

    print("KERNEL_OK")
</pallas_src>

<mosaic_0001>
module attributes {stable_mosaic.version = 11 : i64} {
  func.func @_fused_forward_kernel(%arg0: i32, %arg1: memref<1x8x768xf32, #tpu.memory_space<vmem>>, %arg2: memref<8x72xf32, #tpu.memory_space<vmem>>, %arg3: memref<8x1xf32, #tpu.memory_space<vmem>>, %arg4: memref<16x72xf32, #tpu.memory_space<vmem>>, %arg5: memref<16x1xf32, #tpu.memory_space<vmem>>, %arg6: memref<4096x32xf32, #tpu.memory_space<vmem>>, %arg7: memref<1x32xf32, #tpu.memory_space<vmem>>, %arg8: memref<32x1xf32, #tpu.memory_space<vmem>>, %arg9: memref<1x1xf32, #tpu.memory_space<vmem>>, %arg10: memref<1x2x1xf32, #tpu.memory_space<vmem>>, %arg11: memref<72x640xf32, #tpu.memory_space<vmem>>, %arg12: memref<8x640xf32, #tpu.memory_space<vmem>>, %arg13: memref<72x512xf32, #tpu.memory_space<vmem>>, %arg14: memref<16x512xf32, #tpu.memory_space<vmem>>, %arg15: memref<2x4096xf32, #tpu.memory_space<vmem>>) attributes {dimension_semantics = [#tpu.dimension_semantics<parallel>], iteration_bounds = array<i64: 1>, scalar_prefetch = 0 : i64, scratch_operands = 5 : i64, tpu.core_type = #tpu.core_type<tc>, window_params = [{transform_indices = @transform_0, window_bounds = array<i64: 1, 8, 768>}, {pipeline_mode = #tpu.pipeline_mode<synchronous>, transform_indices = @transform_1, window_bounds = array<i64: 8, 72>}, {pipeline_mode = #tpu.pipeline_mode<synchronous>, transform_indices = @transform_2, window_bounds = array<i64: 8, 1>}, {pipeline_mode = #tpu.pipeline_mode<synchronous>, transform_indices = @transform_3, window_bounds = array<i64: 16, 72>}, {pipeline_mode = #tpu.pipeline_mode<synchronous>, transform_indices = @transform_4, window_bounds = array<i64: 16, 1>}, {pipeline_mode = #tpu.pipeline_mode<synchronous>, transform_indices = @transform_5, window_bounds = array<i64: 4096, 32>}, {pipeline_mode = #tpu.pipeline_mode<synchronous>, transform_indices = @transform_6, window_bounds = array<i64: 1, 32>}, {pipeline_mode = #tpu.pipeline_mode<synchronous>, transform_indices = @transform_7, window_bounds = array<i64: 32, 1>}, {pipeline_mode = #tpu.pipeline_mode<synchronous>, transform_indices = @transform_8, window_bounds = array<i64: 1, 1>}, {transform_indices = @transform_9, window_bounds = array<i64: 1, 2, 1>}]} {
    %c0 = arith.constant 0 : index
    %c0_0 = arith.constant 0 : index
    %c0_1 = arith.constant 0 : index
    %0 = vector.load %arg1[%c0, %c0_0, %c0_1] : memref<1x8x768xf32, #tpu.memory_space<vmem>>, vector<1x8x640xf32>
    %1 = vector.shape_cast %0 : vector<1x8x640xf32> to vector<8x640xf32>
    %c0_2 = arith.constant 0 : index
    %c0_3 = arith.constant 0 : index
    %2 = vector.load %arg11[%c0_2, %c0_3] : memref<72x640xf32, #tpu.memory_space<vmem>>, vector<8x640xf32>
    tpu.vector_store %arg11[%c0_2, %c0_3], %1 {strides = array<i32>} : memref<72x640xf32, #tpu.memory_space<vmem>>, vector<8x640xf32>,
    %c0_4 = arith.constant 0 : index
    %c0_5 = arith.constant 0 : index
    %c1 = arith.constant 1 : index
    %3 = vector.load %arg1[%c0_4, %c0_5, %c1] : memref<1x8x768xf32, #tpu.memory_space<vmem>>, vector<1x8x640xf32>
    %4 = vector.shape_cast %3 : vector<1x8x640xf32> to vector<8x640xf32>
    %c8 = arith.constant 8 : index
    %c0_6 = arith.constant 0 : index
    %5 = vector.load %arg11[%c8, %c0_6] : memref<72x640xf32, #tpu.memory_space<vmem>>, vector<8x640xf32>
    tpu.vector_store %arg11[%c8, %c0_6], %4 {strides = array<i32>} : memref<72x640xf32, #tpu.memory_space<vmem>>, vector<8x640xf32>,
    %c0_7 = arith.constant 0 : index
    %c0_8 = arith.constant 0 : index
    %c2 = arith.constant 2 : index
    %6 = vector.load %arg1[%c0_7, %c0_8, %c2] : memref<1x8x768xf32, #tpu.memory_space<vmem>>, vector<1x8x640xf32>
    %7 = vector.shape_cast %6 : vector<1x8x640xf32> to vector<8x640xf32>
    %c16 = arith.constant 16 : index
    %c0_9 = arith.constant 0 : index
    %8 = vector.load %arg11[%c16, %c0_9] : memref<72x640xf32, #tpu.memory_space<vmem>>, vector<8x640xf32>
    tpu.vector_store %arg11[%c16, %c0_9], %7 {strides = array<i32>} : memref<72x640xf32, #tpu.memory_space<vmem>>, vector<8x640xf32>,
    %c0_10 = arith.constant 0 : index
    %c0_11 = arith.constant 0 : index
    %c16_12 = arith.constant 16 : index
    %9 = vector.load %arg1[%c0_10, %c0_11, %c16_12] : memref<1x8x768xf32, #tpu.memory_space<vmem>>, vector<1x8x640xf32>
    %10 = vector.shape_cast %9 : vector<1x8x640xf32> to vector<8x640xf32>
    %c24 = arith.constant 24 : index
    %c0_13 = arith.constant 0 : index
    %11 = vector.load %arg11[%c24, %c0_13] : memref<72x640xf32, #tpu.memory_space<vmem>>, vector<8x640xf32>
    tpu.vector_store %arg11[%c24, %c0_13], %10 {strides = array<i32>} : memref<72x640xf32, #tpu.memory_space<vmem>>, vector<8x640xf32>,
    %c0_14 = arith.constant 0 : index
    %c0_15 = arith.constant 0 : index
    %c17 = arith.constant 17 : index
    %12 = vector.load %arg1[%c0_14, %c0_15, %c17] : memref<1x8x768xf32, #tpu.memory_space<vmem>>, vector<1x8x640xf32>
    %13 = vector.shape_cast %12 : vector<1x8x640xf32> to vector<8x640xf32>
    %c32 = arith.constant 32 : index
    %c0_16 = arith.constant 0 : index
    %14 = vector.load %arg11[%c32, %c0_16] : memref<72x640xf32, #tpu.memory_space<vmem>>, vector<8x640xf32>
    tpu.vector_store %arg11[%c32, %c0_16], %13 {strides = array<i32>} : memref<72x640xf32, #tpu.memory_space<vmem>>, vector<8x640xf32>,
    %c0_17 = arith.constant 0 : index
    %c0_18 = arith.constant 0 : index
    %c18 = arith.constant 18 : index
    %15 = vector.load %arg1[%c0_17, %c0_18, %c18] : memref<1x8x768xf32, #tpu.memory_space<vmem>>, vector<1x8x640xf32>
    %16 = vector.shape_cast %15 : vector<1x8x640xf32> to vector<8x640xf32>
    %c40 = arith.constant 40 : index
    %c0_19 = arith.constant 0 : index
    %17 = vector.load %arg11[%c40, %c0_19] : memref<72x640xf32, #tpu.memory_space<vmem>>, vector<8x640xf32>
    tpu.vector_store %arg11[%c40, %c0_19], %16 {strides = array<i32>} : memref<72x640xf32, #tpu.memory_space<vmem>>, vector<8x640xf32>,
    %c0_20 = arith.constant 0 : index
    %c0_21 = arith.constant 0 : index
    %c32_22 = arith.constant 32 : index
    %18 = vector.load %arg1[%c0_20, %c0_21, %c32_22] : memref<1x8x768xf32, #tpu.memory_space<vmem>>, vector<1x8x640xf32>
    %19 = vector.shape_cast %18 : vector<1x8x640xf32> to vector<8x640xf32>
    %c48 = arith.constant 48 : index
    %c0_23 = arith.constant 0 : index
    %20 = vector.load %arg11[%c48, %c0_23] : memref<72x640xf32, #tpu.memory_space<vmem>>, vector<8x640xf32>
    tpu.vector_store %arg11[%c48, %c0_23], %19 {strides = array<i32>} : memref<72x640xf32, #tpu.memory_space<vmem>>, vector<8x640xf32>,
    %c0_24 = arith.constant 0 : index
    %c0_25 = arith.constant 0 : index
    %c33 = arith.constant 33 : index
    %21 = vector.load %arg1[%c0_24, %c0_25, %c33] : memref<1x8x768xf32, #tpu.memory_space<vmem>>, vector<1x8x640xf32>
    %22 = vector.shape_cast %21 : vector<1x8x640xf32> to vector<8x640xf32>
    %c56 = arith.constant 56 : index
    %c0_26 = arith.constant 0 : index
    %23 = vector.load %arg11[%c56, %c0_26] : memref<72x640xf32, #tpu.memory_space<vmem>>, vector<8x640xf32>
    tpu.vector_store %arg11[%c56, %c0_26], %22 {strides = array<i32>} : memref<72x640xf32, #tpu.memory_space<vmem>>, vector<8x640xf32>,
    %c0_27 = arith.constant 0 : index
    %c0_28 = arith.constant 0 : index
    %c34 = arith.constant 34 : index
    %24 = vector.load %arg1[%c0_27, %c0_28, %c34] : memref<1x8x768xf32, #tpu.memory_space<vmem>>, vector<1x8x640xf32>
    %25 = vector.shape_cast %24 : vector<1x8x640xf32> to vector<8x640xf32>
    %c64 = arith.constant 64 : index
    %c0_29 = arith.constant 0 : index
    %26 = vector.load %arg11[%c64, %c0_29] : memref<72x640xf32, #tpu.memory_space<vmem>>, vector<8x640xf32>
    tpu.vector_store %arg11[%c64, %c0_29], %25 {strides = array<i32>} : memref<72x640xf32, #tpu.memory_space<vmem>>, vector<8x640xf32>,
    %c0_30 = arith.constant 0 : index
    %c0_31 = arith.constant 0 : index
    %27 = vector.load %arg2[%c0_30, %c0_31] : memref<8x72xf32, #tpu.memory_space<vmem>>, vector<8x72xf32>
    %c0_32 = arith.constant 0 : index
    %c0_33 = arith.constant 0 : index
    %28 = vector.load %arg11[%c0_32, %c0_33] : memref<72x640xf32, #tpu.memory_space<vmem>>, vector<72x640xf32>
    %cst = arith.constant dense<0.000000e+00> : vector<8x640xf32>
    %29 = tpu.matmul %27, %28, %cst {dimension_numbers = #tpu.dot_dimension_numbers<[1], [0], [0], [1], [0, 0, 1, 1], [], []>} : vector<8x72xf32>, vector<72x640xf32>, vector<8x640xf32> -> vector<8x640xf32>
    %c0_34 = arith.constant 0 : index
    %c0_35 = arith.constant 0 : index
    %30 = vector.load %arg3[%c0_34, %c0_35] : memref<8x1xf32, #tpu.memory_space<vmem>>, vector<8x1xf32>
    %31 = vector.broadcast %30 : vector<8x1xf32> to vector<8x640xf32>
    %32 = arith.addf %29, %31 : vector<8x640xf32>
    %cst_36 = arith.constant 0.000000e+00 : f32
    %33 = vector.broadcast %cst_36 : f32 to vector<8x640xf32>
    %34 = arith.cmpf oge, %32, %33 : vector<8x640xf32>
    %cst_37 = arith.constant 2.000000e-01 : f32
    %35 = vector.broadcast %cst_37 : f32 to vector<8x640xf32>
    %36 = arith.mulf %35, %32 : vector<8x640xf32>
    %37 = arith.select %34, %32, %36 : vector<8x640xi1>, vector<8x640xf32>
    %c0_38 = arith.constant 0 : index
    %c0_39 = arith.constant 0 : index
    %38 = vector.load %arg12[%c0_38, %c0_39] : memref<8x640xf32, #tpu.memory_space<vmem>>, vector<8x640xf32>
    tpu.vector_store %arg12[%c0_38, %c0_39], %37 {strides = array<i32>} : memref<8x640xf32, #tpu.memory_space<vmem>>, vector<8x640xf32>,
    %c0_40 = arith.constant 0 : index
    %c0_41 = arith.constant 0 : index
    %39 = vector.load %arg12[%c0_40, %c0_41] : memref<8x640xf32, #tpu.memory_space<vmem>>, vector<8x512xf32>
    %c0_42 = arith.constant 0 : index
    %c0_43 = arith.constant 0 : index
    %40 = vector.load %arg13[%c0_42, %c0_43] : memref<72x512xf32, #tpu.memory_space<vmem>>, vector<8x512xf32>
    tpu.vector_store %arg13[%c0_42, %c0_43], %39 {strides = array<i32>} : memref<72x512xf32, #tpu.memory_space<vmem>>, vector<8x512xf32>,
    %c0_44 = arith.constant 0 : index
    %c1_45 = arith.constant 1 : index
    %41 = vector.load %arg12[%c0_44, %c1_45] : memref<8x640xf32, #tpu.memory_space<vmem>>, vector<8x512xf32>
    %c8_46 = arith.constant 8 : index
    %c0_47 = arith.constant 0 : index
    %42 = vector.load %arg13[%c8_46, %c0_47] : memref<72x512xf32, #tpu.memory_space<vmem>>, vector<8x512xf32>
    tpu.vector_store %arg13[%c8_46, %c0_47], %41 {strides = array<i32>} : memref<72x512xf32, #tpu.memory_space<vmem>>, vector<8x512xf32>,
    %c0_48 = arith.constant 0 : index
    %c2_49 = arith.constant 2 : index
    %43 = vector.load %arg12[%c0_48, %c2_49] : memref<8x640xf32, #tpu.memory_space<vmem>>, vector<8x512xf32>
    %c16_50 = arith.constant 16 : index
    %c0_51 = arith.constant 0 : index
    %44 = vector.load %arg13[%c16_50, %c0_51] : memref<72x512xf32, #tpu.memory_space<vmem>>, vector<8x512xf32>
    tpu.vector_store %arg13[%c16_50, %c0_51], %43 {strides = array<i32>} : memref<72x512xf32, #tpu.memory_space<vmem>>, vector<8x512xf32>,
    %c0_52 = arith.constant 0 : index
    %c16_53 = arith.constant 16 : index
    %45 = vector.load %arg12[%c0_52, %c16_53] : memref<8x640xf32, #tpu.memory_space<vmem>>, vector<8x512xf32>
    %c24_54 = arith.constant 24 : index
    %c0_55 = arith.constant 0 : index
    %46 = vector.load %arg13[%c24_54, %c0_55] : memref<72x512xf32, #tpu.memory_space<vmem>>, vector<8x512xf32>
    tpu.vector_store %arg13[%c24_54, %c0_55], %45 {strides = array<i32>} : memref<72x512xf32, #tpu.memory_space<vmem>>, vector<8x512xf32>,
    %c0_56 = arith.constant 0 : index
    %c17_57 = arith.constant 17 : index
    %47 = vector.load %arg12[%c0_56, %c17_57] : memref<8x640xf32, #tpu.memory_space<vmem>>, vector<8x512xf32>
    %c32_58 = arith.constant 32 : index
    %c0_59 = arith.constant 0 : index
    %48 = vector.load %arg13[%c32_58, %c0_59] : memref<72x512xf32, #tpu.memory_space<vmem>>, vector<8x512xf32>
    tpu.vector_store %arg13[%c32_58, %c0_59], %47 {strides = array<i32>} : memref<72x512xf32, #tpu.memory_space<vmem>>, vector<8x512xf32>,
    %c0_60 = arith.constant 0 : index
    %c18_61 = arith.constant 18 : index
    %49 = vector.load %arg12[%c0_60, %c18_61] : memref<8x640xf32, #tpu.memory_space<vmem>>, vector<8x512xf32>
    %c40_62 = arith.constant 40 : index
    %c0_63 = arith.constant 0 : index
    %50 = vector.load %arg13[%c40_62, %c0_63] : memref<72x512xf32, #tpu.memory_space<vmem>>, vector<8x512xf32>
    tpu.vector_store %arg13[%c40_62, %c0_63], %49 {strides = array<i32>} : memref<72x512xf32, #tpu.memory_space<vmem>>, vector<8x512xf32>,
    %c0_64 = arith.constant 0 : index
    %c32_65 = arith.constant 32 : index
    %51 = vector.load %arg12[%c0_64, %c32_65] : memref<8x640xf32, #tpu.memory_space<vmem>>, vector<8x512xf32>
    %c48_66 = arith.constant 48 : index
    %c0_67 = arith.constant 0 : index
    %52 = vector.load %arg13[%c48_66, %c0_67] : memref<72x512xf32, #tpu.memory_space<vmem>>, vector<8x512xf32>
    tpu.vector_store %arg13[%c48_66, %c0_67], %51 {strides = array<i32>} : memref<72x512xf32, #tpu.memory_space<vmem>>, vector<8x512xf32>,
    %c0_68 = arith.constant 0 : index
    %c33_69 = arith.constant 33 : index
    %53 = vector.load %arg12[%c0_68, %c33_69] : memref<8x640xf32, #tpu.memory_space<vmem>>, vector<8x512xf32>
    %c56_70 = arith.constant 56 : index
    %c0_71 = arith.constant 0 : index
    %54 = vector.load %arg13[%c56_70, %c0_71] : memref<72x512xf32, #tpu.memory_space<vmem>>, vector<8x512xf32>
    tpu.vector_store %arg13[%c56_70, %c0_71], %53 {strides = array<i32>} : memref<72x512xf32, #tpu.memory_space<vmem>>, vector<8x512xf32>,
    %c0_72 = arith.constant 0 : index
    %c34_73 = arith.constant 34 : index
    %55 = vector.load %arg12[%c0_72, %c34_73] : memref<8x640xf32, #tpu.memory_space<vmem>>, vector<8x512xf32>
    %c64_74 = arith.constant 64 : index
    %c0_75 = arith.constant 0 : index
    %56 = vector.load %arg13[%c64_74, %c0_75] : memref<72x512xf32, #tpu.memory_space<vmem>>, vector<8x512xf32>
    tpu.vector_store %arg13[%c64_74, %c0_75], %55 {strides = array<i32>} : memref<72x512xf32, #tpu.memory_space<vmem>>, vector<8x512xf32>,
    %c0_76 = arith.constant 0 : index
    %c0_77 = arith.constant 0 : index
    %57 = vector.load %arg4[%c0_76, %c0_77] : memref<16x72xf32, #tpu.memory_space<vmem>>, vector<16x72xf32>
    %c0_78 = arith.constant 0 : index
    %c0_79 = arith.constant 0 : index
    %58 = vector.load %arg13[%c0_78, %c0_79] : memref<72x512xf32, #tpu.memory_space<vmem>>, vector<72x512xf32>
    %cst_80 = arith.constant dense<0.000000e+00> : vector<16x512xf32>
    %59 = tpu.matmul %57, %58, %cst_80 {dimension_numbers = #tpu.dot_dimension_numbers<[1], [0], [0], [1], [0, 0, 1, 1], [], []>} : vector<16x72xf32>, vector<72x512xf32>, vector<16x512xf32> -> vector<16x512xf32>
    %c0_81 = arith.constant 0 : index
    %c0_82 = arith.constant 0 : index
    %60 = vector.load %arg5[%c0_81, %c0_82] : memref<16x1xf32, #tpu.memory_space<vmem>>, vector<16x1xf32>
    %61 = vector.broadcast %60 : vector<16x1xf32> to vector<16x512xf32>
    %62 = arith.addf %59, %61 : vector<16x512xf32>
    %cst_83 = arith.constant 0.000000e+00 : f32
    %63 = vector.broadcast %cst_83 : f32 to vector<16x512xf32>
    %64 = arith.cmpf oge, %62, %63 : vector<16x512xf32>
    %cst_84 = arith.constant 2.000000e-01 : f32
    %65 = vector.broadcast %cst_84 : f32 to vector<16x512xf32>
    %66 = arith.mulf %65, %62 : vector<16x512xf32>
    %67 = arith.select %64, %62, %66 : vector<16x512xi1>, vector<16x512xf32>
    %c0_85 = arith.constant 0 : index
    %c0_86 = arith.constant 0 : index
    %68 = vector.load %arg14[%c0_85, %c0_86] : memref<16x512xf32, #tpu.memory_space<vmem>>, vector<16x512xf32>
    tpu.vector_store %arg14[%c0_85, %c0_86], %67 {strides = array<i32>} : memref<16x512xf32, #tpu.memory_space<vmem>>, vector<16x512xf32>,
    %c0_87 = arith.constant 0 : index
    %c0_88 = arith.constant 0 : index
    %69 = vector.load %arg14[%c0_87, %c0_88] : memref<16x512xf32, #tpu.memory_space<vmem>>, vector<1x256xf32>
    %c0_89 = arith.constant 0 : index
    %c0_90 = arith.constant 0 : index
    %70 = vector.load %arg15[%c0_89, %c0_90] : memref<2x4096xf32, #tpu.memory_space<vmem>>, vector<1x256xf32>
    tpu.vector_store %arg15[%c0_89, %c0_90], %69 {strides = array<i32>} : memref<2x4096xf32, #tpu.memory_space<vmem>>, vector<1x256xf32>,
    %c1_91 = arith.constant 1 : index
    %c0_92 = arith.constant 0 : index
    %71 = vector.load %arg14[%c1_91, %c0_92] : memref<16x512xf32, #tpu.memory_space<vmem>>, vector<1x256xf32>
    %c0_93 = arith.constant 0 : index
    %c256 = arith.constant 256 : index
    %72 = vector.load %arg15[%c0_93, %c256] : memref<2x4096xf32, #tpu.memory_space<vmem>>, vector<1x256xf32>
    tpu.vector_store %arg15[%c0_93, %c256], %71 {strides = array<i32>} : memref<2x4096xf32, #tpu.memory_space<vmem>>, vector<1x256xf32>,
    %c2_94 = arith.constant 2 : index
    %c0_95 = arith.constant 0 : index
    %73 = vector.load %arg14[%c2_94, %c0_95] : memref<16x512xf32, #tpu.memory_space<vmem>>, vector<1x256xf32>
    %c0_96 = arith.constant 0 : index
    %c512 = arith.constant 512 : index
    %74 = vector.load %arg15[%c0_96, %c512] : memref<2x4096xf32, #tpu.memory_space<vmem>>, vector<1x256xf32>
    tpu.vector_store %arg15[%c0_96, %c512], %73 {strides = array<i32>} : memref<2x4096xf32, #tpu.memory_space<vmem>>, vector<1x256xf32>,
    %c3 = arith.constant 3 : index
    %c0_97 = arith.constant 0 : index
    %75 = vector.load %arg14[%c3, %c0_97] : memref<16x512xf32, #tpu.memory_space<vmem>>, vector<1x256xf32>
    %c0_98 = arith.constant 0 : index
    %c768 = arith.constant 768 : index
    %76 = vector.load %arg15[%c0_98, %c768] : memref<2x4096xf32, #tpu.memory_space<vmem>>, vector<1x256xf32>
    tpu.vector_store %arg15[%c0_98, %c768], %75 {strides = array<i32>} : memref<2x4096xf32, #tpu.memory_space<vmem>>, vector<1x256xf32>,
    %c4 = arith.constant 4 : index
    %c0_99 = arith.constant 0 : index
    %77 = vector.load %arg14[%c4, %c0_99] : memref<16x512xf32, #tpu.memory_space<vmem>>, vector<1x256xf32>
    %c0_100 = arith.constant 0 : index
    %c1024 = arith.constant 1024 : index
    %78 = vector.load %arg15[%c0_100, %c1024] : memref<2x4096xf32, #tpu.memory_space<vmem>>, vector<1x256xf32>
    tpu.vector_store %arg15[%c0_100, %c1024], %77 {strides = array<i32>} : memref<2x4096xf32, #tpu.memory_space<vmem>>, vector<1x256xf32>,
    %c5 = arith.constant 5 : index
    %c0_101 = arith.constant 0 : index
    %79 = vector.load %arg14[%c5, %c0_101] : memref<16x512xf32, #tpu.memory_space<vmem>>, vector<1x256xf32>
    %c0_102 = arith.constant 0 : index
    %c1280 = arith.constant 1280 : index
    %80 = vector.load %arg15[%c0_102, %c1280] : memref<2x4096xf32, #tpu.memory_space<vmem>>, vector<1x256xf32>
    tpu.vector_store %arg15[%c0_102, %c1280], %79 {strides = array<i32>} : memref<2x4096xf32, #tpu.memory_space<vmem>>, vector<1x256xf32>,
    %c6 = arith.constant 6 : index
    %c0_103 = arith.constant 0 : index
    %81 = vector.load %arg14[%c6, %c0_103] : memref<16x512xf32, #tpu.memory_space<vmem>>, vector<1x256xf32>
    %c0_104 = arith.constant 0 : index
    %c1536 = arith.constant 1536 : index
    %82 = vector.load %arg15[%c0_104, %c1536] : memref<2x4096xf32, #tpu.memory_space<vmem>>, vector<1x256xf32>
    tpu.vector_store %arg15[%c0_104, %c1536], %81 {strides = array<i32>} : memref<2x4096xf32, #tpu.memory_space<vmem>>, vector<1x256xf32>,
    %c7 = arith.constant 7 : index
    %c0_105 = arith.constant 0 : index
    %83 = vector.load %arg14[%c7, %c0_105] : memref<16x512xf32, #tpu.memory_space<vmem>>, vector<1x256xf32>
    %c0_106 = arith.constant 0 : index
    %c1792 = arith.constant 1792 : index
    %84 = vector.load %arg15[%c0_106, %c1792] : memref<2x4096xf32, #tpu.memory_space<vmem>>, vector<1x256xf32>
    tpu.vector_store %arg15[%c0_106, %c1792], %83 {strides = array<i32>} : memref<2x4096xf32, #tpu.memory_space<vmem>>, vector<1x256xf32>,
    %c8_107 = arith.constant 8 : index
    %c0_108 = arith.constant 0 : index
    %85 = vector.load %arg14[%c8_107, %c0_108] : memref<16x512xf32, #tpu.memory_space<vmem>>, vector<1x256xf32>
    %c0_109 = arith.constant 0 : index
    %c2048 = arith.constant 2048 : index
    %86 = vector.load %arg15[%c0_109, %c2048] : memref<2x4096xf32, #tpu.memory_space<vmem>>, vector<1x256xf32>
    tpu.vector_store %arg15[%c0_109, %c2048], %85 {strides = array<i32>} : memref<2x4096xf32, #tpu.memory_space<vmem>>, vector<1x256xf32>,
    %c9 = arith.constant 9 : index
    %c0_110 = arith.constant 0 : index
    %87 = vector.load %arg14[%c9, %c0_110] : memref<16x512xf32, #tpu.memory_space<vmem>>, vector<1x256xf32>
    %c0_111 = arith.constant 0 : index
    %c2304 = arith.constant 2304 : index
    %88 = vector.load %arg15[%c0_111, %c2304] : memref<2x4096xf32, #tpu.memory_space<vmem>>, vector<1x256xf32>
    tpu.vector_store %arg15[%c0_111, %c2304], %87 {strides = array<i32>} : memref<2x4096xf32, #tpu.memory_space<vmem>>, vector<1x256xf32>,
    %c10 = arith.constant 10 : index
    %c0_112 = arith.constant 0 : index
    %89 = vector.load %arg14[%c10, %c0_112] : memref<16x512xf32, #tpu.memory_space<vmem>>, vector<1x256xf32>
    %c0_113 = arith.constant 0 : index
    %c2560 = arith.constant 2560 : index
    %90 = vector.load %arg15[%c0_113, %c2560] : memref<2x4096xf32, #tpu.memory_space<vmem>>, vector<1x256xf32>
    tpu.vector_store %arg15[%c0_113, %c2560], %89 {strides = array<i32>} : memref<2x4096xf32, #tpu.memory_space<vmem>>, vector<1x256xf32>,
    %c11 = arith.constant 11 : index
    %c0_114 = arith.constant 0 : index
    %91 = vector.load %arg14[%c11, %c0_114] : memref<16x512xf32, #tpu.memory_space<vmem>>, vector<1x256xf32>
    %c0_115 = arith.constant 0 : index
    %c2816 = arith.constant 2816 : index
    %92 = vector.load %arg15[%c0_115, %c2816] : memref<2x4096xf32, #tpu.memory_space<vmem>>, vector<1x256xf32>
    tpu.vector_store %arg15[%c0_115, %c2816], %91 {strides = array<i32>} : memref<2x4096xf32, #tpu.memory_space<vmem>>, vector<1x256xf32>,
    %c12 = arith.constant 12 : index
    %c0_116 = arith.constant 0 : index
    %93 = vector.load %arg14[%c12, %c0_116] : memref<16x512xf32, #tpu.memory_space<vmem>>, vector<1x256xf32>
    %c0_117 = arith.constant 0 : index
    %c3072 = arith.constant 3072 : index
    %94 = vector.load %arg15[%c0_117, %c3072] : memref<2x4096xf32, #tpu.memory_space<vmem>>, vector<1x256xf32>
    tpu.vector_store %arg15[%c0_117, %c3072], %93 {strides = array<i32>} : memref<2x4096xf32, #tpu.memory_space<vmem>>, vector<1x256xf32>,
    %c13 = arith.constant 13 : index
    %c0_118 = arith.constant 0 : index
    %95 = vector.load %arg14[%c13, %c0_118] : memref<16x512xf32, #tpu.memory_space<vmem>>, vector<1x256xf32>
    %c0_119 = arith.constant 0 : index
    %c3328 = arith.constant 3328 : index
    %96 = vector.load %arg15[%c0_119, %c3328] : memref<2x4096xf32, #tpu.memory_space<vmem>>, vector<1x256xf32>
    tpu.vector_store %arg15[%c0_119, %c3328], %95 {strides = array<i32>} : memref<2x4096xf32, #tpu.memory_space<vmem>>, vector<1x256xf32>,
    %c14 = arith.constant 14 : index
    %c0_120 = arith.constant 0 : index
    %97 = vector.load %arg14[%c14, %c0_120] : memref<16x512xf32, #tpu.memory_space<vmem>>, vector<1x256xf32>
    %c0_121 = arith.constant 0 : index
    %c3584 = arith.constant 3584 : index
    %98 = vector.load %arg15[%c0_121, %c3584] : memref<2x4096xf32, #tpu.memory_space<vmem>>, vector<1x256xf32>
    tpu.vector_store %arg15[%c0_121, %c3584], %97 {strides = array<i32>} : memref<2x4096xf32, #tpu.memory_space<vmem>>, vector<1x256xf32>,
    %c15 = arith.constant 15 : index
    %c0_122 = arith.constant 0 : index
    %99 = vector.load %arg14[%c15, %c0_122] : memref<16x512xf32, #tpu.memory_space<vmem>>, vector<1x256xf32>
    %c0_123 = arith.constant 0 : index
    %c3840 = arith.constant 3840 : index
    %100 = vector.load %arg15[%c0_123, %c3840] : memref<2x4096xf32, #tpu.memory_space<vmem>>, vector<1x256xf32>
    tpu.vector_store %arg15[%c0_123, %c3840], %99 {strides = array<i32>} : memref<2x4096xf32, #tpu.memory_space<vmem>>, vector<1x256xf32>,
    %c0_124 = arith.constant 0 : index
    %c256_125 = arith.constant 256 : index
    %101 = vector.load %arg14[%c0_124, %c256_125] : memref<16x512xf32, #tpu.memory_space<vmem>>, vector<1x256xf32>
    %c1_126 = arith.constant 1 : index
    %c0_127 = arith.constant 0 : index
    %102 = vector.load %arg15[%c1_126, %c0_127] : memref<2x4096xf32, #tpu.memory_space<vmem>>, vector<1x256xf32>
    tpu.vector_store %arg15[%c1_126, %c0_127], %101 {strides = array<i32>} : memref<2x4096xf32, #tpu.memory_space<vmem>>, vector<1x256xf32>,
    %c1_128 = arith.constant 1 : index
    %c256_129 = arith.constant 256 : index
    %103 = vector.load %arg14[%c1_128, %c256_129] : memref<16x512xf32, #tpu.memory_space<vmem>>, vector<1x256xf32>
    %c1_130 = arith.constant 1 : index
    %c256_131 = arith.constant 256 : index
    %104 = vector.load %arg15[%c1_130, %c256_131] : memref<2x4096xf32, #tpu.memory_space<vmem>>, vector<1x256xf32>
    tpu.vector_store %arg15[%c1_130, %c256_131], %103 {strides = array<i32>} : memref<2x4096xf32, #tpu.memory_space<vmem>>, vector<1x256xf32>,
    %c2_132 = arith.constant 2 : index
    %c256_133 = arith.constant 256 : index
    %105 = vector.load %arg14[%c2_132, %c256_133] : memref<16x512xf32, #tpu.memory_space<vmem>>, vector<1x256xf32>
    %c1_134 = arith.constant 1 : index
    %c512_135 = arith.constant 512 : index
    %106 = vector.load %arg15[%c1_134, %c512_135] : memref<2x4096xf32, #tpu.memory_space<vmem>>, vector<1x256xf32>
    tpu.vector_store %arg15[%c1_134, %c512_135], %105 {strides = array<i32>} : memref<2x4096xf32, #tpu.memory_space<vmem>>, vector<1x256xf32>,
    %c3_136 = arith.constant 3 : index
    %c256_137 = arith.constant 256 : index
    %107 = vector.load %arg14[%c3_136, %c256_137] : memref<16x512xf32, #tpu.memory_space<vmem>>, vector<1x256xf32>
    %c1_138 = arith.constant 1 : index
    %c768_139 = arith.constant 768 : index
    %108 = vector.load %arg15[%c1_138, %c768_139] : memref<2x4096xf32, #tpu.memory_space<vmem>>, vector<1x256xf32>
    tpu.vector_store %arg15[%c1_138, %c768_139], %107 {strides = array<i32>} : memref<2x4096xf32, #tpu.memory_space<vmem>>, vector<1x256xf32>,
    %c4_140 = arith.constant 4 : index
    %c256_141 = arith.constant 256 : index
    %109 = vector.load %arg14[%c4_140, %c256_141] : memref<16x512xf32, #tpu.memory_space<vmem>>, vector<1x256xf32>
    %c1_142 = arith.constant 1 : index
    %c1024_143 = arith.constant 1024 : index
    %110 = vector.load %arg15[%c1_142, %c1024_143] : memref<2x4096xf32, #tpu.memory_space<vmem>>, vector<1x256xf32>
    tpu.vector_store %arg15[%c1_142, %c1024_143], %109 {strides = array<i32>} : memref<2x4096xf32, #tpu.memory_space<vmem>>, vector<1x256xf32>,
    %c5_144 = arith.constant 5 : index
    %c256_145 = arith.constant 256 : index
    %111 = vector.load %arg14[%c5_144, %c256_145] : memref<16x512xf32, #tpu.memory_space<vmem>>, vector<1x256xf32>
    %c1_146 = arith.constant 1 : index
    %c1280_147 = arith.constant 1280 : index
    %112 = vector.load %arg15[%c1_146, %c1280_147] : memref<2x4096xf32, #tpu.memory_space<vmem>>, vector<1x256xf32>
    tpu.vector_store %arg15[%c1_146, %c1280_147], %111 {strides = array<i32>} : memref<2x4096xf32, #tpu.memory_space<vmem>>, vector<1x256xf32>,
    %c6_148 = arith.constant 6 : index
    %c256_149 = arith.constant 256 : index
    %113 = vector.load %arg14[%c6_148, %c256_149] : memref<16x512xf32, #tpu.memory_space<vmem>>, vector<1x256xf32>
    %c1_150 = arith.constant 1 : index
    %c1536_151 = arith.constant 1536 : index
    %114 = vector.load %arg15[%c1_150, %c1536_151] : memref<2x4096xf32, #tpu.memory_space<vmem>>, vector<1x256xf32>
    tpu.vector_store %arg15[%c1_150, %c1536_151], %113 {strides = array<i32>} : memref<2x4096xf32, #tpu.memory_space<vmem>>, vector<1x256xf32>,
    %c7_152 = arith.constant 7 : index
    %c256_153 = arith.constant 256 : index
    %115 = vector.load %arg14[%c7_152, %c256_153] : memref<16x512xf32, #tpu.memory_space<vmem>>, vector<1x256xf32>
    %c1_154 = arith.constant 1 : index
    %c1792_155 = arith.constant 1792 : index
    %116 = vector.load %arg15[%c1_154, %c1792_155] : memref<2x4096xf32, #tpu.memory_space<vmem>>, vector<1x256xf32>
    tpu.vector_store %arg15[%c1_154, %c1792_155], %115 {strides = array<i32>} : memref<2x4096xf32, #tpu.memory_space<vmem>>, vector<1x256xf32>,
    %c8_156 = arith.constant 8 : index
    %c256_157 = arith.constant 256 : index
    %117 = vector.load %arg14[%c8_156, %c256_157] : memref<16x512xf32, #tpu.memory_space<vmem>>, vector<1x256xf32>
    %c1_158 = arith.constant 1 : index
    %c2048_159 = arith.constant 2048 : index
    %118 = vector.load %arg15[%c1_158, %c2048_159] : memref<2x4096xf32, #tpu.memory_space<vmem>>, vector<1x256xf32>
    tpu.vector_store %arg15[%c1_158, %c2048_159], %117 {strides = array<i32>} : memref<2x4096xf32, #tpu.memory_space<vmem>>, vector<1x256xf32>,
    %c9_160 = arith.constant 9 : index
    %c256_161 = arith.constant 256 : index
    %119 = vector.load %arg14[%c9_160, %c256_161] : memref<16x512xf32, #tpu.memory_space<vmem>>, vector<1x256xf32>
    %c1_162 = arith.constant 1 : index
    %c2304_163 = arith.constant 2304 : index
    %120 = vector.load %arg15[%c1_162, %c2304_163] : memref<2x4096xf32, #tpu.memory_space<vmem>>, vector<1x256xf32>
    tpu.vector_store %arg15[%c1_162, %c2304_163], %119 {strides = array<i32>} : memref<2x4096xf32, #tpu.memory_space<vmem>>, vector<1x256xf32>,
    %c10_164 = arith.constant 10 : index
    %c256_165 = arith.constant 256 : index
    %121 = vector.load %arg14[%c10_164, %c256_165] : memref<16x512xf32, #tpu.memory_space<vmem>>, vector<1x256xf32>
    %c1_166 = arith.constant 1 : index
    %c2560_167 = arith.constant 2560 : index
    %122 = vector.load %arg15[%c1_166, %c2560_167] : memref<2x4096xf32, #tpu.memory_space<vmem>>, vector<1x256xf32>
    tpu.vector_store %arg15[%c1_166, %c2560_167], %121 {strides = array<i32>} : memref<2x4096xf32, #tpu.memory_space<vmem>>, vector<1x256xf32>,
    %c11_168 = arith.constant 11 : index
    %c256_169 = arith.constant 256 : index
    %123 = vector.load %arg14[%c11_168, %c256_169] : memref<16x512xf32, #tpu.memory_space<vmem>>, vector<1x256xf32>
    %c1_170 = arith.constant 1 : index
    %c2816_171 = arith.constant 2816 : index
    %124 = vector.load %arg15[%c1_170, %c2816_171] : memref<2x4096xf32, #tpu.memory_space<vmem>>, vector<1x256xf32>
    tpu.vector_store %arg15[%c1_170, %c2816_171], %123 {strides = array<i32>} : memref<2x4096xf32, #tpu.memory_space<vmem>>, vector<1x256xf32>,
    %c12_172 = arith.constant 12 : index
    %c256_173 = arith.constant 256 : index
    %125 = vector.load %arg14[%c12_172, %c256_173] : memref<16x512xf32, #tpu.memory_space<vmem>>, vector<1x256xf32>
    %c1_174 = arith.constant 1 : index
    %c3072_175 = arith.constant 3072 : index
    %126 = vector.load %arg15[%c1_174, %c3072_175] : memref<2x4096xf32, #tpu.memory_space<vmem>>, vector<1x256xf32>
    tpu.vector_store %arg15[%c1_174, %c3072_175], %125 {strides = array<i32>} : memref<2x4096xf32, #tpu.memory_space<vmem>>, vector<1x256xf32>,
    %c13_176 = arith.constant 13 : index
    %c256_177 = arith.constant 256 : index
    %127 = vector.load %arg14[%c13_176, %c256_177] : memref<16x512xf32, #tpu.memory_space<vmem>>, vector<1x256xf32>
    %c1_178 = arith.constant 1 : index
    %c3328_179 = arith.constant 3328 : index
    %128 = vector.load %arg15[%c1_178, %c3328_179] : memref<2x4096xf32, #tpu.memory_space<vmem>>, vector<1x256xf32>
    tpu.vector_store %arg15[%c1_178, %c3328_179], %127 {strides = array<i32>} : memref<2x4096xf32, #tpu.memory_space<vmem>>, vector<1x256xf32>,
    %c14_180 = arith.constant 14 : index
    %c256_181 = arith.constant 256 : index
    %129 = vector.load %arg14[%c14_180, %c256_181] : memref<16x512xf32, #tpu.memory_space<vmem>>, vector<1x256xf32>
    %c1_182 = arith.constant 1 : index
    %c3584_183 = arith.constant 3584 : index
    %130 = vector.load %arg15[%c1_182, %c3584_183] : memref<2x4096xf32, #tpu.memory_space<vmem>>, vector<1x256xf32>
    tpu.vector_store %arg15[%c1_182, %c3584_183], %129 {strides = array<i32>} : memref<2x4096xf32, #tpu.memory_space<vmem>>, vector<1x256xf32>,
    %c15_184 = arith.constant 15 : index
    %c256_185 = arith.constant 256 : index
    %131 = vector.load %arg14[%c15_184, %c256_185] : memref<16x512xf32, #tpu.memory_space<vmem>>, vector<1x256xf32>
    %c1_186 = arith.constant 1 : index
    %c3840_187 = arith.constant 3840 : index
    %132 = vector.load %arg15[%c1_186, %c3840_187] : memref<2x4096xf32, #tpu.memory_space<vmem>>, vector<1x256xf32>
    tpu.vector_store %arg15[%c1_186, %c3840_187], %131 {strides = array<i32>} : memref<2x4096xf32, #tpu.memory_space<vmem>>, vector<1x256xf32>,
    %c0_188 = arith.constant 0 : index
    %c0_189 = arith.constant 0 : index
    %133 = vector.load %arg15[%c0_188, %c0_189] : memref<2x4096xf32, #tpu.memory_space<vmem>>, vector<2x4096xf32>
    %c0_190 = arith.constant 0 : index
    %c0_191 = arith.constant 0 : index
    %134 = vector.load %arg6[%c0_190, %c0_191] : memref<4096x32xf32, #tpu.memory_space<vmem>>, vector<4096x32xf32>
    %cst_192 = arith.constant dense<0.000000e+00> : vector<2x32xf32>
    %135 = tpu.matmul %133, %134, %cst_192 {dimension_numbers = #tpu.dot_dimension_numbers<[1], [0], [0], [1], [0, 0, 1, 1], [], []>} : vector<2x4096xf32>, vector<4096x32xf32>, vector<2x32xf32> -> vector<2x32xf32>
    %c0_193 = arith.constant 0 : index
    %c0_194 = arith.constant 0 : index
    %136 = vector.load %arg7[%c0_193, %c0_194] : memref<1x32xf32, #tpu.memory_space<vmem>>, vector<1x32xf32>
    %137 = vector.broadcast %136 : vector<1x32xf32> to vector<2x32xf32>
    %138 = arith.addf %135, %137 : vector<2x32xf32>
    %cst_195 = arith.constant 0.000000e+00 : f32
    %139 = vector.broadcast %cst_195 : f32 to vector<2x32xf32>
    %140 = arith.cmpf oge, %138, %139 : vector<2x32xf32>
    %cst_196 = arith.constant 2.000000e-01 : f32
    %141 = vector.broadcast %cst_196 : f32 to vector<2x32xf32>
    %142 = arith.mulf %141, %138 : vector<2x32xf32>
    %143 = arith.select %140, %138, %142 : vector<2x32xi1>, vector<2x32xf32>
    %c0_197 = arith.constant 0 : index
    %c0_198 = arith.constant 0 : index
    %144 = vector.load %arg8[%c0_197, %c0_198] : memref<32x1xf32, #tpu.memory_space<vmem>>, vector<32x1xf32>
    %cst_199 = arith.constant dense<0.000000e+00> : vector<2x1xf32>
    %145 = tpu.matmul %143, %144, %cst_199 {dimension_numbers = #tpu.dot_dimension_numbers<[1], [0], [0], [1], [0, 0, 1, 1], [], []>} : vector<2x32xf32>, vector<32x1xf32>, vector<2x1xf32> -> vector<2x1xf32>
    %c0_200 = arith.constant 0 : index
    %c0_201 = arith.constant 0 : index
    %146 = vector.load %arg9[%c0_200, %c0_201] : memref<1x1xf32, #tpu.memory_space<vmem>>, vector<1x1xf32>
    %147 = vector.broadcast %146 : vector<1x1xf32> to vector<2x1xf32>
    %148 = arith.addf %145, %147 : vector<2x1xf32>
    %c0_202 = arith.constant 0 : index
    %c0_203 = arith.constant 0 : index
    %c0_204 = arith.constant 0 : index
    %149 = vector.load %arg10[%c0_202, %c0_203, %c0_204] : memref<1x2x1xf32, #tpu.memory_space<vmem>>, vector<1x2x1xf32>
    %150 = vector.shape_cast %149 : vector<1x2x1xf32> to vector<2x1xf32>
    %151 = vector.shape_cast %148 : vector<2x1xf32> to vector<1x2x1xf32>
    tpu.vector_store %arg10[%c0_202, %c0_203, %c0_204], %151 {strides = array<i32>} : memref<1x2x1xf32, #tpu.memory_space<vmem>>, vector<1x2x1xf32>,
    return
  }
  func.func @transform_0(%arg0: i32) -> (i32, i32, i32) {
    %c0_i32 = arith.constant 0 : i32
    %c0_i32_0 = arith.constant 0 : i32
    %c0_i32_1 = arith.constant 0 : i32
    return %arg0, %c0_i32, %c0_i32_0 : i32, i32, i32
  }
  func.func @transform_1(%arg0: i32) -> (i32, i32) {
    %c0_i32 = arith.constant 0 : i32
    %c0_i32_0 = arith.constant 0 : i32
    %c0_i32_1 = arith.constant 0 : i32
    return %c0_i32, %c0_i32_0 : i32, i32
  }
  func.func @transform_2(%arg0: i32) -> (i32, i32) {
    %c0_i32 = arith.constant 0 : i32
    %c0_i32_0 = arith.constant 0 : i32
    %c0_i32_1 = arith.constant 0 : i32
    return %c0_i32, %c0_i32_0 : i32, i32
  }
  func.func @transform_3(%arg0: i32) -> (i32, i32) {
    %c0_i32 = arith.constant 0 : i32
    %c0_i32_0 = arith.constant 0 : i32
    %c0_i32_1 = arith.constant 0 : i32
    return %c0_i32, %c0_i32_0 : i32, i32
  }
  func.func @transform_4(%arg0: i32) -> (i32, i32) {
    %c0_i32 = arith.constant 0 : i32
    %c0_i32_0 = arith.constant 0 : i32
    %c0_i32_1 = arith.constant 0 : i32
    return %c0_i32, %c0_i32_0 : i32, i32
  }
  func.func @transform_5(%arg0: i32) -> (i32, i32) {
    %c0_i32 = arith.constant 0 : i32
    %c0_i32_0 = arith.constant 0 : i32
    %c0_i32_1 = arith.constant 0 : i32
    return %c0_i32, %c0_i32_0 : i32, i32
  }
  func.func @transform_6(%arg0: i32) -> (i32, i32) {
    %c0_i32 = arith.constant 0 : i32
    %c0_i32_0 = arith.constant 0 : i32
    %c0_i32_1 = arith.constant 0 : i32
    return %c0_i32, %c0_i32_0 : i32, i32
  }
  func.func @transform_7(%arg0: i32) -> (i32, i32) {
    %c0_i32 = arith.constant 0 : i32
    %c0_i32_0 = arith.constant 0 : i32
    %c0_i32_1 = arith.constant 0 : i32
    return %c0_i32, %c0_i32_0 : i32, i32
  }
  func.func @transform_8(%arg0: i32) -> (i32, i32) {
    %c0_i32 = arith.constant 0 : i32
    %c0_i32_0 = arith.constant 0 : i32
    %c0_i32_1 = arith.constant 0 : i32
    return %c0_i32, %c0_i32_0 : i32, i32
  }
  func.func @transform_9(%arg0: i32) -> (i32, i32, i32) {
    %c0_i32 = arith.constant 0 : i32
    %c0_i32_0 = arith.constant 0 : i32
    %c0_i32_1 = arith.constant 0 : i32
    return %arg0, %c0_i32, %c0_i32_0 : i32, i32, i32
  }
}

</mosaic_0001>

<llo_original>
// kernel: tpu_custom_call.1
$region0: #{tpu_custom_call.1}
  #allocation0 [shape = 'u32[]', space=smem, size = 0x4, offset = 0x4, fixed_abs, tag = 'smem constant byte address 0x4 - core index']
  #allocation1 [shape = 'u32[144,128]{1,0:T(1,128)}', space=vmem, size = 0x12000, scoped, tag = 'internal scratch']
  #allocation2 [shape = 'f32[72,640]{1,0:T(8,128)}', space=vmem, size = 0x2d000, scoped, tag = 'scratch operand']
  #allocation3 [shape = 'f32[8,640]{1,0:T(8,128)}', space=vmem, size = 0x5000, scoped, tag = 'scratch operand']
  #allocation4 [shape = 'f32[72,512]{1,0:T(8,128)}', space=vmem, size = 0x24000, scoped, tag = 'scratch operand']
  #allocation5 [shape = 'f32[16,512]{1,0:T(8,128)}', space=vmem, size = 0x8000, scoped, tag = 'scratch operand']
  #allocation6 [shape = 'f32[2,4096]{1,0:T(2,128)}', space=vmem, size = 0x8000, scoped, tag = 'scratch operand']
  #allocation7 [shape = 'f32[1,1]{1,0:T(1,128)S(1)}', space=vmem, size = 0x200, scoped, tag = 'scoped memory for tpu_custom_call.1']
  %s0 = inlined_call_operand.vmem [shape: f32[1,8,768], index: 0, kind: input, shape index: {}]
  %s1 = inlined_call_operand.vmem [shape: f32[8,72], index: 1, kind: input, shape index: {}]
  %s2 = inlined_call_operand.vmem [shape: f32[8,1], index: 2, kind: input, shape index: {}]
  %s3 = inlined_call_operand.vmem [shape: f32[16,72], index: 3, kind: input, shape index: {}]
  %s4 = inlined_call_operand.vmem [shape: f32[16,1], index: 4, kind: input, shape index: {}]
  %s5 = inlined_call_operand.vmem [shape: f32[4096,32], index: 5, kind: input, shape index: {}]
  %s6 = inlined_call_operand.vmem [shape: f32[1,32], index: 6, kind: input, shape index: {}]
  %s7 = inlined_call_operand.vmem [shape: f32[32,1], index: 7, kind: input, shape index: {}]
  %s8 = inlined_call_operand.<no memory space> [shape: f32[1,1], index: 8, kind: input, shape index: {}]
  %s9 = inlined_call_operand.vmem [shape: f32[1,2,1], index: 9, kind: output, shape index: {}]
  %s10 = sld [smem:[#allocation0]]
  $region46: #{tpu_custom_call.1} parent=0
    _
  %s12 = ssub.s32 1, %s10
  %s13 = scalar_select 0, %s12, %s10
  %v14 = vstv %s8
  %15 = vst [vmem:[#allocation7] sm:$0x1] %v14
  // Predicated region
  $region2: #{tpu_custom_call.1} parent=0 // pred_check
    _
  $region3: #{tpu_custom_call.1} parent=0 // pred_check_branch
    %17 = sbr.rel (0) target = $region5
  $region4: #{tpu_custom_call.1} parent=0 // pred_region
    _
  $region5: #{tpu_custom_call.1} parent=0 // pred_fallthru
    _
  // Predicated region
  $region6: #{tpu_custom_call.1} parent=0 // pred_check
    _
  $region7: #{tpu_custom_call.1} parent=0 // pred_check_branch
    %19 = sbr.rel (0) target = $region9
  $region8: #{tpu_custom_call.1} parent=0 // pred_region
    _
  $region9: #{tpu_custom_call.1} parent=0 // pred_fallthru
    _
  // Predicated region
  $region10: #{tpu_custom_call.1} parent=0 // pred_check
    _
  $region11: #{tpu_custom_call.1} parent=0 // pred_check_branch
    %21 = sbr.rel (0) target = $region13
  $region12: #{tpu_custom_call.1} parent=0 // pred_region
    _
  $region13: #{tpu_custom_call.1} parent=0 // pred_fallthru
    _
  // Predicated region
  $region14: #{tpu_custom_call.1} parent=0 // pred_check
    _
  $region15: #{tpu_custom_call.1} parent=0 // pred_check_branch
    %23 = sbr.rel (0) target = $region17
  $region16: #{tpu_custom_call.1} parent=0 // pred_region
    _
  $region17: #{tpu_custom_call.1} parent=0 // pred_fallthru
    _
  // Predicated region
  $region18: #{tpu_custom_call.1} parent=0 // pred_check
    _
  $region19: #{tpu_custom_call.1} parent=0 // pred_check_branch
    %25 = sbr.rel (0) target = $region21
  $region20: #{tpu_custom_call.1} parent=0 // pred_region
    _
  $region21: #{tpu_custom_call.1} parent=0 // pred_fallthru
    _
  // Predicated region
  $region22: #{tpu_custom_call.1} parent=0 // pred_check
    _
  $region23: #{tpu_custom_call.1} parent=0 // pred_check_branch
    %27 = sbr.rel (0) target = $region25
  $region24: #{tpu_custom_call.1} parent=0 // pred_region
    _
  $region25: #{tpu_custom_call.1} parent=0 // pred_fallthru
    _
  // Predicated region
  $region26: #{tpu_custom_call.1} parent=0 // pred_check
    _
  $region27: #{tpu_custom_call.1} parent=0 // pred_check_branch
    %29 = sbr.rel (0) target = $region29
  $region28: #{tpu_custom_call.1} parent=0 // pred_region
    _
  $region29: #{tpu_custom_call.1} parent=0 // pred_fallthru
    _
  // Predicated region
  $region30: #{tpu_custom_call.1} parent=0 // pred_check
    _
  $region31: #{tpu_custom_call.1} parent=0 // pred_check_branch
    %31 = sbr.rel (0) target = $region33
  $region32: #{tpu_custom_call.1} parent=0 // pred_region
    _
  $region33: #{tpu_custom_call.1} parent=0 // pred_fallthru
    _
  // Predicated region
  $region34: #{tpu_custom_call.1} parent=0 // pred_check
    _
  $region35: #{tpu_custom_call.1} parent=0 // pred_check_branch
    %33 = sbr.rel (0) target = $region37
  $region36: #{tpu_custom_call.1} parent=0 // pred_region
    _
  $region37: #{tpu_custom_call.1} parent=0 // pred_fallthru
    _
  %v34 = vld [vmem:[%s0] sm:$0xff]
  %v35 = vld [vmem:[%s0 + $0x8] sm:$0xff]
  %v36 = vld [vmem:[%s0 + $0x10] sm:$0xff]
  %v37 = vld [vmem:[%s0 + $0x18] sm:$0xff]
  %v38 = vld [vmem:[%s0 + $0x20] sm:$0xff]
  %39 = vst [vmem:[#allocation2] sm:$0xff] %v34
  %40 = vst [vmem:[#allocation2 + $0x8] sm:$0xff] %v35
  %41 = vst [vmem:[#allocation2 + $0x10] sm:$0xff] %v36
  %42 = vst [vmem:[#allocation2 + $0x18] sm:$0xff] %v37
  %43 = vst [vmem:[#allocation2 + $0x20] sm:$0xff] %v38
  %v44 = vld [vmem:[%s0] sm:$0xff]
  %v45 = vld [vmem:[%s0 + $0x8] sm:$0xff]
  %v46 = vld [vmem:[%s0 + $0x10] sm:$0xff]
  %v47 = vld [vmem:[%s0 + $0x18] sm:$0xff]
  %v48 = vld [vmem:[%s0 + $0x20] sm:$0xff]
  %v49 = vld [vmem:[%s0 + $0x28] sm:$0xff]
  %56 = vrot.lane.b32.xlu0 %v44, 127
  %v57 = vpop.permute.xlu0 %56
  %58 = vrot.lane.b32.xlu0 %v45, 127
  %v59 = vpop.permute.xlu0 %58
  %60 = vrot.lane.b32.xlu0 %v46, 127
  %v61 = vpop.permute.xlu0 %60
  %62 = vrot.lane.b32.xlu0 %v47, 127
  %v63 = vpop.permute.xlu0 %62
  %64 = vrot.lane.b32.xlu0 %v48, 127
  %v65 = vpop.permute.xlu0 %64
  %66 = vrot.lane.b32.xlu0 %v49, 127
  %v67 = vpop.permute.xlu0 %66
  %vm68 = vcmask 1039360
  %v69 = vsel %vm68, %v57, %v59
  %v70 = vsel %vm68, %v59, %v61
  %v71 = vsel %vm68, %v61, %v63
  %v72 = vsel %vm68, %v63, %v65
  %v73 = vsel %vm68, %v65, %v67
  %79 = vst [vmem:[#allocation2 + $0x28] sm:$0xff] %v69
  %80 = vst [vmem:[#allocation2 + $0x30] sm:$0xff] %v70
  %81 = vst [vmem:[#allocation2 + $0x38] sm:$0xff] %v71
  %82 = vst [vmem:[#allocation2 + $0x40] sm:$0xff] %v72
  %83 = vst [vmem:[#allocation2 + $0x48] sm:$0xff] %v73
  %v84 = vld [vmem:[%s0] sm:$0xff]
  %v85 = vld [vmem:[%s0 + $0x8] sm:$0xff]
  %v86 = vld [vmem:[%s0 + $0x10] sm:$0xff]
  %v87 = vld [vmem:[%s0 + $0x18] sm:$0xff]
  %v88 = vld [vmem:[%s0 + $0x20] sm:$0xff]
  %v89 = vld [vmem:[%s0 + $0x28] sm:$0xff]
  %96 = vrot.lane.b32.xlu0 %v84, 126
  %v97 = vpop.permute.xlu0 %96
  %98 = vrot.lane.b32.xlu0 %v85, 126
  %v99 = vpop.permute.xlu0 %98
  %100 = vrot.lane.b32.xlu0 %v86, 126
  %v101 = vpop.permute.xlu0 %100
  %102 = vrot.lane.b32.xlu0 %v87, 126
  %v103 = vpop.permute.xlu0 %102
  %104 = vrot.lane.b32.xlu0 %v88, 126
  %v105 = vpop.permute.xlu0 %104
  %106 = vrot.lane.b32.xlu0 %v89, 126
  %v107 = vpop.permute.xlu0 %106
  %vm108 = vcmask 1031168
  %v109 = vsel %vm108, %v97, %v99
  %v110 = vsel %vm108, %v99, %v101
  %v111 = vsel %vm108, %v101, %v103
  %v112 = vsel %vm108, %v103, %v105
  %v113 = vsel %vm108, %v105, %v107
  %119 = vst [vmem:[#allocation2 + $0x50] sm:$0xff] %v109
  %120 = vst [vmem:[#allocation2 + $0x58] sm:$0xff] %v110
  %121 = vst [vmem:[#allocation2 + $0x60] sm:$0xff] %v111
  %122 = vst [vmem:[#allocation2 + $0x68] sm:$0xff] %v112
  %123 = vst [vmem:[#allocation2 + $0x70] sm:$0xff] %v113
  %v124 = vld [vmem:[%s0] sm:$0xff]
  %v125 = vld [vmem:[%s0 + $0x8] sm:$0xff]
  %v126 = vld [vmem:[%s0 + $0x10] sm:$0xff]
  %v127 = vld [vmem:[%s0 + $0x18] sm:$0xff]
  %v128 = vld [vmem:[%s0 + $0x20] sm:$0xff]
  %v129 = vld [vmem:[%s0 + $0x28] sm:$0xff]
  %136 = vrot.lane.b32.xlu0 %v124, 112
  %v137 = vpop.permute.xlu0 %136
  %138 = vrot.lane.b32.xlu0 %v125, 112
  %v139 = vpop.permute.xlu0 %138
  %140 = vrot.lane.b32.xlu0 %v126, 112
  %v141 = vpop.permute.xlu0 %140
  %142 = vrot.lane.b32.xlu0 %v127, 112
  %v143 = vpop.permute.xlu0 %142
  %144 = vrot.lane.b32.xlu0 %v128, 112
  %v145 = vpop.permute.xlu0 %144
  %146 = vrot.lane.b32.xlu0 %v129, 112
  %v147 = vpop.permute.xlu0 %146
  %vm148 = vcmask 916480
  %v149 = vsel %vm148, %v137, %v139
  %v150 = vsel %vm148, %v139, %v141
  %v151 = vsel %vm148, %v141, %v143
  %v152 = vsel %vm148, %v143, %v145
  %v153 = vsel %vm148, %v145, %v147
  %159 = vst [vmem:[#allocation2 + $0x78] sm:$0xff] %v149
  %160 = vst [vmem:[#allocation2 + $0x80] sm:$0xff] %v150
  %161 = vst [vmem:[#allocation2 + $0x88] sm:$0xff] %v151
  %162 = vst [vmem:[#allocation2 + $0x90] sm:$0xff] %v152
  %163 = vst [vmem:[#allocation2 + $0x98] sm:$0xff] %v153
  %v164 = vld [vmem:[%s0] sm:$0xff]
  %v165 = vld [vmem:[%s0 + $0x8] sm:$0xff]
  %v166 = vld [vmem:[%s0 + $0x10] sm:$0xff]
  %v167 = vld [vmem:[%s0 + $0x18] sm:$0xff]
  %v168 = vld [vmem:[%s0 + $0x20] sm:$0xff]
  %v169 = vld [vmem:[%s0 + $0x28] sm:$0xff]
  %176 = vrot.lane.b32.xlu0 %v164, 111
  %v177 = vpop.permute.xlu0 %176
  %178 = vrot.lane.b32.xlu0 %v165, 111
  %v179 = vpop.permute.xlu0 %178
  %180 = vrot.lane.b32.xlu0 %v166, 111
  %v181 = vpop.permute.xlu0 %180
  %182 = vrot.lane.b32.xlu0 %v167, 111
  %v183 = vpop.permute.xlu0 %182
  %184 = vrot.lane.b32.xlu0 %v168, 111
  %v185 = vpop.permute.xlu0 %184
  %186 = vrot.lane.b32.xlu0 %v169, 111
  %v187 = vpop.permute.xlu0 %186
  %vm188 = vcmask 908288
  %v189 = vsel %vm188, %v177, %v179
  %v190 = vsel %vm188, %v179, %v181
  %v191 = vsel %vm188, %v181, %v183
  %v192 = vsel %vm188, %v183, %v185
  %v193 = vsel %vm188, %v185, %v187
  %199 = vst [vmem:[#allocation2 + $0xa0] sm:$0xff] %v189
  %200 = vst [vmem:[#allocation2 + $0xa8] sm:$0xff] %v190
  %201 = vst [vmem:[#allocation2 + $0xb0] sm:$0xff] %v191
  %202 = vst [vmem:[#allocation2 + $0xb8] sm:$0xff] %v192
  %203 = vst [vmem:[#allocation2 + $0xc0] sm:$0xff] %v193
  %v204 = vld [vmem:[%s0] sm:$0xff]
  %v205 = vld [vmem:[%s0 + $0x8] sm:$0xff]
  %v206 = vld [vmem:[%s0 + $0x10] sm:$0xff]
  %v207 = vld [vmem:[%s0 + $0x18] sm:$0xff]
  %v208 = vld [vmem:[%s0 + $0x20] sm:$0xff]
  %v209 = vld [vmem:[%s0 + $0x28] sm:$0xff]
  %216 = vrot.lane.b32.xlu0 %v204, 110
  %v217 = vpop.permute.xlu0 %216
  %218 = vrot.lane.b32.xlu0 %v205, 110
  %v219 = vpop.permute.xlu0 %218
  %220 = vrot.lane.b32.xlu0 %v206, 110
  %v221 = vpop.permute.xlu0 %220
  %222 = vrot.lane.b32.xlu0 %v207, 110
  %v223 = vpop.permute.xlu0 %222
  %224 = vrot.lane.b32.xlu0 %v208, 110
  %v225 = vpop.permute.xlu0 %224
  %226 = vrot.lane.b32.xlu0 %v209, 110
  %v227 = vpop.permute.xlu0 %226
  %vm228 = vcmask 900096
  %v229 = vsel %vm228, %v217, %v219
  %v230 = vsel %vm228, %v219, %v221
  %v231 = vsel %vm228, %v221, %v223
  %v232 = vsel %vm228, %v223, %v225
  %v233 = vsel %vm228, %v225, %v227
  %239 = vst [vmem:[#allocation2 + $0xc8] sm:$0xff] %v229
  %240 = vst [vmem:[#allocation2 + $0xd0] sm:$0xff] %v230
  %241 = vst [vmem:[#allocation2 + $0xd8] sm:$0xff] %v231
  %242 = vst [vmem:[#allocation2 + $0xe0] sm:$0xff] %v232
  %243 = vst [vmem:[#allocation2 + $0xe8] sm:$0xff] %v233
  %v244 = vld [vmem:[%s0] sm:$0xff]
  %v245 = vld [vmem:[%s0 + $0x8] sm:$0xff]
  %v246 = vld [vmem:[%s0 + $0x10] sm:$0xff]
  %v247 = vld [vmem:[%s0 + $0x18] sm:$0xff]
  %v248 = vld [vmem:[%s0 + $0x20] sm:$0xff]
  %v249 = vld [vmem:[%s0 + $0x28] sm:$0xff]
  %256 = vrot.lane.b32.xlu0 %v244, 96
  %v257 = vpop.permute.xlu0 %256
  %258 = vrot.lane.b32.xlu0 %v245, 96
  %v259 = vpop.permute.xlu0 %258
  %260 = vrot.lane.b32.xlu0 %v246, 96
  %v261 = vpop.permute.xlu0 %260
  %262 = vrot.lane.b32.xlu0 %v247, 96
  %v263 = vpop.permute.xlu0 %262
  %264 = vrot.lane.b32.xlu0 %v248, 96
  %v265 = vpop.permute.xlu0 %264
  %266 = vrot.lane.b32.xlu0 %v249, 96
  %v267 = vpop.permute.xlu0 %266
  %vm268 = vcmask 785408
  %v269 = vsel %vm268, %v257, %v259
  %v270 = vsel %vm268, %v259, %v261
  %v271 = vsel %vm268, %v261, %v263
  %v272 = vsel %vm268, %v263, %v265
  %v273 = vsel %vm268, %v265, %v267
  %279 = vst [vmem:[#allocation2 + $0xf0] sm:$0xff] %v269
  %280 = vst [vmem:[#allocation2 + $0xf8] sm:$0xff] %v270
  %281 = vst [vmem:[#allocation2 + $0x100] sm:$0xff] %v271
  %282 = vst [vmem:[#allocation2 + $0x108] sm:$0xff] %v272
  %283 = vst [vmem:[#allocation2 + $0x110] sm:$0xff] %v273
  %v284 = vld [vmem:[%s0] sm:$0xff]
  %v285 = vld [vmem:[%s0 + $0x8] sm:$0xff]
  %v286 = vld [vmem:[%s0 + $0x10] sm:$0xff]
  %v287 = vld [vmem:[%s0 + $0x18] sm:$0xff]
  %v288 = vld [vmem:[%s0 + $0x20] sm:$0xff]
  %v289 = vld [vmem:[%s0 + $0x28] sm:$0xff]
  %296 = vrot.lane.b32.xlu0 %v284, 95
  %v297 = vpop.permute.xlu0 %296
  %298 = vrot.lane.b32.xlu0 %v285, 95
  %v299 = vpop.permute.xlu0 %298
  %300 = vrot.lane.b32.xlu0 %v286, 95
  %v301 = vpop.permute.xlu0 %300
  %302 = vrot.lane.b32.xlu0 %v287, 95
  %v303 = vpop.permute.xlu0 %302
  %304 = vrot.lane.b32.xlu0 %v288, 95
  %v305 = vpop.permute.xlu0 %304
  %306 = vrot.lane.b32.xlu0 %v289, 95
  %v307 = vpop.permute.xlu0 %306
  %vm308 = vcmask 777216
  %v309 = vsel %vm308, %v297, %v299
  %v310 = vsel %vm308, %v299, %v301
  %v311 = vsel %vm308, %v301, %v303
  %v312 = vsel %vm308, %v303, %v305
  %v313 = vsel %vm308, %v305, %v307
  %319 = vst [vmem:[#allocation2 + $0x118] sm:$0xff] %v309
  %320 = vst [vmem:[#allocation2 + $0x120] sm:$0xff] %v310
  %321 = vst [vmem:[#allocation2 + $0x128] sm:$0xff] %v311
  %322 = vst [vmem:[#allocation2 + $0x130] sm:$0xff] %v312
  %323 = vst [vmem:[#allocation2 + $0x138] sm:$0xff] %v313
  %v324 = vld [vmem:[%s0] sm:$0xff]
  %v325 = vld [vmem:[%s0 + $0x8] sm:$0xff]
  %v326 = vld [vmem:[%s0 + $0x10] sm:$0xff]
  %v327 = vld [vmem:[%s0 + $0x18] sm:$0xff]
  %v328 = vld [vmem:[%s0 + $0x20] sm:$0xff]
  %v329 = vld [vmem:[%s0 + $0x28] sm:$0xff]
  %336 = vrot.lane.b32.xlu0 %v324, 94
  %v337 = vpop.permute.xlu0 %336
  %338 = vrot.lane.b32.xlu0 %v325, 94
  %v339 = vpop.permute.xlu0 %338
  %340 = vrot.lane.b32.xlu0 %v326, 94
  %v341 = vpop.permute.xlu0 %340
  %342 = vrot.lane.b32.xlu0 %v327, 94
  %v343 = vpop.permute.xlu0 %342
  %344 = vrot.lane.b32.xlu0 %v328, 94
  %v345 = vpop.permute.xlu0 %344
  %346 = vrot.lane.b32.xlu0 %v329, 94
  %v347 = vpop.permute.xlu0 %346
  %vm348 = vcmask 769024
  %v349 = vsel %vm348, %v337, %v339
  %v350 = vsel %vm348, %v339, %v341
  %v351 = vsel %vm348, %v341, %v343
  %v352 = vsel %vm348, %v343, %v345
  %v353 = vsel %vm348, %v345, %v347
  %359 = vst [vmem:[#allocation2 + $0x140] sm:$0xff] %v349
  %360 = vst [vmem:[#allocation2 + $0x148] sm:$0xff] %v350
  %361 = vst [vmem:[#allocation2 + $0x150] sm:$0xff] %v351
  %362 = vst [vmem:[#allocation2 + $0x158] sm:$0xff] %v352
  %363 = vst [vmem:[#allocation2 + $0x160] sm:$0xff] %v353
  %v364 = vld [vmem:[%s1] sm:$0xff]
  %v365 = vld [vmem:[#allocation2] sm:$0xff]
  %v366 = vld [vmem:[#allocation2 + $0x8] sm:$0xff]
  %v367 = vld [vmem:[#allocation2 + $0x10] sm:$0xff]
  %v368 = vld [vmem:[#allocation2 + $0x18] sm:$0xff]
  %v369 = vld [vmem:[#allocation2 + $0x20] sm:$0xff]
  %v370 = vld [vmem:[#allocation2 + $0x28] sm:$0xff]
  %v371 = vld [vmem:[#allocation2 + $0x30] sm:$0xff]
  %v372 = vld [vmem:[#allocation2 + $0x38] sm:$0xff]
  %v373 = vld [vmem:[#allocation2 + $0x40] sm:$0xff]
  %v374 = vld [vmem:[#allocation2 + $0x48] sm:$0xff]
  %v375 = vld [vmem:[#allocation2 + $0x50] sm:$0xff]
  %v376 = vld [vmem:[#allocation2 + $0x58] sm:$0xff]
  %v377 = vld [vmem:[#allocation2 + $0x60] sm:$0xff]
  %v378 = vld [vmem:[#allocation2 + $0x68] sm:$0xff]
  %v379 = vld [vmem:[#allocation2 + $0x70] sm:$0xff]
  %v380 = vld [vmem:[#allocation2 + $0x78] sm:$0xff]
  %v381 = vld [vmem:[#allocation2 + $0x80] sm:$0xff]
  %v382 = vld [vmem:[#allocation2 + $0x88] sm:$0xff]
  %v383 = vld [vmem:[#allocation2 + $0x90] sm:$0xff]
  %v384 = vld [vmem:[#allocation2 + $0x98] sm:$0xff]
  %v385 = vld [vmem:[#allocation2 + $0xa0] sm:$0xff]
  %v386 = vld [vmem:[#allocation2 + $0xa8] sm:$0xff]
  %v387 = vld [vmem:[#allocation2 + $0xb0] sm:$0xff]
  %v388 = vld [vmem:[#allocation2 + $0xb8] sm:$0xff]
  %v389 = vld [vmem:[#allocation2 + $0xc0] sm:$0xff]
  %v390 = vld [vmem:[#allocation2 + $0xc8] sm:$0xff]
  %v391 = vld [vmem:[#allocation2 + $0xd0] sm:$0xff]
  %v392 = vld [vmem:[#allocation2 + $0xd8] sm:$0xff]
  %v393 = vld [vmem:[#allocation2 + $0xe0] sm:$0xff]
  %v394 = vld [vmem:[#allocation2 + $0xe8] sm:$0xff]
  %v395 = vld [vmem:[#allocation2 + $0xf0] sm:$0xff]
  %v396 = vld [vmem:[#allocation2 + $0xf8] sm:$0xff]
  %v397 = vld [vmem:[#allocation2 + $0x100] sm:$0xff]
  %v398 = vld [vmem:[#allocation2 + $0x108] sm:$0xff]
  %v399 = vld [vmem:[#allocation2 + $0x110] sm:$0xff]
  %v400 = vld [vmem:[#allocation2 + $0x118] sm:$0xff]
  %v401 = vld [vmem:[#allocation2 + $0x120] sm:$0xff]
  %v402 = vld [vmem:[#allocation2 + $0x128] sm:$0xff]
  %v403 = vld [vmem:[#allocation2 + $0x130] sm:$0xff]
  %v404 = vld [vmem:[#allocation2 + $0x138] sm:$0xff]
  %v405 = vld [vmem:[#allocation2 + $0x140] sm:$0xff]
  %v406 = vld [vmem:[#allocation2 + $0x148] sm:$0xff]
  %v407 = vld [vmem:[#allocation2 + $0x150] sm:$0xff]
  %v408 = vld [vmem:[#allocation2 + $0x158] sm:$0xff]
  %v409 = vld [vmem:[#allocation2 + $0x160] sm:$0xff]
  %v410 = vld [vmem:[%s2] sm:$0xff]
  %412 = vset.pattern.permute.xlu0 0
  %413 = vperm.xlu0 %412, %v410
  %v414 = vpop.permute.xlu0 %413
  %vm416 = vcmask 588800
  %v418 = vsel %vm416, %v364, 0
  %420 = vmatprep.subr.mxu0 0.0
  %421 = vmatpush1.msra.mxu0 0.0
  %422 = vmatprep.subr.mxu0 0.0
  %423 = vmatpush1.msra.mxu0 0.0
  %424 = vmatprep.subr.mxu0 0.0
  %425 = vmatpush1.msra.mxu0 0.0
  %426 = vmatprep.subr.mxu0 0.0
  %427 = vmatpush1.msra.mxu0 0.0
  %428 = vmatprep.subr.mxu0 0.0
  %429 = vmatpush1.msra.mxu0 0.0
  %430 = vmatprep.subr.mxu0 0.0
  %431 = vmatpush1.msra.mxu0 0.0
  %432 = vmatprep.subr.mxu0 0.0
  %433 = vmatpush1.msra.mxu0 0.0
  %434 = vmatprep.subr.mxu0 %v406
  %435 = vmatpush1.msra.mxu0 %v405
  %436 = vmatprep.subr.mxu0 %v401
  %437 = vmatpush1.msra.mxu0 %v400
  %438 = vmatprep.subr.mxu0 %v396
  %439 = vmatpush1.msra.mxu0 %v395
  %440 = vmatprep.subr.mxu0 %v391
  %441 = vmatpush1.msra.mxu0 %v390
  %442 = vmatprep.subr.mxu0 %v386
  %443 = vmatpush1.msra.mxu0 %v385
  %444 = vmatprep.subr.mxu0 %v381
  %445 = vmatpush1.msra.mxu0 %v380
  %446 = vmatprep.subr.mxu0 %v376
  %447 = vmatpush1.msra.mxu0 %v375
  %448 = vmatprep.subr.mxu0 %v371
  %449 = vmatpush1.msra.mxu0 %v370
  %450 = vmatprep.subr.mxu0 %v366
  %451 = vmatpush1.msra.mxu0 %v365
  %452 = vmatprep.subr.mxu0 0.0
  %453 = vmatpush2.msra.mxu0 0.0
  %454 = vmatprep.subr.mxu0 0.0
  %455 = vmatpush2.msra.mxu0 0.0
  %456 = vmatprep.subr.mxu0 0.0
  %457 = vmatpush2.msra.mxu0 0.0
  %458 = vmatprep.subr.mxu0 0.0
  %459 = vmatpush2.msra.mxu0 0.0
  %460 = vmatprep.subr.mxu0 0.0
  %461 = vmatpush2.msra.mxu0 0.0
  %462 = vmatprep.subr.mxu0 0.0
  %463 = vmatpush2.msra.mxu0 0.0
  %464 = vmatprep.subr.mxu0 0.0
  %465 = vmatpush2.msra.mxu0 0.0
  %466 = vmatprep.subr.mxu0 0.0
  %467 = vmatpush2.msra.mxu0 0.0
  %468 = vmatprep.subr.mxu0 0.0
  %469 = vmatpush2.msra.mxu0 0.0
  %470 = vmatprep.subr.mxu0 0.0
  %471 = vmatpush2.msra.mxu0 0.0
  %472 = vmatprep.subr.mxu0 0.0
  %473 = vmatpush2.msra.mxu0 0.0
  %474 = vmatprep.subr.mxu0 0.0
  %475 = vmatpush2.msra.mxu0 0.0
  %476 = vmatprep.subr.mxu0 0.0
  %477 = vmatpush2.msra.mxu0 0.0
  %478 = vmatprep.subr.mxu0 0.0
  %479 = vmatpush2.msra.mxu0 0.0
  %480 = vmatprep.subr.mxu0 0.0
  %481 = vmatpush2.msra.mxu0 0.0
  %482 = vmatprep.subr.mxu0 0.0
  %483 = vmatpush2.msra.mxu0 0.0
  %484 = vmatprep.mubr.f32.mxu0 0.0
  %485 = vmatmul.mubr.f32.gmra.mxu0 %v418
  %v486 = vpop.f32.mrf.mxu0
  %v487 = vadd.f32 %v414, %v486
  %v488 = vpop.f32.mrf.mxu0
  %v489 = vadd.f32 %v414, %v488
  %490 = vdwg.mxu0
  %491 = vmatprep.subr.mxu0 0.0
  %492 = vmatpush1.msra.mxu0 0.0
  %493 = vmatprep.subr.mxu0 0.0
  %494 = vmatpush1.msra.mxu0 0.0
  %495 = vmatprep.subr.mxu0 0.0
  %496 = vmatpush1.msra.mxu0 0.0
  %497 = vmatprep.subr.mxu0 0.0
  %498 = vmatpush1.msra.mxu0 0.0
  %499 = vmatprep.subr.mxu0 0.0
  %500 = vmatpush1.msra.mxu0 0.0
  %501 = vmatprep.subr.mxu0 0.0
  %502 = vmatpush1.msra.mxu0 0.0
  %503 = vmatprep.subr.mxu0 0.0
  %504 = vmatpush1.msra.mxu0 0.0
  %505 = vmatprep.subr.mxu0 %v408
  %506 = vmatpush1.msra.mxu0 %v407
  %507 = vmatprep.subr.mxu0 %v403
  %508 = vmatpush1.msra.mxu0 %v402
  %509 = vmatprep.subr.mxu0 %v398
  %510 = vmatpush1.msra.mxu0 %v397
  %511 = vmatprep.subr.mxu0 %v393
  %512 = vmatpush1.msra.mxu0 %v392
  %513 = vmatprep.subr.mxu0 %v388
  %514 = vmatpush1.msra.mxu0 %v387
  %515 = vmatprep.subr.mxu0 %v383
  %516 = vmatpush1.msra.mxu0 %v382
  %517 = vmatprep.subr.mxu0 %v378
  %518 = vmatpush1.msra.mxu0 %v377
  %519 = vmatprep.subr.mxu0 %v373
  %520 = vmatpush1.msra.mxu0 %v372
  %521 = vmatprep.subr.mxu0 %v368
  %522 = vmatpush1.msra.mxu0 %v367
  %523 = vmatprep.subr.mxu0 0.0
  %524 = vmatpush2.msra.mxu0 0.0
  %525 = vmatprep.subr.mxu0 0.0
  %526 = vmatpush2.msra.mxu0 0.0
  %527 = vmatprep.subr.mxu0 0.0
  %528 = vmatpush2.msra.mxu0 0.0
  %529 = vmatprep.subr.mxu0 0.0
  %530 = vmatpush2.msra.mxu0 0.0
  %531 = vmatprep.subr.mxu0 0.0
  %532 = vmatpush2.msra.mxu0 0.0
  %533 = vmatprep.subr.mxu0 0.0
  %534 = vmatpush2.msra.mxu0 0.0
  %535 = vmatprep.subr.mxu0 0.0
  %536 = vmatpush2.msra.mxu0 0.0
  %537 = vmatprep.subr.mxu0 0.0
  %538 = vmatpush2.msra.mxu0 0.0
  %539 = vmatprep.subr.mxu0 0.0
  %540 = vmatpush2.msra.mxu0 0.0
  %541 = vmatprep.subr.mxu0 0.0
  %542 = vmatpush2.msra.mxu0 0.0
  %543 = vmatprep.subr.mxu0 0.0
  %544 = vmatpush2.msra.mxu0 0.0
  %545 = vmatprep.subr.mxu0 0.0
  %546 = vmatpush2.msra.mxu0 0.0
  %547 = vmatprep.subr.mxu0 0.0
  %548 = vmatpush2.msra.mxu0 0.0
  %549 = vmatprep.subr.mxu0 0.0
  %550 = vmatpush2.msra.mxu0 0.0
  %551 = vmatprep.subr.mxu0 0.0
  %552 = vmatpush2.msra.mxu0 0.0
  %553 = vmatprep.subr.mxu0 0.0
  %554 = vmatpush2.msra.mxu0 0.0
  %555 = vmatprep.mubr.f32.mxu0 0.0
  %556 = vmatmul.mubr.f32.gmra.mxu0 %v418
  %v557 = vpop.f32.mrf.mxu0
  %v558 = vadd.f32 %v414, %v557
  %v559 = vpop.f32.mrf.mxu0
  %v560 = vadd.f32 %v414, %v559
  %561 = vdwg.mxu0
  %562 = vmatprep.subr.mxu0 0.0
  %563 = vmatpush1.msra.mxu0 0.0
  %564 = vmatprep.subr.mxu0 0.0
  %565 = vmatpush1.msra.mxu0 0.0
  %566 = vmatprep.subr.mxu0 0.0
  %567 = vmatpush1.msra.mxu0 0.0
  %568 = vmatprep.subr.mxu0 0.0
  %569 = vmatpush1.msra.mxu0 0.0
  %570 = vmatprep.subr.mxu0 0.0
  %571 = vmatpush1.msra.mxu0 0.0
  %572 = vmatprep.subr.mxu0 0.0
  %573 = vmatpush1.msra.mxu0 0.0
  %574 = vmatprep.subr.mxu0 0.0
  %575 = vmatpush1.msra.mxu0 0.0
  %576 = vmatprep.subr.mxu0 0.0
  %577 = vmatpush1.msra.mxu0 %v409
  %578 = vmatprep.subr.mxu0 0.0
  %579 = vmatpush1.msra.mxu0 %v404
  %580 = vmatprep.subr.mxu0 0.0
  %581 = vmatpush1.msra.mxu0 %v399
  %582 = vmatprep.subr.mxu0 0.0
  %583 = vmatpush1.msra.mxu0 %v394
  %584 = vmatprep.subr.mxu0 0.0
  %585 = vmatpush1.msra.mxu0 %v389
  %586 = vmatprep.subr.mxu0 0.0
  %587 = vmatpush1.msra.mxu0 %v384
  %588 = vmatprep.subr.mxu0 0.0
  %589 = vmatpush1.msra.mxu0 %v379
  %590 = vmatprep.subr.mxu0 0.0
  %591 = vmatpush1.msra.mxu0 %v374
  %592 = vmatprep.subr.mxu0 0.0
  %593 = vmatpush1.msra.mxu0 %v369
  %594 = vmatprep.subr.mxu0 0.0
  %595 = vmatpush2.msra.mxu0 0.0
  %596 = vmatprep.subr.mxu0 0.0
  %597 = vmatpush2.msra.mxu0 0.0
  %598 = vmatprep.subr.mxu0 0.0
  %599 = vmatpush2.msra.mxu0 0.0
  %600 = vmatprep.subr.mxu0 0.0
  %601 = vmatpush2.msra.mxu0 0.0
  %602 = vmatprep.subr.mxu0 0.0
  %603 = vmatpush2.msra.mxu0 0.0
  %604 = vmatprep.subr.mxu0 0.0
  %605 = vmatpush2.msra.mxu0 0.0
  %606 = vmatprep.subr.mxu0 0.0
  %607 = vmatpush2.msra.mxu0 0.0
  %608 = vmatprep.subr.mxu0 0.0
  %609 = vmatpush2.msra.mxu0 0.0
  %610 = vmatprep.subr.mxu0 0.0
  %611 = vmatpush2.msra.mxu0 0.0
  %612 = vmatprep.subr.mxu0 0.0
  %613 = vmatpush2.msra.mxu0 0.0
  %614 = vmatprep.subr.mxu0 0.0
  %615 = vmatpush2.msra.mxu0 0.0
  %616 = vmatprep.subr.mxu0 0.0
  %617 = vmatpush2.msra.mxu0 0.0
  %618 = vmatprep.subr.mxu0 0.0
  %619 = vmatpush2.msra.mxu0 0.0
  %620 = vmatprep.subr.mxu0 0.0
  %621 = vmatpush2.msra.mxu0 0.0
  %622 = vmatprep.subr.mxu0 0.0
  %623 = vmatpush2.msra.mxu0 0.0
  %624 = vmatprep.subr.mxu0 0.0
  %625 = vmatpush2.msra.mxu0 0.0
  %626 = vmatprep.mubr.f32.mxu0 0.0
  %627 = vmatmul.mubr.f32.gmra.mxu0 %v418
  %v628 = vpop.f32.mrf.mxu0
  %v629 = vadd.f32 %v414, %v628
  %v630 = vpop.f32.mrf.mxu0
  %631 = vdwg.mxu0
  %vm632 = vcmp.ge.f32.partialorder %v487, 0.0
  %vm633 = vcmp.ge.f32.partialorder %v489, 0.0
  %vm634 = vcmp.ge.f32.partialorder %v558, 0.0
  %vm635 = vcmp.ge.f32.partialorder %v560, 0.0
  %vm636 = vcmp.ge.f32.partialorder %v629, 0.0
  %v637 = vmul.f32 %v487, 0.2
  %v638 = vmul.f32 %v489, 0.2
  %v639 = vmul.f32 %v558, 0.2
  %v640 = vmul.f32 %v560, 0.2
  %v641 = vmul.f32 %v629, 0.2
  %v642 = vsel %vm632, %v487, %v637
  %v643 = vsel %vm633, %v489, %v638
  %v644 = vsel %vm634, %v558, %v639
  %v645 = vsel %vm635, %v560, %v640
  %v646 = vsel %vm636, %v629, %v641
  %647 = vst [vmem:[#allocation3] sm:$0xff] %v642
  %648 = vst [vmem:[#allocation3 + $0x8] sm:$0xff] %v643
  %649 = vst [vmem:[#allocation3 + $0x10] sm:$0xff] %v644
  %650 = vst [vmem:[#allocation3 + $0x18] sm:$0xff] %v645
  %651 = vst [vmem:[#allocation3 + $0x20] sm:$0xff] %v646
  %v652 = vld [vmem:[#allocation3] sm:$0xff]
  %v653 = vld [vmem:[#allocation3 + $0x8] sm:$0xff]
  %v654 = vld [vmem:[#allocation3 + $0x10] sm:$0xff]
  %v655 = vld [vmem:[#allocation3 + $0x18] sm:$0xff]
  %656 = vst [vmem:[#allocation4] sm:$0xff] %v652
  %657 = vst [vmem:[#allocation4 + $0x8] sm:$0xff] %v653
  %658 = vst [vmem:[#allocation4 + $0x10] sm:$0xff] %v654
  %659 = vst [vmem:[#allocation4 + $0x18] sm:$0xff] %v655
  %v660 = vld [vmem:[#allocation3] sm:$0xff]
  %v661 = vld [vmem:[#allocation3 + $0x8] sm:$0xff]
  %v662 = vld [vmem:[#allocation3 + $0x10] sm:$0xff]
  %v663 = vld [vmem:[#allocation3 + $0x18] sm:$0xff]
  %v664 = vld [vmem:[#allocation3 + $0x20] sm:$0xff]
  %670 = vrot.lane.b32.xlu0 %v660, 127
  %v671 = vpop.permute.xlu0 %670
  %672 = vrot.lane.b32.xlu0 %v661, 127
  %v673 = vpop.permute.xlu0 %672
  %674 = vrot.lane.b32.xlu0 %v662, 127
  %v675 = vpop.permute.xlu0 %674
  %676 = vrot.lane.b32.xlu0 %v663, 127
  %v677 = vpop.permute.xlu0 %676
  %678 = vrot.lane.b32.xlu0 %v664, 127
  %v679 = vpop.permute.xlu0 %678
  %v680 = vsel %vm68, %v671, %v673
  %v681 = vsel %vm68, %v673, %v675
  %v682 = vsel %vm68, %v675, %v677
  %v683 = vsel %vm68, %v677, %v679
  %688 = vst [vmem:[#allocation4 + $0x20] sm:$0xff] %v680
  %689 = vst [vmem:[#allocation4 + $0x28] sm:$0xff] %v681
  %690 = vst [vmem:[#allocation4 + $0x30] sm:$0xff] %v682
  %691 = vst [vmem:[#allocation4 + $0x38] sm:$0xff] %v683
  %v692 = vld [vmem:[#allocation3] sm:$0xff]
  %v693 = vld [vmem:[#allocation3 + $0x8] sm:$0xff]
  %v694 = vld [vmem:[#allocation3 + $0x10] sm:$0xff]
  %v695 = vld [vmem:[#allocation3 + $0x18] sm:$0xff]
  %v696 = vld [vmem:[#allocation3 + $0x20] sm:$0xff]
  %702 = vrot.lane.b32.xlu0 %v692, 126
  %v703 = vpop.permute.xlu0 %702
  %704 = vrot.lane.b32.xlu0 %v693, 126
  %v705 = vpop.permute.xlu0 %704
  %706 = vrot.lane.b32.xlu0 %v694, 126
  %v707 = vpop.permute.xlu0 %706
  %708 = vrot.lane.b32.xlu0 %v695, 126
  %v709 = vpop.permute.xlu0 %708
  %710 = vrot.lane.b32.xlu0 %v696, 126
  %v711 = vpop.permute.xlu0 %710
  %v712 = vsel %vm108, %v703, %v705
  %v713 = vsel %vm108, %v705, %v707
  %v714 = vsel %vm108, %v707, %v709
  %v715 = vsel %vm108, %v709, %v711
  %720 = vst [vmem:[#allocation4 + $0x40] sm:$0xff] %v712
  %721 = vst [vmem:[#allocation4 + $0x48] sm:$0xff] %v713
  %722 = vst [vmem:[#allocation4 + $0x50] sm:$0xff] %v714
  %723 = vst [vmem:[#allocation4 + $0x58] sm:$0xff] %v715
  %v724 = vld [vmem:[#allocation3] sm:$0xff]
  %v725 = vld [vmem:[#allocation3 + $0x8] sm:$0xff]
  %v726 = vld [vmem:[#allocation3 + $0x10] sm:$0xff]
  %v727 = vld [vmem:[#allocation3 + $0x18] sm:$0xff]
  %v728 = vld [vmem:[#allocation3 + $0x20] sm:$0xff]
  %734 = vrot.lane.b32.xlu0 %v724, 112
  %v735 = vpop.permute.xlu0 %734
  %736 = vrot.lane.b32.xlu0 %v725, 112
  %v737 = vpop.permute.xlu0 %736
  %738 = vrot.lane.b32.xlu0 %v726, 112
  %v739 = vpop.permute.xlu0 %738
  %740 = vrot.lane.b32.xlu0 %v727, 112
  %v741 = vpop.permute.xlu0 %740
  %742 = vrot.lane.b32.xlu0 %v728, 112
  %v743 = vpop.permute.xlu0 %742
  %v744 = vsel %vm148, %v735, %v737
  %v745 = vsel %vm148, %v737, %v739
  %v746 = vsel %vm148, %v739, %v741
  %v747 = vsel %vm148, %v741, %v743
  %752 = vst [vmem:[#allocation4 + $0x60] sm:$0xff] %v744
  %753 = vst [vmem:[#allocation4 + $0x68] sm:$0xff] %v745
  %754 = vst [vmem:[#allocation4 + $0x70] sm:$0xff] %v746
  %755 = vst [vmem:[#allocation4 + $0x78] sm:$0xff] %v747
  %v756 = vld [vmem:[#allocation3] sm:$0xff]
  %v757 = vld [vmem:[#allocation3 + $0x8] sm:$0xff]
  %v758 = vld [vmem:[#allocation3 + $0x10] sm:$0xff]
  %v759 = vld [vmem:[#allocation3 + $0x18] sm:$0xff]
  %v760 = vld [vmem:[#allocation3 + $0x20] sm:$0xff]
  %766 = vrot.lane.b32.xlu0 %v756, 111
  %v767 = vpop.permute.xlu0 %766
  %768 = vrot.lane.b32.xlu0 %v757, 111
  %v769 = vpop.permute.xlu0 %768
  %770 = vrot.lane.b32.xlu0 %v758, 111
  %v771 = vpop.permute.xlu0 %770
  %772 = vrot.lane.b32.xlu0 %v759, 111
  %v773 = vpop.permute.xlu0 %772
  %774 = vrot.lane.b32.xlu0 %v760, 111
  %v775 = vpop.permute.xlu0 %774
  %v776 = vsel %vm188, %v767, %v769
  %v777 = vsel %vm188, %v769, %v771
  %v778 = vsel %vm188, %v771, %v773
  %v779 = vsel %vm188, %v773, %v775
  %784 = vst [vmem:[#allocation4 + $0x80] sm:$0xff] %v776
  %785 = vst [vmem:[#allocation4 + $0x88] sm:$0xff] %v777
  %786 = vst [vmem:[#allocation4 + $0x90] sm:$0xff] %v778
  %787 = vst [vmem:[#allocation4 + $0x98] sm:$0xff] %v779
  %v788 = vld [vmem:[#allocation3] sm:$0xff]
  %v789 = vld [vmem:[#allocation3 + $0x8] sm:$0xff]
  %v790 = vld [vmem:[#allocation3 + $0x10] sm:$0xff]
  %v791 = vld [vmem:[#allocation3 + $0x18] sm:$0xff]
  %v792 = vld [vmem:[#allocation3 + $0x20] sm:$0xff]
  %798 = vrot.lane.b32.xlu0 %v788, 110
  %v799 = vpop.permute.xlu0 %798
  %800 = vrot.lane.b32.xlu0 %v789, 110
  %v801 = vpop.permute.xlu0 %800
  %802 = vrot.lane.b32.xlu0 %v790, 110
  %v803 = vpop.permute.xlu0 %802
  %804 = vrot.lane.b32.xlu0 %v791, 110
  %v805 = vpop.permute.xlu0 %804
  %806 = vrot.lane.b32.xlu0 %v792, 110
  %v807 = vpop.permute.xlu0 %806
  %v808 = vsel %vm228, %v799, %v801
  %v809 = vsel %vm228, %v801, %v803
  %v810 = vsel %vm228, %v803, %v805
  %v811 = vsel %vm228, %v805, %v807
  %816 = vst [vmem:[#allocation4 + $0xa0] sm:$0xff] %v808
  %817 = vst [vmem:[#allocation4 + $0xa8] sm:$0xff] %v809
  %818 = vst [vmem:[#allocation4 + $0xb0] sm:$0xff] %v810
  %819 = vst [vmem:[#allocation4 + $0xb8] sm:$0xff] %v811
  %v820 = vld [vmem:[#allocation3] sm:$0xff]
  %v821 = vld [vmem:[#allocation3 + $0x8] sm:$0xff]
  %v822 = vld [vmem:[#allocation3 + $0x10] sm:$0xff]
  %v823 = vld [vmem:[#allocation3 + $0x18] sm:$0xff]
  %v824 = vld [vmem:[#allocation3 + $0x20] sm:$0xff]
  %830 = vrot.lane.b32.xlu0 %v820, 96
  %v831 = vpop.permute.xlu0 %830
  %832 = vrot.lane.b32.xlu0 %v821, 96
  %v833 = vpop.permute.xlu0 %832
  %834 = vrot.lane.b32.xlu0 %v822, 96
  %v835 = vpop.permute.xlu0 %834
  %836 = vrot.lane.b32.xlu0 %v823, 96
  %v837 = vpop.permute.xlu0 %836
  %838 = vrot.lane.b32.xlu0 %v824, 96
  %v839 = vpop.permute.xlu0 %838
  %v840 = vsel %vm268, %v831, %v833
  %v841 = vsel %vm268, %v833, %v835
  %v842 = vsel %vm268, %v835, %v837
  %v843 = vsel %vm268, %v837, %v839
  %848 = vst [vmem:[#allocation4 + $0xc0] sm:$0xff] %v840
  %849 = vst [vmem:[#allocation4 + $0xc8] sm:$0xff] %v841
  %850 = vst [vmem:[#allocation4 + $0xd0] sm:$0xff] %v842
  %851 = vst [vmem:[#allocation4 + $0xd8] sm:$0xff] %v843
  %v852 = vld [vmem:[#allocation3] sm:$0xff]
  %v853 = vld [vmem:[#allocation3 + $0x8] sm:$0xff]
  %v854 = vld [vmem:[#allocation3 + $0x10] sm:$0xff]
  %v855 = vld [vmem:[#allocation3 + $0x18] sm:$0xff]
  %v856 = vld [vmem:[#allocation3 + $0x20] sm:$0xff]
  %862 = vrot.lane.b32.xlu0 %v852, 95
  %v863 = vpop.permute.xlu0 %862
  %864 = vrot.lane.b32.xlu0 %v853, 95
  %v865 = vpop.permute.xlu0 %864
  %866 = vrot.lane.b32.xlu0 %v854, 95
  %v867 = vpop.permute.xlu0 %866
  %868 = vrot.lane.b32.xlu0 %v855, 95
  %v869 = vpop.permute.xlu0 %868
  %870 = vrot.lane.b32.xlu0 %v856, 95
  %v871 = vpop.permute.xlu0 %870
  %v872 = vsel %vm308, %v863, %v865
  %v873 = vsel %vm308, %v865, %v867
  %v874 = vsel %vm308, %v867, %v869
  %v875 = vsel %vm308, %v869, %v871
  %880 = vst [vmem:[#allocation4 + $0xe0] sm:$0xff] %v872
  %881 = vst [vmem:[#allocation4 + $0xe8] sm:$0xff] %v873
  %882 = vst [vmem:[#allocation4 + $0xf0] sm:$0xff] %v874
  %883 = vst [vmem:[#allocation4 + $0xf8] sm:$0xff] %v875
  %v884 = vld [vmem:[#allocation3] sm:$0xff]
  %v885 = vld [vmem:[#allocation3 + $0x8] sm:$0xff]
  %v886 = vld [vmem:[#allocation3 + $0x10] sm:$0xff]
  %v887 = vld [vmem:[#allocation3 + $0x18] sm:$0xff]
  %v888 = vld [vmem:[#allocation3 + $0x20] sm:$0xff]
  %894 = vrot.lane.b32.xlu0 %v884, 94
  %v895 = vpop.permute.xlu0 %894
  %896 = vrot.lane.b32.xlu0 %v885, 94
  %v897 = vpop.permute.xlu0 %896
  %898 = vrot.lane.b32.xlu0 %v886, 94
  %v899 = vpop.permute.xlu0 %898
  %900 = vrot.lane.b32.xlu0 %v887, 94
  %v901 = vpop.permute.xlu0 %900
  %902 = vrot.lane.b32.xlu0 %v888, 94
  %v903 = vpop.permute.xlu0 %902
  %v904 = vsel %vm348, %v895, %v897
  %v905 = vsel %vm348, %v897, %v899
  %v906 = vsel %vm348, %v899, %v901
  %v907 = vsel %vm348, %v901, %v903
  %912 = vst [vmem:[#allocation4 + $0x100] sm:$0xff] %v904
  %913 = vst [vmem:[#allocation4 + $0x108] sm:$0xff] %v905
  %914 = vst [vmem:[#allocation4 + $0x110] sm:$0xff] %v906
  %915 = vst [vmem:[#allocation4 + $0x118] sm:$0xff] %v907
  %v916 = vld [vmem:[%s3] sm:$0xff]
  %v917 = vld [vmem:[%s3 + $0x8] sm:$0xff]
  %v918 = vld [vmem:[#allocation4] sm:$0xff]
  %v919 = vld [vmem:[#allocation4 + $0x8] sm:$0xff]
  %v920 = vld [vmem:[#allocation4 + $0x10] sm:$0xff]
  %v921 = vld [vmem:[#allocation4 + $0x18] sm:$0xff]
  %v922 = vld [vmem:[#allocation4 + $0x20] sm:$0xff]
  %v923 = vld [vmem:[#allocation4 + $0x28] sm:$0xff]
  %v924 = vld [vmem:[#allocation4 + $0x30] sm:$0xff]
  %v925 = vld [vmem:[#allocation4 + $0x38] sm:$0xff]
  %v926 = vld [vmem:[#allocation4 + $0x40] sm:$0xff]
  %v927 = vld [vmem:[#allocation4 + $0x48] sm:$0xff]
  %v928 = vld [vmem:[#allocation4 + $0x50] sm:$0xff]
  %v929 = vld [vmem:[#allocation4 + $0x58] sm:$0xff]
  %v930 = vld [vmem:[#allocation4 + $0x60] sm:$0xff]
  %v931 = vld [vmem:[#allocation4 + $0x68] sm:$0xff]
  %v932 = vld [vmem:[#allocation4 + $0x70] sm:$0xff]
  %v933 = vld [vmem:[#allocation4 + $0x78] sm:$0xff]
  %v934 = vld [vmem:[#allocation4 + $0x80] sm:$0xff]
  %v935 = vld [vmem:[#allocation4 + $0x88] sm:$0xff]
  %v936 = vld [vmem:[#allocation4 + $0x90] sm:$0xff]
  %v937 = vld [vmem:[#allocation4 + $0x98] sm:$0xff]
  %v938 = vld [vmem:[#allocation4 + $0xa0] sm:$0xff]
  %v939 = vld [vmem:[#allocation4 + $0xa8] sm:$0xff]
  %v940 = vld [vmem:[#allocation4 + $0xb0] sm:$0xff]
  %v941 = vld [vmem:[#allocation4 + $0xb8] sm:$0xff]
  %v942 = vld [vmem:[#allocation4 + $0xc0] sm:$0xff]
  %v943 = vld [vmem:[#allocation4 + $0xc8] sm:$0xff]
  %v944 = vld [vmem:[#allocation4 + $0xd0] sm:$0xff]
  %v945 = vld [vmem:[#allocation4 + $0xd8] sm:$0xff]
  %v946 = vld [vmem:[#allocation4 + $0xe0] sm:$0xff]
  %v947 = vld [vmem:[#allocation4 + $0xe8] sm:$0xff]
  %v948 = vld [vmem:[#allocation4 + $0xf0] sm:$0xff]
  %v949 = vld [vmem:[#allocation4 + $0xf8] sm:$0xff]
  %v950 = vld [vmem:[#allocation4 + $0x100] sm:$0xff]
  %v951 = vld [vmem:[#allocation4 + $0x108] sm:$0xff]
  %v952 = vld [vmem:[#allocation4 + $0x110] sm:$0xff]
  %v953 = vld [vmem:[#allocation4 + $0x118] sm:$0xff]
  %v954 = vld [vmem:[%s4] sm:$0xff]
  %v955 = vld [vmem:[%s4 + $0x8] sm:$0xff]
  %957 = vset.pattern.permute.xlu0 0
  %958 = vperm.xlu0 %957, %v954
  %v959 = vpop.permute.xlu0 %958
  %962 = vset.pattern.permute.xlu0 0
  %963 = vperm.xlu0 %962, %v955
  %v964 = vpop.permute.xlu0 %963
  %v967 = vsel %vm416, %v916, 0
  %v970 = vsel %vm416, %v917, 0
  %972 = vmatprep.subr.mxu0 0.0
  %973 = vmatpush1.msra.mxu0 0.0
  %974 = vmatprep.subr.mxu0 0.0
  %975 = vmatpush1.msra.mxu0 0.0
  %976 = vmatprep.subr.mxu0 0.0
  %977 = vmatpush1.msra.mxu0 0.0
  %978 = vmatprep.subr.mxu0 0.0
  %979 = vmatpush1.msra.mxu0 0.0
  %980 = vmatprep.subr.mxu0 0.0
  %981 = vmatpush1.msra.mxu0 0.0
  %982 = vmatprep.subr.mxu0 0.0
  %983 = vmatpush1.msra.mxu0 0.0
  %984 = vmatprep.subr.mxu0 0.0
  %985 = vmatpush1.msra.mxu0 0.0
  %986 = vmatprep.subr.mxu0 %v951
  %987 = vmatpush1.msra.mxu0 %v950
  %988 = vmatprep.subr.mxu0 %v947
  %989 = vmatpush1.msra.mxu0 %v946
  %990 = vmatprep.subr.mxu0 %v943
  %991 = vmatpush1.msra.mxu0 %v942
  %992 = vmatprep.subr.mxu0 %v939
  %993 = vmatpush1.msra.mxu0 %v938
  %994 = vmatprep.subr.mxu0 %v935
  %995 = vmatpush1.msra.mxu0 %v934
  %996 = vmatprep.subr.mxu0 %v931
  %997 = vmatpush1.msra.mxu0 %v930
  %998 = vmatprep.subr.mxu0 %v927
  %999 = vmatpush1.msra.mxu0 %v926
  %1000 = vmatprep.subr.mxu0 %v923
  %1001 = vmatpush1.msra.mxu0 %v922
  %1002 = vmatprep.subr.mxu0 %v919
  %1003 = vmatpush1.msra.mxu0 %v918
  %1004 = vmatprep.subr.mxu0 0.0
  %1005 = vmatpush2.msra.mxu0 0.0
  %1006 = vmatprep.subr.mxu0 0.0
  %1007 = vmatpush2.msra.mxu0 0.0
  %1008 = vmatprep.subr.mxu0 0.0
  %1009 = vmatpush2.msra.mxu0 0.0
  %1010 = vmatprep.subr.mxu0 0.0
  %1011 = vmatpush2.msra.mxu0 0.0
  %1012 = vmatprep.subr.mxu0 0.0
  %1013 = vmatpush2.msra.mxu0 0.0
  %1014 = vmatprep.subr.mxu0 0.0
  %1015 = vmatpush2.msra.mxu0 0.0
  %1016 = vmatprep.subr.mxu0 0.0
  %1017 = vmatpush2.msra.mxu0 0.0
  %1018 = vmatprep.subr.mxu0 0.0
  %1019 = vmatpush2.msra.mxu0 0.0
  %1020 = vmatprep.subr.mxu0 0.0
  %1021 = vmatpush2.msra.mxu0 0.0
  %1022 = vmatprep.subr.mxu0 0.0
  %1023 = vmatpush2.msra.mxu0 0.0
  %1024 = vmatprep.subr.mxu0 0.0
  %1025 = vmatpush2.msra.mxu0 0.0
  %1026 = vmatprep.subr.mxu0 0.0
  %1027 = vmatpush2.msra.mxu0 0.0
  %1028 = vmatprep.subr.mxu0 0.0
  %1029 = vmatpush2.msra.mxu0 0.0
  %1030 = vmatprep.subr.mxu0 0.0
  %1031 = vmatpush2.msra.mxu0 0.0
  %1032 = vmatprep.subr.mxu0 0.0
  %1033 = vmatpush2.msra.mxu0 0.0
  %1034 = vmatprep.subr.mxu0 0.0
  %1035 = vmatpush2.msra.mxu0 0.0
  %1036 = vmatprep.mubr.f32.mxu0 0.0
  %1037 = vmatmul.mubr.f32.gmra.mxu0 %v967
  %v1038 = vpop.f32.mrf.mxu0
  %v1039 = vadd.f32 %v959, %v1038
  %v1040 = vpop.f32.mrf.mxu0
  %v1041 = vadd.f32 %v959, %v1040
  %1042 = vmatprep.mubr.f32.mxu0 0.0
  %1043 = vmatmul.mubr.f32.gmra.mxu0 %v970
  %v1044 = vpop.f32.mrf.mxu0
  %v1045 = vadd.f32 %v964, %v1044
  %v1046 = vpop.f32.mrf.mxu0
  %v1047 = vadd.f32 %v964, %v1046
  %1048 = vdwg.mxu0
  %1049 = vmatprep.subr.mxu0 0.0
  %1050 = vmatpush1.msra.mxu0 0.0
  %1051 = vmatprep.subr.mxu0 0.0
  %1052 = vmatpush1.msra.mxu0 0.0
  %1053 = vmatprep.subr.mxu0 0.0
  %1054 = vmatpush1.msra.mxu0 0.0
  %1055 = vmatprep.subr.mxu0 0.0
  %1056 = vmatpush1.msra.mxu0 0.0
  %1057 = vmatprep.subr.mxu0 0.0
  %1058 = vmatpush1.msra.mxu0 0.0
  %1059 = vmatprep.subr.mxu0 0.0
  %1060 = vmatpush1.msra.mxu0 0.0
  %1061 = vmatprep.subr.mxu0 0.0
  %1062 = vmatpush1.msra.mxu0 0.0
  %1063 = vmatprep.subr.mxu0 %v953
  %1064 = vmatpush1.msra.mxu0 %v952
  %1065 = vmatprep.subr.mxu0 %v949
  %1066 = vmatpush1.msra.mxu0 %v948
  %1067 = vmatprep.subr.mxu0 %v945
  %1068 = vmatpush1.msra.mxu0 %v944
  %1069 = vmatprep.subr.mxu0 %v941
  %1070 = vmatpush1.msra.mxu0 %v940
  %1071 = vmatprep.subr.mxu0 %v937
  %1072 = vmatpush1.msra.mxu0 %v936
  %1073 = vmatprep.subr.mxu0 %v933
  %1074 = vmatpush1.msra.mxu0 %v932
  %1075 = vmatprep.subr.mxu0 %v929
  %1076 = vmatpush1.msra.mxu0 %v928
  %1077 = vmatprep.subr.mxu0 %v925
  %1078 = vmatpush1.msra.mxu0 %v924
  %1079 = vmatprep.subr.mxu0 %v921
  %1080 = vmatpush1.msra.mxu0 %v920
  %1081 = vmatprep.subr.mxu0 0.0
  %1082 = vmatpush2.msra.mxu0 0.0
  %1083 = vmatprep.subr.mxu0 0.0
  %1084 = vmatpush2.msra.mxu0 0.0
  %1085 = vmatprep.subr.mxu0 0.0
  %1086 = vmatpush2.msra.mxu0 0.0
  %1087 = vmatprep.subr.mxu0 0.0
  %1088 = vmatpush2.msra.mxu0 0.0
  %1089 = vmatprep.subr.mxu0 0.0
  %1090 = vmatpush2.msra.mxu0 0.0
  %1091 = vmatprep.subr.mxu0 0.0
  %1092 = vmatpush2.msra.mxu0 0.0
  %1093 = vmatprep.subr.mxu0 0.0
  %1094 = vmatpush2.msra.mxu0 0.0
  %1095 = vmatprep.subr.mxu0 0.0
  %1096 = vmatpush2.msra.mxu0 0.0
  %1097 = vmatprep.subr.mxu0 0.0
  %1098 = vmatpush2.msra.mxu0 0.0
  %1099 = vmatprep.subr.mxu0 0.0
  %1100 = vmatpush2.msra.mxu0 0.0
  %1101 = vmatprep.subr.mxu0 0.0
  %1102 = vmatpush2.msra.mxu0 0.0
  %1103 = vmatprep.subr.mxu0 0.0
  %1104 = vmatpush2.msra.mxu0 0.0
  %1105 = vmatprep.subr.mxu0 0.0
  %1106 = vmatpush2.msra.mxu0 0.0
  %1107 = vmatprep.subr.mxu0 0.0
  %1108 = vmatpush2.msra.mxu0 0.0
  %1109 = vmatprep.subr.mxu0 0.0
  %1110 = vmatpush2.msra.mxu0 0.0
  %1111 = vmatprep.subr.mxu0 0.0
  %1112 = vmatpush2.msra.mxu0 0.0
  %1113 = vmatprep.mubr.f32.mxu0 0.0
  %1114 = vmatmul.mubr.f32.gmra.mxu0 %v967
  %v1115 = vpop.f32.mrf.mxu0
  %v1116 = vadd.f32 %v959, %v1115
  %v1117 = vpop.f32.mrf.mxu0
  %v1118 = vadd.f32 %v959, %v1117
  %1119 = vmatprep.mubr.f32.mxu0 0.0
  %1120 = vmatmul.mubr.f32.gmra.mxu0 %v970
  %v1121 = vpop.f32.mrf.mxu0
  %v1122 = vadd.f32 %v964, %v1121
  %v1123 = vpop.f32.mrf.mxu0
  %v1124 = vadd.f32 %v964, %v1123
  %1125 = vdwg.mxu0
  %vm1126 = vcmp.ge.f32.partialorder %v1039, 0.0
  %vm1127 = vcmp.ge.f32.partialorder %v1041, 0.0
  %vm1128 = vcmp.ge.f32.partialorder %v1116, 0.0
  %vm1129 = vcmp.ge.f32.partialorder %v1118, 0.0
  %vm1130 = vcmp.ge.f32.partialorder %v1045, 0.0
  %vm1131 = vcmp.ge.f32.partialorder %v1047, 0.0
  %vm1132 = vcmp.ge.f32.partialorder %v1122, 0.0
  %vm1133 = vcmp.ge.f32.partialorder %v1124, 0.0
  %v1134 = vmul.f32 %v1039, 0.2
  %v1135 = vmul.f32 %v1041, 0.2
  %v1136 = vmul.f32 %v1116, 0.2
  %v1137 = vmul.f32 %v1118, 0.2
  %v1138 = vmul.f32 %v1045, 0.2
  %v1139 = vmul.f32 %v1047, 0.2
  %v1140 = vmul.f32 %v1122, 0.2
  %v1141 = vmul.f32 %v1124, 0.2
  %v1142 = vsel %vm1126, %v1039, %v1134
  %v1143 = vsel %vm1127, %v1041, %v1135
  %v1144 = vsel %vm1128, %v1116, %v1136
  %v1145 = vsel %vm1129, %v1118, %v1137
  %v1146 = vsel %vm1130, %v1045, %v1138
  %v1147 = vsel %vm1131, %v1047, %v1139
  %v1148 = vsel %vm1132, %v1122, %v1140
  %v1149 = vsel %vm1133, %v1124, %v1141
  %1150 = vst [vmem:[#allocation5] sm:$0xff] %v1142
  %1151 = vst [vmem:[#allocation5 + $0x8] sm:$0xff] %v1143
  %1152 = vst [vmem:[#allocation5 + $0x10] sm:$0xff] %v1144
  %1153 = vst [vmem:[#allocation5 + $0x18] sm:$0xff] %v1145
  %1154 = vst [vmem:[#allocation5 + $0x20] sm:$0xff] %v1146
  %1155 = vst [vmem:[#allocation5 + $0x28] sm:$0xff] %v1147
  %1156 = vst [vmem:[#allocation5 + $0x30] sm:$0xff] %v1148
  %1157 = vst [vmem:[#allocation5 + $0x38] sm:$0xff] %v1149
  %v1158 = vld [vmem:[#allocation5] ss:$8 sm:$0x3]
  %v1159 = vlaneseq
  %vm1160 = vcmp.ge.s32.totalorder %v1159, 0
  %vm1161 = vcmp.lt.s32.totalorder %v1159, 256
  %vm1162 = vmand %vm1160, %vm1161
  %1163 = vst.msk [vmem:[#allocation6] ss:$2 sm:$0x3] %vm1162, %v1158
  %s1164 = scalar_lea.vmem [#allocation5], 1
  %v1165 = vld [vmem:[%s1164] ss:$8 sm:$0x3]
  %s1166 = scalar_lea.vmem [#allocation6], 4
  %1167 = vst.msk [vmem:[%s1166] ss:$2 sm:$0x3] %vm1162, %v1165
  %s1168 = scalar_lea.vmem [#allocation5], 2
  %v1169 = vld [vmem:[%s1168] ss:$8 sm:$0x3]
  %s1170 = scalar_lea.vmem [#allocation6], 8
  %1171 = vst.msk [vmem:[%s1170] ss:$2 sm:$0x3] %vm1162, %v1169
  %s1172 = scalar_lea.vmem [#allocation5], 3
  %v1173 = vld [vmem:[%s1172] ss:$8 sm:$0x3]
  %s1174 = scalar_lea.vmem [#allocation6], 12
  %1175 = vst.msk [vmem:[%s1174] ss:$2 sm:$0x3] %vm1162, %v1173
  %s1176 = scalar_lea.vmem [#allocation5], 4
  %v1177 = vld [vmem:[%s1176] ss:$8 sm:$0x3]
  %s1178 = scalar_lea.vmem [#allocation6], 16
  %1179 = vst.msk [vmem:[%s1178] ss:$2 sm:$0x3] %vm1162, %v1177
  %s1180 = scalar_lea.vmem [#allocation5], 5
  %v1181 = vld [vmem:[%s1180] ss:$8 sm:$0x3]
  %s1182 = scalar_lea.vmem [#allocation6], 20
  %1183 = vst.msk [vmem:[%s1182] ss:$2 sm:$0x3] %vm1162, %v1181
  %s1184 = scalar_lea.vmem [#allocation5], 6
  %v1185 = vld [vmem:[%s1184] ss:$8 sm:$0x3]
  %s1186 = scalar_lea.vmem [#allocation6], 24
  %1187 = vst.msk [vmem:[%s1186] ss:$2 sm:$0x3] %vm1162, %v1185
  %s1188 = scalar_lea.vmem [#allocation5], 7
  %v1189 = vld [vmem:[%s1188] ss:$8 sm:$0x3]
  %s1190 = scalar_lea.vmem [#allocation6], 28
  %1191 = vst.msk [vmem:[%s1190] ss:$2 sm:$0x3] %vm1162, %v1189
  %s1192 = scalar_lea.vmem [#allocation5], 32
  %v1193 = vld [vmem:[%s1192] ss:$8 sm:$0x3]
  %s1194 = scalar_lea.vmem [#allocation6], 32
  %1195 = vst.msk [vmem:[%s1194] ss:$2 sm:$0x3] %vm1162, %v1193
  %s1196 = scalar_lea.vmem [#allocation5], 33
  %v1197 = vld [vmem:[%s1196] ss:$8 sm:$0x3]
  %s1198 = scalar_lea.vmem [#allocation6], 36
  %1199 = vst.msk [vmem:[%s1198] ss:$2 sm:$0x3] %vm1162, %v1197
  %s1200 = scalar_lea.vmem [#allocation5], 34
  %v1201 = vld [vmem:[%s1200] ss:$8 sm:$0x3]
  %s1202 = scalar_lea.vmem [#allocation6], 40
  %1203 = vst.msk [vmem:[%s1202] ss:$2 sm:$0x3] %vm1162, %v1201
  %s1204 = scalar_lea.vmem [#allocation5], 35
  %v1205 = vld [vmem:[%s1204] ss:$8 sm:$0x3]
  %s1206 = scalar_lea.vmem [#allocation6], 44
  %1207 = vst.msk [vmem:[%s1206] ss:$2 sm:$0x3] %vm1162, %v1205
  %s1208 = scalar_lea.vmem [#allocation5], 36
  %v1209 = vld [vmem:[%s1208] ss:$8 sm:$0x3]
  %s1210 = scalar_lea.vmem [#allocation6], 48
  %1211 = vst.msk [vmem:[%s1210] ss:$2 sm:$0x3] %vm1162, %v1209
  %s1212 = scalar_lea.vmem [#allocation5], 37
  %v1213 = vld [vmem:[%s1212] ss:$8 sm:$0x3]
  %s1214 = scalar_lea.vmem [#allocation6], 52
  %1215 = vst.msk [vmem:[%s1214] ss:$2 sm:$0x3] %vm1162, %v1213
  %s1216 = scalar_lea.vmem [#allocation5], 38
  %v1217 = vld [vmem:[%s1216] ss:$8 sm:$0x3]
  %s1218 = scalar_lea.vmem [#allocation6], 56
  %1219 = vst.msk [vmem:[%s1218] ss:$2 sm:$0x3] %vm1162, %v1217
  %s1220 = scalar_lea.vmem [#allocation5], 39
  %v1221 = vld [vmem:[%s1220] ss:$8 sm:$0x3]
  %s1222 = scalar_lea.vmem [#allocation6], 60
  %1223 = vst.msk [vmem:[%s1222] ss:$2 sm:$0x3] %vm1162, %v1221
  %s1224 = scalar_lea.vmem [#allocation5], 16
  %v1225 = vld [vmem:[%s1224] ss:$8 sm:$0x3]
  %s1226 = scalar_lea.vmem [#allocation6], 1
  %1227 = vst.msk [vmem:[%s1226] ss:$2 sm:$0x3] %vm1162, %v1225
  %s1228 = scalar_lea.vmem [#allocation5], 17
  %v1229 = vld [vmem:[%s1228] ss:$8 sm:$0x3]
  %s1230 = scalar_lea.vmem [#allocation6], 5
  %1231 = vst.msk [vmem:[%s1230] ss:$2 sm:$0x3] %vm1162, %v1229
  %s1232 = scalar_lea.vmem [#allocation5], 18
  %v1233 = vld [vmem:[%s1232] ss:$8 sm:$0x3]
  %s1234 = scalar_lea.vmem [#allocation6], 9
  %1235 = vst.msk [vmem:[%s1234] ss:$2 sm:$0x3] %vm1162, %v1233
  %s1236 = scalar_lea.vmem [#allocation5], 19
  %v1237 = vld [vmem:[%s1236] ss:$8 sm:$0x3]
  %s1238 = scalar_lea.vmem [#allocation6], 13
  %1239 = vst.msk [vmem:[%s1238] ss:$2 sm:$0x3] %vm1162, %v1237
  %s1240 = scalar_lea.vmem [#allocation5], 20
  %v1241 = vld [vmem:[%s1240] ss:$8 sm:$0x3]
  %s1242 = scalar_lea.vmem [#allocation6], 17
  %1243 = vst.msk [vmem:[%s1242] ss:$2 sm:$0x3] %vm1162, %v1241
  %s1244 = scalar_lea.vmem [#allocation5], 21
  %v1245 = vld [vmem:[%s1244] ss:$8 sm:$0x3]
  %s1246 = scalar_lea.vmem [#allocation6], 21
  %1247 = vst.msk [vmem:[%s1246] ss:$2 sm:$0x3] %vm1162, %v1245
  %s1248 = scalar_lea.vmem [#allocation5], 22
  %v1249 = vld [vmem:[%s1248] ss:$8 sm:$0x3]
  %s1250 = scalar_lea.vmem [#allocation6], 25
  %1251 = vst.msk [vmem:[%s1250] ss:$2 sm:$0x3] %vm1162, %v1249
  %s1252 = scalar_lea.vmem [#allocation5], 23
  %v1253 = vld [vmem:[%s1252] ss:$8 sm:$0x3]
  %s1254 = scalar_lea.vmem [#allocation6], 29
  %1255 = vst.msk [vmem:[%s1254] ss:$2 sm:$0x3] %vm1162, %v1253
  %s1256 = scalar_lea.vmem [#allocation5], 48
  %v1257 = vld [vmem:[%s1256] ss:$8 sm:$0x3]
  %s1258 = scalar_lea.vmem [#allocation6], 33
  %1259 = vst.msk [vmem:[%s1258] ss:$2 sm:$0x3] %vm1162, %v1257
  %s1260 = scalar_lea.vmem [#allocation5], 49
  %v1261 = vld [vmem:[%s1260] ss:$8 sm:$0x3]
  %s1262 = scalar_lea.vmem [#allocation6], 37
  %1263 = vst.msk [vmem:[%s1262] ss:$2 sm:$0x3] %vm1162, %v1261
  %s1264 = scalar_lea.vmem [#allocation5], 50
  %v1265 = vld [vmem:[%s1264] ss:$8 sm:$0x3]
  %s1266 = scalar_lea.vmem [#allocation6], 41
  %1267 = vst.msk [vmem:[%s1266] ss:$2 sm:$0x3] %vm1162, %v1265
  %s1268 = scalar_lea.vmem [#allocation5], 51
  %v1269 = vld [vmem:[%s1268] ss:$8 sm:$0x3]
  %s1270 = scalar_lea.vmem [#allocation6], 45
  %1271 = vst.msk [vmem:[%s1270] ss:$2 sm:$0x3] %vm1162, %v1269
  %s1272 = scalar_lea.vmem [#allocation5], 52
  %v1273 = vld [vmem:[%s1272] ss:$8 sm:$0x3]
  %s1274 = scalar_lea.vmem [#allocation6], 49
  %1275 = vst.msk [vmem:[%s1274] ss:$2 sm:$0x3] %vm1162, %v1273
  %s1276 = scalar_lea.vmem [#allocation5], 53
  %v1277 = vld [vmem:[%s1276] ss:$8 sm:$0x3]
  %s1278 = scalar_lea.vmem [#allocation6], 53
  %1279 = vst.msk [vmem:[%s1278] ss:$2 sm:$0x3] %vm1162, %v1277
  %s1280 = scalar_lea.vmem [#allocation5], 54
  %v1281 = vld [vmem:[%s1280] ss:$8 sm:$0x3]
  %s1282 = scalar_lea.vmem [#allocation6], 57
  %1283 = vst.msk [vmem:[%s1282] ss:$2 sm:$0x3] %vm1162, %v1281
  %s1284 = scalar_lea.vmem [#allocation5], 55
  %v1285 = vld [vmem:[%s1284] ss:$8 sm:$0x3]
  %s1286 = scalar_lea.vmem [#allocation6], 61
  %1287 = vst.msk [vmem:[%s1286] ss:$2 sm:$0x3] %vm1162, %v1285
  %v1288 = vld [vmem:[#allocation6] sm:$0xff]
  %v1289 = vld [vmem:[#allocation6 + $0x8] sm:$0xff]
  %v1290 = vld [vmem:[#allocation6 + $0x10] sm:$0xff]
  %v1291 = vld [vmem:[#allocation6 + $0x18] sm:$0xff]
  %v1292 = vld [vmem:[#allocation6 + $0x20] sm:$0xff]
  %v1293 = vld [vmem:[#allocation6 + $0x28] sm:$0xff]
  %v1294 = vld [vmem:[#allocation6 + $0x30] sm:$0xff]
  %v1295 = vld [vmem:[#allocation6 + $0x38] sm:$0xff]
  %v1296 = vld [vmem:[%s5] sm:$0xff]
  %v1297 = vld [vmem:[%s5 + $0x8] sm:$0xff]
  %v1298 = vld [vmem:[%s5 + $0x10] sm:$0xff]
  %v1299 = vld [vmem:[%s5 + $0x18] sm:$0xff]
  %v1300 = vld [vmem:[%s5 + $0x20] sm:$0xff]
  %v1301 = vld [vmem:[%s5 + $0x28] sm:$0xff]
  %v1302 = vld [vmem:[%s5 + $0x30] sm:$0xff]
  %v1303 = vld [vmem:[%s5 + $0x38] sm:$0xff]
  %v1304 = vld [vmem:[%s5 + $0x40] sm:$0xff]
  %v1305 = vld [vmem:[%s5 + $0x48] sm:$0xff]
  %v1306 = vld [vmem:[%s5 + $0x50] sm:$0xff]
  %v1307 = vld [vmem:[%s5 + $0x58] sm:$0xff]
  %v1308 = vld [vmem:[%s5 + $0x60] sm:$0xff]
  %v1309 = vld [vmem:[%s5 + $0x68] sm:$0xff]
  %v1310 = vld [vmem:[%s5 + $0x70] sm:$0xff]
  %v1311 = vld [vmem:[%s5 + $0x78] sm:$0xff]
  %v1312 = vld [vmem:[%s5 + $0x80] sm:$0xff]
  %v1313 = vld [vmem:[%s5 + $0x88] sm:$0xff]
  %v1314 = vld [vmem:[%s5 + $0x90] sm:$0xff]
  %v1315 = vld [vmem:[%s5 + $0x98] sm:$0xff]
  %v1316 = vld [vmem:[%s5 + $0xa0] sm:$0xff]
  %v1317 = vld [vmem:[%s5 + $0xa8] sm:$0xff]
  %v1318 = vld [vmem:[%s5 + $0xb0] sm:$0xff]
  %v1319 = vld [vmem:[%s5 + $0xb8] sm:$0xff]
  %v1320 = vld [vmem:[%s5 + $0xc0] sm:$0xff]
  %v1321 = vld [vmem:[%s5 + $0xc8] sm:$0xff]
  %v1322 = vld [vmem:[%s5 + $0xd0] sm:$0xff]
  %v1323 = vld [vmem:[%s5 + $0xd8] sm:$0xff]
  %v1324 = vld [vmem:[%s5 + $0xe0] sm:$0xff]
  %v1325 = vld [vmem:[%s5 + $0xe8] sm:$0xff]
  %v1326 = vld [vmem:[%s5 + $0xf0] sm:$0xff]
  %v1327 = vld [vmem:[%s5 + $0xf8] sm:$0xff]
  %v1328 = vld [vmem:[%s5 + $0x100] sm:$0xff]
  %v1329 = vld [vmem:[%s5 + $0x108] sm:$0xff]
  %v1330 = vld [vmem:[%s5 + $0x110] sm:$0xff]
  %v1331 = vld [vmem:[%s5 + $0x118] sm:$0xff]
  %v1332 = vld [vmem:[%s5 + $0x120] sm:$0xff]
  %v1333 = vld [vmem:[%s5 + $0x128] sm:$0xff]
  %v1334 = vld [vmem:[%s5 + $0x130] sm:$0xff]
  %v1335 = vld [vmem:[%s5 + $0x138] sm:$0xff]
  %v1336 = vld [vmem:[%s5 + $0x140] sm:$0xff]
  %v1337 = vld [vmem:[%s5 + $0x148] sm:$0xff]
  %v1338 = vld [vmem:[%s5 + $0x150] sm:$0xff]
  %v1339 = vld [vmem:[%s5 + $0x158] sm:$0xff]
  %v1340 = vld [vmem:[%s5 + $0x160] sm:$0xff]
  %v1341 = vld [vmem:[%s5 + $0x168] sm:$0xff]
  %v1342 = vld [vmem:[%s5 + $0x170] sm:$0xff]
  %v1343 = vld [vmem:[%s5 + $0x178] sm:$0xff]
  %v1344 = vld [vmem:[%s5 + $0x180] sm:$0xff]
  %v1345 = vld [vmem:[%s5 + $0x188] sm:$0xff]
  %v1346 = vld [vmem:[%s5 + $0x190] sm:$0xff]
  %v1347 = vld [vmem:[%s5 + $0x198] sm:$0xff]
  %v1348 = vld [vmem:[%s5 + $0x1a0] sm:$0xff]
  %v1349 = vld [vmem:[%s5 + $0x1a8] sm:$0xff]
  %v1350 = vld [vmem:[%s5 + $0x1b0] sm:$0xff]
  %v1351 = vld [vmem:[%s5 + $0x1b8] sm:$0xff]
  %v1352 = vld [vmem:[%s5 + $0x1c0] sm:$0xff]
  %v1353 = vld [vmem:[%s5 + $0x1c8] sm:$0xff]
  %v1354 = vld [vmem:[%s5 + $0x1d0] sm:$0xff]
  %v1355 = vld [vmem:[%s5 + $0x1d8] sm:$0xff]
  %v1356 = vld [vmem:[%s5 + $0x1e0] sm:$0xff]
  %v1357 = vld [vmem:[%s5 + $0x1e8] sm:$0xff]
  %v1358 = vld [vmem:[%s5 + $0x1f0] sm:$0xff]
  %v1359 = vld [vmem:[%s5 + $0x1f8] sm:$0xff]
  %v1360 = vld [vmem:[%s5 + $0x200] sm:$0xff]
  %v1361 = vld [vmem:[%s5 + $0x208] sm:$0xff]
  %v1362 = vld [vmem:[%s5 + $0x210] sm:$0xff]
  %v1363 = vld [vmem:[%s5 + $0x218] sm:$0xff]
  %v1364 = vld [vmem:[%s5 + $0x220] sm:$0xff]
  %v1365 = vld [vmem:[%s5 + $0x228] sm:$0xff]
  %v1366 = vld [vmem:[%s5 + $0x230] sm:$0xff]
  %v1367 = vld [vmem:[%s5 + $0x238] sm:$0xff]
  %v1368 = vld [vmem:[%s5 + $0x240] sm:$0xff]
  %v1369 = vld [vmem:[%s5 + $0x248] sm:$0xff]
  %v1370 = vld [vmem:[%s5 + $0x250] sm:$0xff]
  %v1371 = vld [vmem:[%s5 + $0x258] sm:$0xff]
  %v1372 = vld [vmem:[%s5 + $0x260] sm:$0xff]
  %v1373 = vld [vmem:[%s5 + $0x268] sm:$0xff]
  %v1374 = vld [vmem:[%s5 + $0x270] sm:$0xff]
  %v1375 = vld [vmem:[%s5 + $0x278] sm:$0xff]
  %v1376 = vld [vmem:[%s5 + $0x280] sm:$0xff]
  %v1377 = vld [vmem:[%s5 + $0x288] sm:$0xff]
  %v1378 = vld [vmem:[%s5 + $0x290] sm:$0xff]
  %v1379 = vld [vmem:[%s5 + $0x298] sm:$0xff]
  %v1380 = vld [vmem:[%s5 + $0x2a0] sm:$0xff]
  %v1381 = vld [vmem:[%s5 + $0x2a8] sm:$0xff]
  %v1382 = vld [vmem:[%s5 + $0x2b0] sm:$0xff]
  %v1383 = vld [vmem:[%s5 + $0x2b8] sm:$0xff]
  %v1384 = vld [vmem:[%s5 + $0x2c0] sm:$0xff]
  %v1385 = vld [vmem:[%s5 + $0x2c8] sm:$0xff]
  %v1386 = vld [vmem:[%s5 + $0x2d0] sm:$0xff]
  %v1387 = vld [vmem:[%s5 + $0x2d8] sm:$0xff]
  %v1388 = vld [vmem:[%s5 + $0x2e0] sm:$0xff]
  %v1389 = vld [vmem:[%s5 + $0x2e8] sm:$0xff]
  %v1390 = vld [vmem:[%s5 + $0x2f0] sm:$0xff]
  %v1391 = vld [vmem:[%s5 + $0x2f8] sm:$0xff]
  %v1392 = vld [vmem:[%s5 + $0x300] sm:$0xff]
  %v1393 = vld [vmem:[%s5 + $0x308] sm:$0xff]
  %v1394 = vld [vmem:[%s5 + $0x310] sm:$0xff]
  %v1395 = vld [vmem:[%s5 + $0x318] sm:$0xff]
  %v1396 = vld [vmem:[%s5 + $0x320] sm:$0xff]
  %v1397 = vld [vmem:[%s5 + $0x328] sm:$0xff]
  %v1398 = vld [vmem:[%s5 + $0x330] sm:$0xff]
  %v1399 = vld [vmem:[%s5 + $0x338] sm:$0xff]
  %v1400 = vld [vmem:[%s5 + $0x340] sm:$0xff]
  %v1401 = vld [vmem:[%s5 + $0x348] sm:$0xff]
  %v1402 = vld [vmem:[%s5 + $0x350] sm:$0xff]
  %v1403 = vld [vmem:[%s5 + $0x358] sm:$0xff]
  %v1404 = vld [vmem:[%s5 + $0x360] sm:$0xff]
  %v1405 = vld [vmem:[%s5 + $0x368] sm:$0xff]
  %v1406 = vld [vmem:[%s5 + $0x370] sm:$0xff]
  %v1407 = vld [vmem:[%s5 + $0x378] sm:$0xff]
  %v1408 = vld [vmem:[%s5 + $0x380] sm:$0xff]
  %v1409 = vld [vmem:[%s5 + $0x388] sm:$0xff]
  %v1410 = vld [vmem:[%s5 + $0x390] sm:$0xff]
  %v1411 = vld [vmem:[%s5 + $0x398] sm:$0xff]
  %v1412 = vld [vmem:[%s5 + $0x3a0] sm:$0xff]
  %v1413 = vld [vmem:[%s5 + $0x3a8] sm:$0xff]
  %v1414 = vld [vmem:[%s5 + $0x3b0] sm:$0xff]
  %v1415 = vld [vmem:[%s5 + $0x3b8] sm:$0xff]
  %v1416 = vld [vmem:[%s5 + $0x3c0] sm:$0xff]
  %v1417 = vld [vmem:[%s5 + $0x3c8] sm:$0xff]
  %v1418 = vld [vmem:[%s5 + $0x3d0] sm:$0xff]
  %v1419 = vld [vmem:[%s5 + $0x3d8] sm:$0xff]
  %v1420 = vld [vmem:[%s5 + $0x3e0] sm:$0xff]
  %v1421 = vld [vmem:[%s5 + $0x3e8] sm:$0xff]
  %v1422 = vld [vmem:[%s5 + $0x3f0] sm:$0xff]
  %v1423 = vld [vmem:[%s5 + $0x3f8] sm:$0xff]
  %v1424 = vld [vmem:[%s5 + $0x400] sm:$0xff]
  %v1425 = vld [vmem:[%s5 + $0x408] sm:$0xff]
  %v1426 = vld [vmem:[%s5 + $0x410] sm:$0xff]
  %v1427 = vld [vmem:[%s5 + $0x418] sm:$0xff]
  %v1428 = vld [vmem:[%s5 + $0x420] sm:$0xff]
  %v1429 = vld [vmem:[%s5 + $0x428] sm:$0xff]
  %v1430 = vld [vmem:[%s5 + $0x430] sm:$0xff]
  %v1431 = vld [vmem:[%s5 + $0x438] sm:$0xff]
  %v1432 = vld [vmem:[%s5 + $0x440] sm:$0xff]
  %v1433 = vld [vmem:[%s5 + $0x448] sm:$0xff]
  %v1434 = vld [vmem:[%s5 + $0x450] sm:$0xff]
  %v1435 = vld [vmem:[%s5 + $0x458] sm:$0xff]
  %v1436 = vld [vmem:[%s5 + $0x460] sm:$0xff]
  %v1437 = vld [vmem:[%s5 + $0x468] sm:$0xff]
  %v1438 = vld [vmem:[%s5 + $0x470] sm:$0xff]
  %v1439 = vld [vmem:[%s5 + $0x478] sm:$0xff]
  %v1440 = vld [vmem:[%s5 + $0x480] sm:$0xff]
  %v1441 = vld [vmem:[%s5 + $0x488] sm:$0xff]
  %v1442 = vld [vmem:[%s5 + $0x490] sm:$0xff]
  %v1443 = vld [vmem:[%s5 + $0x498] sm:$0xff]
  %v1444 = vld [vmem:[%s5 + $0x4a0] sm:$0xff]
  %v1445 = vld [vmem:[%s5 + $0x4a8] sm:$0xff]
  %v1446 = vld [vmem:[%s5 + $0x4b0] sm:$0xff]
  %v1447 = vld [vmem:[%s5 + $0x4b8] sm:$0xff]
  %v1448 = vld [vmem:[%s5 + $0x4c0] sm:$0xff]
  %v1449 = vld [vmem:[%s5 + $0x4c8] sm:$0xff]
  %v1450 = vld [vmem:[%s5 + $0x4d0] sm:$0xff]
  %v1451 = vld [vmem:[%s5 + $0x4d8] sm:$0xff]
  %v1452 = vld [vmem:[%s5 + $0x4e0] sm:$0xff]
  %v1453 = vld [vmem:[%s5 + $0x4e8] sm:$0xff]
  %v1454 = vld [vmem:[%s5 + $0x4f0] sm:$0xff]
  %v1455 = vld [vmem:[%s5 + $0x4f8] sm:$0xff]
  %v1456 = vld [vmem:[%s5 + $0x500] sm:$0xff]
  %v1457 = vld [vmem:[%s5 + $0x508] sm:$0xff]
  %v1458 = vld [vmem:[%s5 + $0x510] sm:$0xff]
  %v1459 = vld [vmem:[%s5 + $0x518] sm:$0xff]
  %v1460 = vld [vmem:[%s5 + $0x520] sm:$0xff]
  %v1461 = vld [vmem:[%s5 + $0x528] sm:$0xff]
  %v1462 = vld [vmem:[%s5 + $0x530] sm:$0xff]
  %v1463 = vld [vmem:[%s5 + $0x538] sm:$0xff]
  %v1464 = vld [vmem:[%s5 + $0x540] sm:$0xff]
  %v1465 = vld [vmem:[%s5 + $0x548] sm:$0xff]
  %v1466 = vld [vmem:[%s5 + $0x550] sm:$0xff]
  %v1467 = vld [vmem:[%s5 + $0x558] sm:$0xff]
  %v1468 = vld [vmem:[%s5 + $0x560] sm:$0xff]
  %v1469 = vld [vmem:[%s5 + $0x568] sm:$0xff]
  %v1470 = vld [vmem:[%s5 + $0x570] sm:$0xff]
  %v1471 = vld [vmem:[%s5 + $0x578] sm:$0xff]
  %v1472 = vld [vmem:[%s5 + $0x580] sm:$0xff]
  %v1473 = vld [vmem:[%s5 + $0x588] sm:$0xff]
  %v1474 = vld [vmem:[%s5 + $0x590] sm:$0xff]
  %v1475 = vld [vmem:[%s5 + $0x598] sm:$0xff]
  %v1476 = vld [vmem:[%s5 + $0x5a0] sm:$0xff]
  %v1477 = vld [vmem:[%s5 + $0x5a8] sm:$0xff]
  %v1478 = vld [vmem:[%s5 + $0x5b0] sm:$0xff]
  %v1479 = vld [vmem:[%s5 + $0x5b8] sm:$0xff]
  %v1480 = vld [vmem:[%s5 + $0x5c0] sm:$0xff]
  %v1481 = vld [vmem:[%s5 + $0x5c8] sm:$0xff]
  %v1482 = vld [vmem:[%s5 + $0x5d0] sm:$0xff]
  %v1483 = vld [vmem:[%s5 + $0x5d8] sm:$0xff]
  %v1484 = vld [vmem:[%s5 + $0x5e0] sm:$0xff]
  %v1485 = vld [vmem:[%s5 + $0x5e8] sm:$0xff]
  %v1486 = vld [vmem:[%s5 + $0x5f0] sm:$0xff]
  %v1487 = vld [vmem:[%s5 + $0x5f8] sm:$0xff]
  %v1488 = vld [vmem:[%s5 + $0x600] sm:$0xff]
  %v1489 = vld [vmem:[%s5 + $0x608] sm:$0xff]
  %v1490 = vld [vmem:[%s5 + $0x610] sm:$0xff]
  %v1491 = vld [vmem:[%s5 + $0x618] sm:$0xff]
  %v1492 = vld [vmem:[%s5 + $0x620] sm:$0xff]
  %v1493 = vld [vmem:[%s5 + $0x628] sm:$0xff]
  %v1494 = vld [vmem:[%s5 + $0x630] sm:$0xff]
  %v1495 = vld [vmem:[%s5 + $0x638] sm:$0xff]
  %v1496 = vld [vmem:[%s5 + $0x640] sm:$0xff]
  %v1497 = vld [vmem:[%s5 + $0x648] sm:$0xff]
  %v1498 = vld [vmem:[%s5 + $0x650] sm:$0xff]
  %v1499 = vld [vmem:[%s5 + $0x658] sm:$0xff]
  %v1500 = vld [vmem:[%s5 + $0x660] sm:$0xff]
  %v1501 = vld [vmem:[%s5 + $0x668] sm:$0xff]
  %v1502 = vld [vmem:[%s5 + $0x670] sm:$0xff]
  %v1503 = vld [vmem:[%s5 + $0x678] sm:$0xff]
  %v1504 = vld [vmem:[%s5 + $0x680] sm:$0xff]
  %v1505 = vld [vmem:[%s5 + $0x688] sm:$0xff]
  %v1506 = vld [vmem:[%s5 + $0x690] sm:$0xff]
  %v1507 = vld [vmem:[%s5 + $0x698] sm:$0xff]
  %v1508 = vld [vmem:[%s5 + $0x6a0] sm:$0xff]
  %v1509 = vld [vmem:[%s5 + $0x6a8] sm:$0xff]
  %v1510 = vld [vmem:[%s5 + $0x6b0] sm:$0xff]
  %v1511 = vld [vmem:[%s5 + $0x6b8] sm:$0xff]
  %v1512 = vld [vmem:[%s5 + $0x6c0] sm:$0xff]
  %v1513 = vld [vmem:[%s5 + $0x6c8] sm:$0xff]
  %v1514 = vld [vmem:[%s5 + $0x6d0] sm:$0xff]
  %v1515 = vld [vmem:[%s5 + $0x6d8] sm:$0xff]
  %v1516 = vld [vmem:[%s5 + $0x6e0] sm:$0xff]
  %v1517 = vld [vmem:[%s5 + $0x6e8] sm:$0xff]
  %v1518 = vld [vmem:[%s5 + $0x6f0] sm:$0xff]
  %v1519 = vld [vmem:[%s5 + $0x6f8] sm:$0xff]
  %v1520 = vld [vmem:[%s5 + $0x700] sm:$0xff]
  %v1521 = vld [vmem:[%s5 + $0x708] sm:$0xff]
  %v1522 = vld [vmem:[%s5 + $0x710] sm:$0xff]
  %v1523 = vld [vmem:[%s5 + $0x718] sm:$0xff]
  %v1524 = vld [vmem:[%s5 + $0x720] sm:$0xff]
  %v1525 = vld [vmem:[%s5 + $0x728] sm:$0xff]
  %v1526 = vld [vmem:[%s5 + $0x730] sm:$0xff]
  %v1527 = vld [vmem:[%s5 + $0x738] sm:$0xff]
  %v1528 = vld [vmem:[%s5 + $0x740] sm:$0xff]
  %v1529 = vld [vmem:[%s5 + $0x748] sm:$0xff]
  %v1530 = vld [vmem:[%s5 + $0x750] sm:$0xff]
  %v1531 = vld [vmem:[%s5 + $0x758] sm:$0xff]
  %v1532 = vld [vmem:[%s5 + $0x760] sm:$0xff]
  %v1533 = vld [vmem:[%s5 + $0x768] sm:$0xff]
  %v1534 = vld [vmem:[%s5 + $0x770] sm:$0xff]
  %v1535 = vld [vmem:[%s5 + $0x778] sm:$0xff]
  %v1536 = vld [vmem:[%s5 + $0x780] sm:$0xff]
  %v1537 = vld [vmem:[%s5 + $0x788] sm:$0xff]
  %v1538 = vld [vmem:[%s5 + $0x790] sm:$0xff]
  %v1539 = vld [vmem:[%s5 + $0x798] sm:$0xff]
  %v1540 = vld [vmem:[%s5 + $0x7a0] sm:$0xff]
  %v1541 = vld [vmem:[%s5 + $0x7a8] sm:$0xff]
  %v1542 = vld [vmem:[%s5 + $0x7b0] sm:$0xff]
  %v1543 = vld [vmem:[%s5 + $0x7b8] sm:$0xff]
  %v1544 = vld [vmem:[%s5 + $0x7c0] sm:$0xff]
  %v1545 = vld [vmem:[%s5 + $0x7c8] sm:$0xff]
  %v1546 = vld [vmem:[%s5 + $0x7d0] sm:$0xff]
  %v1547 = vld [vmem:[%s5 + $0x7d8] sm:$0xff]
  %v1548 = vld [vmem:[%s5 + $0x7e0] sm:$0xff]
  %v1549 = vld [vmem:[%s5 + $0x7e8] sm:$0xff]
  %v1550 = vld [vmem:[%s5 + $0x7f0] sm:$0xff]
  %v1551 = vld [vmem:[%s5 + $0x7f8] sm:$0xff]
  %v1552 = vld [vmem:[%s5 + $0x800] sm:$0xff]
  %v1553 = vld [vmem:[%s5 + $0x808] sm:$0xff]
  %v1554 = vld [vmem:[%s5 + $0x810] sm:$0xff]
  %v1555 = vld [vmem:[%s5 + $0x818] sm:$0xff]
  %v1556 = vld [vmem:[%s5 + $0x820] sm:$0xff]
  %v1557 = vld [vmem:[%s5 + $0x828] sm:$0xff]
  %v1558 = vld [vmem:[%s5 + $0x830] sm:$0xff]
  %v1559 = vld [vmem:[%s5 + $0x838] sm:$0xff]
  %v1560 = vld [vmem:[%s5 + $0x840] sm:$0xff]
  %v1561 = vld [vmem:[%s5 + $0x848] sm:$0xff]
  %v1562 = vld [vmem:[%s5 + $0x850] sm:$0xff]
  %v1563 = vld [vmem:[%s5 + $0x858] sm:$0xff]
  %v1564 = vld [vmem:[%s5 + $0x860] sm:$0xff]
  %v1565 = vld [vmem:[%s5 + $0x868] sm:$0xff]
  %v1566 = vld [vmem:[%s5 + $0x870] sm:$0xff]
  %v1567 = vld [vmem:[%s5 + $0x878] sm:$0xff]
  %v1568 = vld [vmem:[%s5 + $0x880] sm:$0xff]
  %v1569 = vld [vmem:[%s5 + $0x888] sm:$0xff]
  %v1570 = vld [vmem:[%s5 + $0x890] sm:$0xff]
  %v1571 = vld [vmem:[%s5 + $0x898] sm:$0xff]
  %v1572 = vld [vmem:[%s5 + $0x8a0] sm:$0xff]
  %v1573 = vld [vmem:[%s5 + $0x8a8] sm:$0xff]
  %v1574 = vld [vmem:[%s5 + $0x8b0] sm:$0xff]
  %v1575 = vld [vmem:[%s5 + $0x8b8] sm:$0xff]
  %v1576 = vld [vmem:[%s5 + $0x8c0] sm:$0xff]
  %v1577 = vld [vmem:[%s5 + $0x8c8] sm:$0xff]
  %v1578 = vld [vmem:[%s5 + $0x8d0] sm:$0xff]
  %v1579 = vld [vmem:[%s5 + $0x8d8] sm:$0xff]
  %v1580 = vld [vmem:[%s5 + $0x8e0] sm:$0xff]
  %v1581 = vld [vmem:[%s5 + $0x8e8] sm:$0xff]
  %v1582 = vld [vmem:[%s5 + $0x8f0] sm:$0xff]
  %v1583 = vld [vmem:[%s5 + $0x8f8] sm:$0xff]
  %v1584 = vld [vmem:[%s5 + $0x900] sm:$0xff]
  %v1585 = vld [vmem:[%s5 + $0x908] sm:$0xff]
  %v1586 = vld [vmem:[%s5 + $0x910] sm:$0xff]
  %v1587 = vld [vmem:[%s5 + $0x918] sm:$0xff]
  %v1588 = vld [vmem:[%s5 + $0x920] sm:$0xff]
  %v1589 = vld [vmem:[%s5 + $0x928] sm:$0xff]
  %v1590 = vld [vmem:[%s5 + $0x930] sm:$0xff]
  %v1591 = vld [vmem:[%s5 + $0x938] sm:$0xff]
  %v1592 = vld [vmem:[%s5 + $0x940] sm:$0xff]
  %v1593 = vld [vmem:[%s5 + $0x948] sm:$0xff]
  %v1594 = vld [vmem:[%s5 + $0x950] sm:$0xff]
  %v1595 = vld [vmem:[%s5 + $0x958] sm:$0xff]
  %v1596 = vld [vmem:[%s5 + $0x960] sm:$0xff]
  %v1597 = vld [vmem:[%s5 + $0x968] sm:$0xff]
  %v1598 = vld [vmem:[%s5 + $0x970] sm:$0xff]
  %v1599 = vld [vmem:[%s5 + $0x978] sm:$0xff]
  %v1600 = vld [vmem:[%s5 + $0x980] sm:$0xff]
  %v1601 = vld [vmem:[%s5 + $0x988] sm:$0xff]
  %v1602 = vld [vmem:[%s5 + $0x990] sm:$0xff]
  %v1603 = vld [vmem:[%s5 + $0x998] sm:$0xff]
  %v1604 = vld [vmem:[%s5 + $0x9a0] sm:$0xff]
  %v1605 = vld [vmem:[%s5 + $0x9a8] sm:$0xff]
  %v1606 = vld [vmem:[%s5 + $0x9b0] sm:$0xff]
  %v1607 = vld [vmem:[%s5 + $0x9b8] sm:$0xff]
  %v1608 = vld [vmem:[%s5 + $0x9c0] sm:$0xff]
  %v1609 = vld [vmem:[%s5 + $0x9c8] sm:$0xff]
  %v1610 = vld [vmem:[%s5 + $0x9d0] sm:$0xff]
  %v1611 = vld [vmem:[%s5 + $0x9d8] sm:$0xff]
  %v1612 = vld [vmem:[%s5 + $0x9e0] sm:$0xff]
  %v1613 = vld [vmem:[%s5 + $0x9e8] sm:$0xff]
  %v1614 = vld [vmem:[%s5 + $0x9f0] sm:$0xff]
  %v1615 = vld [vmem:[%s5 + $0x9f8] sm:$0xff]
  %v1616 = vld [vmem:[%s5 + $0xa00] sm:$0xff]
  %v1617 = vld [vmem:[%s5 + $0xa08] sm:$0xff]
  %v1618 = vld [vmem:[%s5 + $0xa10] sm:$0xff]
  %v1619 = vld [vmem:[%s5 + $0xa18] sm:$0xff]
  %v1620 = vld [vmem:[%s5 + $0xa20] sm:$0xff]
  %v1621 = vld [vmem:[%s5 + $0xa28] sm:$0xff]
  %v1622 = vld [vmem:[%s5 + $0xa30] sm:$0xff]
  %v1623 = vld [vmem:[%s5 + $0xa38] sm:$0xff]
  %v1624 = vld [vmem:[%s5 + $0xa40] sm:$0xff]
  %v1625 = vld [vmem:[%s5 + $0xa48] sm:$0xff]
  %v1626 = vld [vmem:[%s5 + $0xa50] sm:$0xff]
  %v1627 = vld [vmem:[%s5 + $0xa58] sm:$0xff]
  %v1628 = vld [vmem:[%s5 + $0xa60] sm:$0xff]
  %v1629 = vld [vmem:[%s5 + $0xa68] sm:$0xff]
  %v1630 = vld [vmem:[%s5 + $0xa70] sm:$0xff]
  %v1631 = vld [vmem:[%s5 + $0xa78] sm:$0xff]
  %v1632 = vld [vmem:[%s5 + $0xa80] sm:$0xff]
  %v1633 = vld [vmem:[%s5 + $0xa88] sm:$0xff]
  %v1634 = vld [vmem:[%s5 + $0xa90] sm:$0xff]
  %v1635 = vld [vmem:[%s5 + $0xa98] sm:$0xff]
  %v1636 = vld [vmem:[%s5 + $0xaa0] sm:$0xff]
  %v1637 = vld [vmem:[%s5 + $0xaa8] sm:$0xff]
  %v1638 = vld [vmem:[%s5 + $0xab0] sm:$0xff]
  %v1639 = vld [vmem:[%s5 + $0xab8] sm:$0xff]
  %v1640 = vld [vmem:[%s5 + $0xac0] sm:$0xff]
  %v1641 = vld [vmem:[%s5 + $0xac8] sm:$0xff]
  %v1642 = vld [vmem:[%s5 + $0xad0] sm:$0xff]
  %v1643 = vld [vmem:[%s5 + $0xad8] sm:$0xff]
  %v1644 = vld [vmem:[%s5 + $0xae0] sm:$0xff]
  %v1645 = vld [vmem:[%s5 + $0xae8] sm:$0xff]
  %v1646 = vld [vmem:[%s5 + $0xaf0] sm:$0xff]
  %v1647 = vld [vmem:[%s5 + $0xaf8] sm:$0xff]
  %v1648 = vld [vmem:[%s5 + $0xb00] sm:$0xff]
  %v1649 = vld [vmem:[%s5 + $0xb08] sm:$0xff]
  %v1650 = vld [vmem:[%s5 + $0xb10] sm:$0xff]
  %v1651 = vld [vmem:[%s5 + $0xb18] sm:$0xff]
  %v1652 = vld [vmem:[%s5 + $0xb20] sm:$0xff]
  %v1653 = vld [vmem:[%s5 + $0xb28] sm:$0xff]
  %v1654 = vld [vmem:[%s5 + $0xb30] sm:$0xff]
  %v1655 = vld [vmem:[%s5 + $0xb38] sm:$0xff]
  %v1656 = vld [vmem:[%s5 + $0xb40] sm:$0xff]
  %v1657 = vld [vmem:[%s5 + $0xb48] sm:$0xff]
  %v1658 = vld [vmem:[%s5 + $0xb50] sm:$0xff]
  %v1659 = vld [vmem:[%s5 + $0xb58] sm:$0xff]
  %v1660 = vld [vmem:[%s5 + $0xb60] sm:$0xff]
  %v1661 = vld [vmem:[%s5 + $0xb68] sm:$0xff]
  %v1662 = vld [vmem:[%s5 + $0xb70] sm:$0xff]
  %v1663 = vld [vmem:[%s5 + $0xb78] sm:$0xff]
  %v1664 = vld [vmem:[%s5 + $0xb80] sm:$0xff]
  %v1665 = vld [vmem:[%s5 + $0xb88] sm:$0xff]
  %v1666 = vld [vmem:[%s5 + $0xb90] sm:$0xff]
  %v1667 = vld [vmem:[%s5 + $0xb98] sm:$0xff]
  %v1668 = vld [vmem:[%s5 + $0xba0] sm:$0xff]
  %v1669 = vld [vmem:[%s5 + $0xba8] sm:$0xff]
  %v1670 = vld [vmem:[%s5 + $0xbb0] sm:$0xff]
  %v1671 = vld [vmem:[%s5 + $0xbb8] sm:$0xff]
  %v1672 = vld [vmem:[%s5 + $0xbc0] sm:$0xff]
  %v1673 = vld [vmem:[%s5 + $0xbc8] sm:$0xff]
  %v1674 = vld [vmem:[%s5 + $0xbd0] sm:$0xff]
  %v1675 = vld [vmem:[%s5 + $0xbd8] sm:$0xff]
  %v1676 = vld [vmem:[%s5 + $0xbe0] sm:$0xff]
  %v1677 = vld [vmem:[%s5 + $0xbe8] sm:$0xff]
  %v1678 = vld [vmem:[%s5 + $0xbf0] sm:$0xff]
  %v1679 = vld [vmem:[%s5 + $0xbf8] sm:$0xff]
  %v1680 = vld [vmem:[%s5 + $0xc00] sm:$0xff]
  %v1681 = vld [vmem:[%s5 + $0xc08] sm:$0xff]
  %v1682 = vld [vmem:[%s5 + $0xc10] sm:$0xff]
  %v1683 = vld [vmem:[%s5 + $0xc18] sm:$0xff]
  %v1684 = vld [vmem:[%s5 + $0xc20] sm:$0xff]
  %v1685 = vld [vmem:[%s5 + $0xc28] sm:$0xff]
  %v1686 = vld [vmem:[%s5 + $0xc30] sm:$0xff]
  %v1687 = vld [vmem:[%s5 + $0xc38] sm:$0xff]
  %v1688 = vld [vmem:[%s5 + $0xc40] sm:$0xff]
  %v1689 = vld [vmem:[%s5 + $0xc48] sm:$0xff]
  %v1690 = vld [vmem:[%s5 + $0xc50] sm:$0xff]
  %v1691 = vld [vmem:[%s5 + $0xc58] sm:$0xff]
  %v1692 = vld [vmem:[%s5 + $0xc60] sm:$0xff]
  %v1693 = vld [vmem:[%s5 + $0xc68] sm:$0xff]
  %v1694 = vld [vmem:[%s5 + $0xc70] sm:$0xff]
  %v1695 = vld [vmem:[%s5 + $0xc78] sm:$0xff]
  %v1696 = vld [vmem:[%s5 + $0xc80] sm:$0xff]
  %v1697 = vld [vmem:[%s5 + $0xc88] sm:$0xff]
  %v1698 = vld [vmem:[%s5 + $0xc90] sm:$0xff]
  %v1699 = vld [vmem:[%s5 + $0xc98] sm:$0xff]
  %v1700 = vld [vmem:[%s5 + $0xca0] sm:$0xff]
  %v1701 = vld [vmem:[%s5 + $0xca8] sm:$0xff]
  %v1702 = vld [vmem:[%s5 + $0xcb0] sm:$0xff]
  %v1703 = vld [vmem:[%s5 + $0xcb8] sm:$0xff]
  %v1704 = vld [vmem:[%s5 + $0xcc0] sm:$0xff]
  %v1705 = vld [vmem:[%s5 + $0xcc8] sm:$0xff]
  %v1706 = vld [vmem:[%s5 + $0xcd0] sm:$0xff]
  %v1707 = vld [vmem:[%s5 + $0xcd8] sm:$0xff]
  %v1708 = vld [vmem:[%s5 + $0xce0] sm:$0xff]
  %v1709 = vld [vmem:[%s5 + $0xce8] sm:$0xff]
  %v1710 = vld [vmem:[%s5 + $0xcf0] sm:$0xff]
  %v1711 = vld [vmem:[%s5 + $0xcf8] sm:$0xff]
  %v1712 = vld [vmem:[%s5 + $0xd00] sm:$0xff]
  %v1713 = vld [vmem:[%s5 + $0xd08] sm:$0xff]
  %v1714 = vld [vmem:[%s5 + $0xd10] sm:$0xff]
  %v1715 = vld [vmem:[%s5 + $0xd18] sm:$0xff]
  %v1716 = vld [vmem:[%s5 + $0xd20] sm:$0xff]
  %v1717 = vld [vmem:[%s5 + $0xd28] sm:$0xff]
  %v1718 = vld [vmem:[%s5 + $0xd30] sm:$0xff]
  %v1719 = vld [vmem:[%s5 + $0xd38] sm:$0xff]
  %v1720 = vld [vmem:[%s5 + $0xd40] sm:$0xff]
  %v1721 = vld [vmem:[%s5 + $0xd48] sm:$0xff]
  %v1722 = vld [vmem:[%s5 + $0xd50] sm:$0xff]
  %v1723 = vld [vmem:[%s5 + $0xd58] sm:$0xff]
  %v1724 = vld [vmem:[%s5 + $0xd60] sm:$0xff]
  %v1725 = vld [vmem:[%s5 + $0xd68] sm:$0xff]
  %v1726 = vld [vmem:[%s5 + $0xd70] sm:$0xff]
  %v1727 = vld [vmem:[%s5 + $0xd78] sm:$0xff]
  %v1728 = vld [vmem:[%s5 + $0xd80] sm:$0xff]
  %v1729 = vld [vmem:[%s5 + $0xd88] sm:$0xff]
  %v1730 = vld [vmem:[%s5 + $0xd90] sm:$0xff]
  %v1731 = vld [vmem:[%s5 + $0xd98] sm:$0xff]
  %v1732 = vld [vmem:[%s5 + $0xda0] sm:$0xff]
  %v1733 = vld [vmem:[%s5 + $0xda8] sm:$0xff]
  %v1734 = vld [vmem:[%s5 + $0xdb0] sm:$0xff]
  %v1735 = vld [vmem:[%s5 + $0xdb8] sm:$0xff]
  %v1736 = vld [vmem:[%s5 + $0xdc0] sm:$0xff]
  %v1737 = vld [vmem:[%s5 + $0xdc8] sm:$0xff]
  %v1738 = vld [vmem:[%s5 + $0xdd0] sm:$0xff]
  %v1739 = vld [vmem:[%s5 + $0xdd8] sm:$0xff]
  %v1740 = vld [vmem:[%s5 + $0xde0] sm:$0xff]
  %v1741 = vld [vmem:[%s5 + $0xde8] sm:$0xff]
  %v1742 = vld [vmem:[%s5 + $0xdf0] sm:$0xff]
  %v1743 = vld [vmem:[%s5 + $0xdf8] sm:$0xff]
  %v1744 = vld [vmem:[%s5 + $0xe00] sm:$0xff]
  %v1745 = vld [vmem:[%s5 + $0xe08] sm:$0xff]
  %v1746 = vld [vmem:[%s5 + $0xe10] sm:$0xff]
  %v1747 = vld [vmem:[%s5 + $0xe18] sm:$0xff]
  %v1748 = vld [vmem:[%s5 + $0xe20] sm:$0xff]
  %v1749 = vld [vmem:[%s5 + $0xe28] sm:$0xff]
  %v1750 = vld [vmem:[%s5 + $0xe30] sm:$0xff]
  %v1751 = vld [vmem:[%s5 + $0xe38] sm:$0xff]
  %v1752 = vld [vmem:[%s5 + $0xe40] sm:$0xff]
  %v1753 = vld [vmem:[%s5 + $0xe48] sm:$0xff]
  %v1754 = vld [vmem:[%s5 + $0xe50] sm:$0xff]
  %v1755 = vld [vmem:[%s5 + $0xe58] sm:$0xff]
  %v1756 = vld [vmem:[%s5 + $0xe60] sm:$0xff]
  %v1757 = vld [vmem:[%s5 + $0xe68] sm:$0xff]
  %v1758 = vld [vmem:[%s5 + $0xe70] sm:$0xff]
  %v1759 = vld [vmem:[%s5 + $0xe78] sm:$0xff]
  %v1760 = vld [vmem:[%s5 + $0xe80] sm:$0xff]
  %v1761 = vld [vmem:[%s5 + $0xe88] sm:$0xff]
  %v1762 = vld [vmem:[%s5 + $0xe90] sm:$0xff]
  %v1763 = vld [vmem:[%s5 + $0xe98] sm:$0xff]
  %v1764 = vld [vmem:[%s5 + $0xea0] sm:$0xff]
  %v1765 = vld [vmem:[%s5 + $0xea8] sm:$0xff]
  %v1766 = vld [vmem:[%s5 + $0xeb0] sm:$0xff]
  %v1767 = vld [vmem:[%s5 + $0xeb8] sm:$0xff]
  %v1768 = vld [vmem:[%s5 + $0xec0] sm:$0xff]
  %v1769 = vld [vmem:[%s5 + $0xec8] sm:$0xff]
  %v1770 = vld [vmem:[%s5 + $0xed0] sm:$0xff]
  %v1771 = vld [vmem:[%s5 + $0xed8] sm:$0xff]
  %v1772 = vld [vmem:[%s5 + $0xee0] sm:$0xff]
  %v1773 = vld [vmem:[%s5 + $0xee8] sm:$0xff]
  %v1774 = vld [vmem:[%s5 + $0xef0] sm:$0xff]
  %v1775 = vld [vmem:[%s5 + $0xef8] sm:$0xff]
  %v1776 = vld [vmem:[%s5 + $0xf00] sm:$0xff]
  %v1777 = vld [vmem:[%s5 + $0xf08] sm:$0xff]
  %v1778 = vld [vmem:[%s5 + $0xf10] sm:$0xff]
  %v1779 = vld [vmem:[%s5 + $0xf18] sm:$0xff]
  %v1780 = vld [vmem:[%s5 + $0xf20] sm:$0xff]
  %v1781 = vld [vmem:[%s5 + $0xf28] sm:$0xff]
  %v1782 = vld [vmem:[%s5 + $0xf30] sm:$0xff]
  %v1783 = vld [vmem:[%s5 + $0xf38] sm:$0xff]
  %v1784 = vld [vmem:[%s5 + $0xf40] sm:$0xff]
  %v1785 = vld [vmem:[%s5 + $0xf48] sm:$0xff]
  %v1786 = vld [vmem:[%s5 + $0xf50] sm:$0xff]
  %v1787 = vld [vmem:[%s5 + $0xf58] sm:$0xff]
  %v1788 = vld [vmem:[%s5 + $0xf60] sm:$0xff]
  %v1789 = vld [vmem:[%s5 + $0xf68] sm:$0xff]
  %v1790 = vld [vmem:[%s5 + $0xf70] sm:$0xff]
  %v1791 = vld [vmem:[%s5 + $0xf78] sm:$0xff]
  %v1792 = vld [vmem:[%s5 + $0xf80] sm:$0xff]
  %v1793 = vld [vmem:[%s5 + $0xf88] sm:$0xff]
  %v1794 = vld [vmem:[%s5 + $0xf90] sm:$0xff]
  %v1795 = vld [vmem:[%s5 + $0xf98] sm:$0xff]
  %v1796 = vld [vmem:[%s5 + $0xfa0] sm:$0xff]
  %v1797 = vld [vmem:[%s5 + $0xfa8] sm:$0xff]
  %v1798 = vld [vmem:[%s5 + $0xfb0] sm:$0xff]
  %v1799 = vld [vmem:[%s5 + $0xfb8] sm:$0xff]
  %v1800 = vld [vmem:[%s5 + $0xfc0] sm:$0xff]
  %v1801 = vld [vmem:[%s5 + $0xfc8] sm:$0xff]
  %v1802 = vld [vmem:[%s5 + $0xfd0] sm:$0xff]
  %v1803 = vld [vmem:[%s5 + $0xfd8] sm:$0xff]
  %v1804 = vld [vmem:[%s5 + $0xfe0] sm:$0xff]
  %v1805 = vld [vmem:[%s5 + $0xfe8] sm:$0xff]
  %v1806 = vld [vmem:[%s5 + $0xff0] sm:$0xff]
  %v1807 = vld [vmem:[%s5 + $0xff8] sm:$0xff]
  %v1808 = vld [vmem:[%s6] sm:$0x1]
  %v1810 = vlaneseq
  %v1811 = vshrl.u32 %v1810, 7
  %v1812 = vsub.s32 0, %v1811
  %v1813 = vrot.slane %v1808, %v1812
  %v1823 = vcombine.high %v1288, %v1288
  %v1825 = vunpack.c.l.s4 1983009808
  %v1826 = vunpack.c.0.s8 %v1825
  %v1827 = vlaneseq
  %v1828 = vshrl.u32 %v1827, 7
  %v1829 = vsub.s32 %v1826, %v1828
  %v1830 = vrot.slane %v1288, %v1829
  %v1832 = vunpack.c.l.s4 1983009808
  %v1833 = vunpack.c.0.s8 %v1832
  %v1834 = vlaneseq
  %v1835 = vshrl.u32 %v1834, 7
  %v1836 = vsub.s32 %v1833, %v1835
  %v1837 = vrot.slane %v1823, %v1836
  %v1838 = vcombine.high %v1830, %v1830
  %v1839 = vcombine.high %v1837, %v1837
  %v1840 = vcombine.high %v1289, %v1289
  %v1842 = vunpack.c.l.s4 1983009808
  %v1843 = vunpack.c.0.s8 %v1842
  %v1844 = vlaneseq
  %v1845 = vshrl.u32 %v1844, 7
  %v1846 = vsub.s32 %v1843, %v1845
  %v1847 = vrot.slane %v1289, %v1846
  %v1849 = vunpack.c.l.s4 1983009808
  %v1850 = vunpack.c.0.s8 %v1849
  %v1851 = vlaneseq
  %v1852 = vshrl.u32 %v1851, 7
  %v1853 = vsub.s32 %v1850, %v1852
  %v1854 = vrot.slane %v1840, %v1853
  %v1855 = vcombine.high %v1847, %v1847
  %v1856 = vcombine.high %v1854, %v1854
  %v1857 = vcombine.high %v1290, %v1290
  %v1859 = vunpack.c.l.s4 1983009808
  %v1860 = vunpack.c.0.s8 %v1859
  %v1861 = vlaneseq
  %v1862 = vshrl.u32 %v1861, 7
  %v1863 = vsub.s32 %v1860, %v1862
  %v1864 = vrot.slane %v1290, %v1863
  %v1866 = vunpack.c.l.s4 1983009808
  %v1867 = vunpack.c.0.s8 %v1866
  %v1868 = vlaneseq
  %v1869 = vshrl.u32 %v1868, 7
  %v1870 = vsub.s32 %v1867, %v1869
  %v1871 = vrot.slane %v1857, %v1870
  %v1872 = vcombine.high %v1864, %v1864
  %v1873 = vcombine.high %v1871, %v1871
  %v1874 = vcombine.high %v1291, %v1291
  %v1876 = vunpack.c.l.s4 1983009808
  %v1877 = vunpack.c.0.s8 %v1876
  %v1878 = vlaneseq
  %v1879 = vshrl.u32 %v1878, 7
  %v1880 = vsub.s32 %v1877, %v1879
  %v1881 = vrot.slane %v1291, %v1880
  %v1883 = vunpack.c.l.s4 1983009808
  %v1884 = vunpack.c.0.s8 %v1883
  %v1885 = vlaneseq
  %v1886 = vshrl.u32 %v1885, 7
  %v1887 = vsub.s32 %v1884, %v1886
  %v1888 = vrot.slane %v1874, %v1887
  %v1889 = vcombine.high %v1881, %v1881
  %v1890 = vcombine.high %v1888, %v1888
  %v1891 = vcombine.high %v1292, %v1292
  %v1893 = vunpack.c.l.s4 1983009808
  %v1894 = vunpack.c.0.s8 %v1893
  %v1895 = vlaneseq
  %v1896 = vshrl.u32 %v1895, 7
  %v1897 = vsub.s32 %v1894, %v1896
  %v1898 = vrot.slane %v1292, %v1897
  %v1900 = vunpack.c.l.s4 1983009808
  %v1901 = vunpack.c.0.s8 %v1900
  %v1902 = vlaneseq
  %v1903 = vshrl.u32 %v1902, 7
  %v1904 = vsub.s32 %v1901, %v1903
  %v1905 = vrot.slane %v1891, %v1904
  %v1906 = vcombine.high %v1898, %v1898
  %v1907 = vcombine.high %v1905, %v1905
  %v1908 = vcombine.high %v1293, %v1293
  %v1910 = vunpack.c.l.s4 1983009808
  %v1911 = vunpack.c.0.s8 %v1910
  %v1912 = vlaneseq
  %v1913 = vshrl.u32 %v1912, 7
  %v1914 = vsub.s32 %v1911, %v1913
  %v1915 = vrot.slane %v1293, %v1914
  %v1917 = vunpack.c.l.s4 1983009808
  %v1918 = vunpack.c.0.s8 %v1917
  %v1919 = vlaneseq
  %v1920 = vshrl.u32 %v1919, 7
  %v1921 = vsub.s32 %v1918, %v1920
  %v1922 = vrot.slane %v1908, %v1921
  %v1923 = vcombine.high %v1915, %v1915
  %v1924 = vcombine.high %v1922, %v1922
  %v1925 = vcombine.high %v1294, %v1294
  %v1927 = vunpack.c.l.s4 1983009808
  %v1928 = vunpack.c.0.s8 %v1927
  %v1929 = vlaneseq
  %v1930 = vshrl.u32 %v1929, 7
  %v1931 = vsub.s32 %v1928, %v1930
  %v1932 = vrot.slane %v1294, %v1931
  %v1934 = vunpack.c.l.s4 1983009808
  %v1935 = vunpack.c.0.s8 %v1934
  %v1936 = vlaneseq
  %v1937 = vshrl.u32 %v1936, 7
  %v1938 = vsub.s32 %v1935, %v1937
  %v1939 = vrot.slane %v1925, %v1938
  %v1940 = vcombine.high %v1932, %v1932
  %v1941 = vcombine.high %v1939, %v1939
  %v1942 = vcombine.high %v1295, %v1295
  %v1944 = vunpack.c.l.s4 1983009808
  %v1945 = vunpack.c.0.s8 %v1944
  %v1946 = vlaneseq
  %v1947 = vshrl.u32 %v1946, 7
  %v1948 = vsub.s32 %v1945, %v1947
  %v1949 = vrot.slane %v1295, %v1948
  %v1951 = vunpack.c.l.s4 1983009808
  %v1952 = vunpack.c.0.s8 %v1951
  %v1953 = vlaneseq
  %v1954 = vshrl.u32 %v1953, 7
  %v1955 = vsub.s32 %v1952, %v1954
  %v1956 = vrot.slane %v1942, %v1955
  %v1957 = vcombine.high %v1949, %v1949
  %v1958 = vcombine.high %v1956, %v1956
  %1991 = vmatprep.subr.mxu0 0.0
  %1992 = vmatpush1.msra.mxu0 %v1311
  %1993 = vmatprep.subr.mxu0 0.0
  %1994 = vmatpush1.msra.mxu0 %v1310
  %1995 = vmatprep.subr.mxu0 0.0
  %1996 = vmatpush1.msra.mxu0 %v1309
  %1997 = vmatprep.subr.mxu0 0.0
  %1998 = vmatpush1.msra.mxu0 %v1308
  %1999 = vmatprep.subr.mxu0 0.0
  %2000 = vmatpush1.msra.mxu0 %v1307
  %2001 = vmatprep.subr.mxu0 0.0
  %2002 = vmatpush1.msra.mxu0 %v1306
  %2003 = vmatprep.subr.mxu0 0.0
  %2004 = vmatpush1.msra.mxu0 %v1305
  %2005 = vmatprep.subr.mxu0 0.0
  %2006 = vmatpush1.msra.mxu0 %v1304
  %2007 = vmatprep.subr.mxu0 0.0
  %2008 = vmatpush1.msra.mxu0 %v1303
  %2009 = vmatprep.subr.mxu0 0.0
  %2010 = vmatpush1.msra.mxu0 %v1302
  %2011 = vmatprep.subr.mxu0 0.0
  %2012 = vmatpush1.msra.mxu0 %v1301
  %2013 = vmatprep.subr.mxu0 0.0
  %2014 = vmatpush1.msra.mxu0 %v1300
  %2015 = vmatprep.subr.mxu0 0.0
  %2016 = vmatpush1.msra.mxu0 %v1299
  %2017 = vmatprep.subr.mxu0 0.0
  %2018 = vmatpush1.msra.mxu0 %v1298
  %2019 = vmatprep.subr.mxu0 0.0
  %2020 = vmatpush1.msra.mxu0 %v1297
  %2021 = vmatprep.subr.mxu0 0.0
  %2022 = vmatpush1.msra.mxu0 %v1296
  %2023 = vmatprep.subr.mxu0 0.0
  %2024 = vmatpush2.msra.mxu0 %v1327
  %2025 = vmatprep.subr.mxu0 0.0
  %2026 = vmatpush2.msra.mxu0 %v1326
  %2027 = vmatprep.subr.mxu0 0.0
  %2028 = vmatpush2.msra.mxu0 %v1325
  %2029 = vmatprep.subr.mxu0 0.0
  %2030 = vmatpush2.msra.mxu0 %v1324
  %2031 = vmatprep.subr.mxu0 0.0
  %2032 = vmatpush2.msra.mxu0 %v1323
  %2033 = vmatprep.subr.mxu0 0.0
  %2034 = vmatpush2.msra.mxu0 %v1322
  %2035 = vmatprep.subr.mxu0 0.0
  %2036 = vmatpush2.msra.mxu0 %v1321
  %2037 = vmatprep.subr.mxu0 0.0
  %2038 = vmatpush2.msra.mxu0 %v1320
  %2039 = vmatprep.subr.mxu0 0.0
  %2040 = vmatpush2.msra.mxu0 %v1319
  %2041 = vmatprep.subr.mxu0 0.0
  %2042 = vmatpush2.msra.mxu0 %v1318
  %2043 = vmatprep.subr.mxu0 0.0
  %2044 = vmatpush2.msra.mxu0 %v1317
  %2045 = vmatprep.subr.mxu0 0.0
  %2046 = vmatpush2.msra.mxu0 %v1316
  %2047 = vmatprep.subr.mxu0 0.0
  %2048 = vmatpush2.msra.mxu0 %v1315
  %2049 = vmatprep.subr.mxu0 0.0
  %2050 = vmatpush2.msra.mxu0 %v1314
  %2051 = vmatprep.subr.mxu0 0.0
  %2052 = vmatpush2.msra.mxu0 %v1313
  %2053 = vmatprep.subr.mxu0 0.0
  %2054 = vmatpush2.msra.mxu0 %v1312
  %2055 = vmatprep.mubr.f32.mxu0 %v1838
  %2056 = vmatmul.mubr.f32.gmra.mxu0 %v1830
  %v2057 = vpop.f32.mrf.mxu0
  %v2058 = vadd.f32 %v1813, %v2057
  %v2059 = vpop.f32.mrf.mxu0
  %2060 = vdwg.mxu0
  %2061 = vmatprep.subr.mxu0 0.0
  %2062 = vmatpush1.msra.mxu0 %v1343
  %2063 = vmatprep.subr.mxu0 0.0
  %2064 = vmatpush1.msra.mxu0 %v1342
  %2065 = vmatprep.subr.mxu0 0.0
  %2066 = vmatpush1.msra.mxu0 %v1341
  %2067 = vmatprep.subr.mxu0 0.0
  %2068 = vmatpush1.msra.mxu0 %v1340
  %2069 = vmatprep.subr.mxu0 0.0
  %2070 = vmatpush1.msra.mxu0 %v1339
  %2071 = vmatprep.subr.mxu0 0.0
  %2072 = vmatpush1.msra.mxu0 %v1338
  %2073 = vmatprep.subr.mxu0 0.0
  %2074 = vmatpush1.msra.mxu0 %v1337
  %2075 = vmatprep.subr.mxu0 0.0
  %2076 = vmatpush1.msra.mxu0 %v1336
  %2077 = vmatprep.subr.mxu0 0.0
  %2078 = vmatpush1.msra.mxu0 %v1335
  %2079 = vmatprep.subr.mxu0 0.0
  %2080 = vmatpush1.msra.mxu0 %v1334
  %2081 = vmatprep.subr.mxu0 0.0
  %2082 = vmatpush1.msra.mxu0 %v1333
  %2083 = vmatprep.subr.mxu0 0.0
  %2084 = vmatpush1.msra.mxu0 %v1332
  %2085 = vmatprep.subr.mxu0 0.0
  %2086 = vmatpush1.msra.mxu0 %v1331
  %2087 = vmatprep.subr.mxu0 0.0
  %2088 = vmatpush1.msra.mxu0 %v1330
  %2089 = vmatprep.subr.mxu0 0.0
  %2090 = vmatpush1.msra.mxu0 %v1329
  %2091 = vmatprep.subr.mxu0 0.0
  %2092 = vmatpush1.msra.mxu0 %v1328
  %2093 = vmatprep.subr.mxu0 0.0
  %2094 = vmatpush2.msra.mxu0 %v1359
  %2095 = vmatprep.subr.mxu0 0.0
  %2096 = vmatpush2.msra.mxu0 %v1358
  %2097 = vmatprep.subr.mxu0 0.0
  %2098 = vmatpush2.msra.mxu0 %v1357
  %2099 = vmatprep.subr.mxu0 0.0
  %2100 = vmatpush2.msra.mxu0 %v1356
  %2101 = vmatprep.subr.mxu0 0.0
  %2102 = vmatpush2.msra.mxu0 %v1355
  %2103 = vmatprep.subr.mxu0 0.0
  %2104 = vmatpush2.msra.mxu0 %v1354
  %2105 = vmatprep.subr.mxu0 0.0
  %2106 = vmatpush2.msra.mxu0 %v1353
  %2107 = vmatprep.subr.mxu0 0.0
  %2108 = vmatpush2.msra.mxu0 %v1352
  %2109 = vmatprep.subr.mxu0 0.0
  %2110 = vmatpush2.msra.mxu0 %v1351
  %2111 = vmatprep.subr.mxu0 0.0
  %2112 = vmatpush2.msra.mxu0 %v1350
  %2113 = vmatprep.subr.mxu0 0.0
  %2114 = vmatpush2.msra.mxu0 %v1349
  %2115 = vmatprep.subr.mxu0 0.0
  %2116 = vmatpush2.msra.mxu0 %v1348
  %2117 = vmatprep.subr.mxu0 0.0
  %2118 = vmatpush2.msra.mxu0 %v1347
  %2119 = vmatprep.subr.mxu0 0.0
  %2120 = vmatpush2.msra.mxu0 %v1346
  %2121 = vmatprep.subr.mxu0 0.0
  %2122 = vmatpush2.msra.mxu0 %v1345
  %2123 = vmatprep.subr.mxu0 0.0
  %2124 = vmatpush2.msra.mxu0 %v1344
  %2125 = vmatprep.mubr.f32.mxu0 %v1839
  %2126 = vmatmul.mubr.f32.gmra.mxu0 %v1837
  %v2127 = vpop.f32.mrf.mxu0
  %v2128 = vadd.f32 %v2058, %v2127
  %v2129 = vpop.f32.mrf.mxu0
  %2130 = vdwg.mxu0
  %2131 = vmatprep.subr.mxu0 0.0
  %2132 = vmatpush1.msra.mxu0 %v1375
  %2133 = vmatprep.subr.mxu0 0.0
  %2134 = vmatpush1.msra.mxu0 %v1374
  %2135 = vmatprep.subr.mxu0 0.0
  %2136 = vmatpush1.msra.mxu0 %v1373
  %2137 = vmatprep.subr.mxu0 0.0
  %2138 = vmatpush1.msra.mxu0 %v1372
  %2139 = vmatprep.subr.mxu0 0.0
  %2140 = vmatpush1.msra.mxu0 %v1371
  %2141 = vmatprep.subr.mxu0 0.0
  %2142 = vmatpush1.msra.mxu0 %v1370
  %2143 = vmatprep.subr.mxu0 0.0
  %2144 = vmatpush1.msra.mxu0 %v1369
  %2145 = vmatprep.subr.mxu0 0.0
  %2146 = vmatpush1.msra.mxu0 %v1368
  %2147 = vmatprep.subr.mxu0 0.0
  %2148 = vmatpush1.msra.mxu0 %v1367
  %2149 = vmatprep.subr.mxu0 0.0
  %2150 = vmatpush1.msra.mxu0 %v1366
  %2151 = vmatprep.subr.mxu0 0.0
  %2152 = vmatpush1.msra.mxu0 %v1365
  %2153 = vmatprep.subr.mxu0 0.0
  %2154 = vmatpush1.msra.mxu0 %v1364
  %2155 = vmatprep.subr.mxu0 0.0
  %2156 = vmatpush1.msra.mxu0 %v1363
  %2157 = vmatprep.subr.mxu0 0.0
  %2158 = vmatpush1.msra.mxu0 %v1362
  %2159 = vmatprep.subr.mxu0 0.0
  %2160 = vmatpush1.msra.mxu0 %v1361
  %2161 = vmatprep.subr.mxu0 0.0
  %2162 = vmatpush1.msra.mxu0 %v1360
  %2163 = vmatprep.subr.mxu0 0.0
  %2164 = vmatpush2.msra.mxu0 %v1391
  %2165 = vmatprep.subr.mxu0 0.0
  %2166 = vmatpush2.msra.mxu0 %v1390
  %2167 = vmatprep.subr.mxu0 0.0
  %2168 = vmatpush2.msra.mxu0 %v1389
  %2169 = vmatprep.subr.mxu0 0.0
  %2170 = vmatpush2.msra.mxu0 %v1388
  %2171 = vmatprep.subr.mxu0 0.0
  %2172 = vmatpush2.msra.mxu0 %v1387
  %2173 = vmatprep.subr.mxu0 0.0
  %2174 = vmatpush2.msra.mxu0 %v1386
  %2175 = vmatprep.subr.mxu0 0.0
  %2176 = vmatpush2.msra.mxu0 %v1385
  %2177 = vmatprep.subr.mxu0 0.0
  %2178 = vmatpush2.msra.mxu0 %v1384
  %2179 = vmatprep.subr.mxu0 0.0
  %2180 = vmatpush2.msra.mxu0 %v1383
  %2181 = vmatprep.subr.mxu0 0.0
  %2182 = vmatpush2.msra.mxu0 %v1382
  %2183 = vmatprep.subr.mxu0 0.0
  %2184 = vmatpush2.msra.mxu0 %v1381
  %2185 = vmatprep.subr.mxu0 0.0
  %2186 = vmatpush2.msra.mxu0 %v1380
  %2187 = vmatprep.subr.mxu0 0.0
  %2188 = vmatpush2.msra.mxu0 %v1379
  %2189 = vmatprep.subr.mxu0 0.0
  %2190 = vmatpush2.msra.mxu0 %v1378
  %2191 = vmatprep.subr.mxu0 0.0
  %2192 = vmatpush2.msra.mxu0 %v1377
  %2193 = vmatprep.subr.mxu0 0.0
  %2194 = vmatpush2.msra.mxu0 %v1376
  %2195 = vmatprep.mubr.f32.mxu0 %v1855
  %2196 = vmatmul.mubr.f32.gmra.mxu0 %v1847
  %v2197 = vpop.f32.mrf.mxu0
  %v2198 = vadd.f32 %v2128, %v2197
  %v2199 = vpop.f32.mrf.mxu0
  %2200 = vdwg.mxu0
  %2201 = vmatprep.subr.mxu0 0.0
  %2202 = vmatpush1.msra.mxu0 %v1407
  %2203 = vmatprep.subr.mxu0 0.0
  %2204 = vmatpush1.msra.mxu0 %v1406
  %2205 = vmatprep.subr.mxu0 0.0
  %2206 = vmatpush1.msra.mxu0 %v1405
  %2207 = vmatprep.subr.mxu0 0.0
  %2208 = vmatpush1.msra.mxu0 %v1404
  %2209 = vmatprep.subr.mxu0 0.0
  %2210 = vmatpush1.msra.mxu0 %v1403
  %2211 = vmatprep.subr.mxu0 0.0
  %2212 = vmatpush1.msra.mxu0 %v1402
  %2213 = vmatprep.subr.mxu0 0.0
  %2214 = vmatpush1.msra.mxu0 %v1401
  %2215 = vmatprep.subr.mxu0 0.0
  %2216 = vmatpush1.msra.mxu0 %v1400
  %2217 = vmatprep.subr.mxu0 0.0
  %2218 = vmatpush1.msra.mxu0 %v1399
  %2219 = vmatprep.subr.mxu0 0.0
  %2220 = vmatpush1.msra.mxu0 %v1398
  %2221 = vmatprep.subr.mxu0 0.0
  %2222 = vmatpush1.msra.mxu0 %v1397
  %2223 = vmatprep.subr.mxu0 0.0
  %2224 = vmatpush1.msra.mxu0 %v1396
  %2225 = vmatprep.subr.mxu0 0.0
  %2226 = vmatpush1.msra.mxu0 %v1395
  %2227 = vmatprep.subr.mxu0 0.0
  %2228 = vmatpush1.msra.mxu0 %v1394
  %2229 = vmatprep.subr.mxu0 0.0
  %2230 = vmatpush1.msra.mxu0 %v1393
  %2231 = vmatprep.subr.mxu0 0.0
  %2232 = vmatpush1.msra.mxu0 %v1392
  %2233 = vmatprep.subr.mxu0 0.0
  %2234 = vmatpush2.msra.mxu0 %v1423
  %2235 = vmatprep.subr.mxu0 0.0
  %2236 = vmatpush2.msra.mxu0 %v1422
  %2237 = vmatprep.subr.mxu0 0.0
  %2238 = vmatpush2.msra.mxu0 %v1421
  %2239 = vmatprep.subr.mxu0 0.0
  %2240 = vmatpush2.msra.mxu0 %v1420
  %2241 = vmatprep.subr.mxu0 0.0
  %2242 = vmatpush2.msra.mxu0 %v1419
  %2243 = vmatprep.subr.mxu0 0.0
  %2244 = vmatpush2.msra.mxu0 %v1418
  %2245 = vmatprep.subr.mxu0 0.0
  %2246 = vmatpush2.msra.mxu0 %v1417
  %2247 = vmatprep.subr.mxu0 0.0
  %2248 = vmatpush2.msra.mxu0 %v1416
  %2249 = vmatprep.subr.mxu0 0.0
  %2250 = vmatpush2.msra.mxu0 %v1415
  %2251 = vmatprep.subr.mxu0 0.0
  %2252 = vmatpush2.msra.mxu0 %v1414
  %2253 = vmatprep.subr.mxu0 0.0
  %2254 = vmatpush2.msra.mxu0 %v1413
  %2255 = vmatprep.subr.mxu0 0.0
  %2256 = vmatpush2.msra.mxu0 %v1412
  %2257 = vmatprep.subr.mxu0 0.0
  %2258 = vmatpush2.msra.mxu0 %v1411
  %2259 = vmatprep.subr.mxu0 0.0
  %2260 = vmatpush2.msra.mxu0 %v1410
  %2261 = vmatprep.subr.mxu0 0.0
  %2262 = vmatpush2.msra.mxu0 %v1409
  %2263 = vmatprep.subr.mxu0 0.0
  %2264 = vmatpush2.msra.mxu0 %v1408
  %2265 = vmatprep.mubr.f32.mxu0 %v1856
  %2266 = vmatmul.mubr.f32.gmra.mxu0 %v1854
  %v2267 = vpop.f32.mrf.mxu0
  %v2268 = vadd.f32 %v2198, %v2267
  %v2269 = vpop.f32.mrf.mxu0
  %2270 = vdwg.mxu0
  %2271 = vmatprep.subr.mxu0 0.0
  %2272 = vmatpush1.msra.mxu0 %v1439
  %2273 = vmatprep.subr.mxu0 0.0
  %2274 = vmatpush1.msra.mxu0 %v1438
  %2275 = vmatprep.subr.mxu0 0.0
  %2276 = vmatpush1.msra.mxu0 %v1437
  %2277 = vmatprep.subr.mxu0 0.0
  %2278 = vmatpush1.msra.mxu0 %v1436
  %2279 = vmatprep.subr.mxu0 0.0
  %2280 = vmatpush1.msra.mxu0 %v1435
  %2281 = vmatprep.subr.mxu0 0.0
  %2282 = vmatpush1.msra.mxu0 %v1434
  %2283 = vmatprep.subr.mxu0 0.0
  %2284 = vmatpush1.msra.mxu0 %v1433
  %2285 = vmatprep.subr.mxu0 0.0
  %2286 = vmatpush1.msra.mxu0 %v1432
  %2287 = vmatprep.subr.mxu0 0.0
  %2288 = vmatpush1.msra.mxu0 %v1431
  %2289 = vmatprep.subr.mxu0 0.0
  %2290 = vmatpush1.msra.mxu0 %v1430
  %2291 = vmatprep.subr.mxu0 0.0
  %2292 = vmatpush1.msra.mxu0 %v1429
  %2293 = vmatprep.subr.mxu0 0.0
  %2294 = vmatpush1.msra.mxu0 %v1428
  %2295 = vmatprep.subr.mxu0 0.0
  %2296 = vmatpush1.msra.mxu0 %v1427
  %2297 = vmatprep.subr.mxu0 0.0
  %2298 = vmatpush1.msra.mxu0 %v1426
  %2299 = vmatprep.subr.mxu0 0.0
  %2300 = vmatpush1.msra.mxu0 %v1425
  %2301 = vmatprep.subr.mxu0 0.0
  %2302 = vmatpush1.msra.mxu0 %v1424
  %2303 = vmatprep.subr.mxu0 0.0
  %2304 = vmatpush2.msra.mxu0 %v1455
  %2305 = vmatprep.subr.mxu0 0.0
  %2306 = vmatpush2.msra.mxu0 %v1454
  %2307 = vmatprep.subr.mxu0 0.0
  %2308 = vmatpush2.msra.mxu0 %v1453
  %2309 = vmatprep.subr.mxu0 0.0
  %2310 = vmatpush2.msra.mxu0 %v1452
  %2311 = vmatprep.subr.mxu0 0.0
  %2312 = vmatpush2.msra.mxu0 %v1451
  %2313 = vmatprep.subr.mxu0 0.0
  %2314 = vmatpush2.msra.mxu0 %v1450
  %2315 = vmatprep.subr.mxu0 0.0
  %2316 = vmatpush2.msra.mxu0 %v1449
  %2317 = vmatprep.subr.mxu0 0.0
  %2318 = vmatpush2.msra.mxu0 %v1448
  %2319 = vmatprep.subr.mxu0 0.0
  %2320 = vmatpush2.msra.mxu0 %v1447
  %2321 = vmatprep.subr.mxu0 0.0
  %2322 = vmatpush2.msra.mxu0 %v1446
  %2323 = vmatprep.subr.mxu0 0.0
  %2324 = vmatpush2.msra.mxu0 %v1445
  %2325 = vmatprep.subr.mxu0 0.0
  %2326 = vmatpush2.msra.mxu0 %v1444
  %2327 = vmatprep.subr.mxu0 0.0
  %2328 = vmatpush2.msra.mxu0 %v1443
  %2329 = vmatprep.subr.mxu0 0.0
  %2330 = vmatpush2.msra.mxu0 %v1442
  %2331 = vmatprep.subr.mxu0 0.0
  %2332 = vmatpush2.msra.mxu0 %v1441
  %2333 = vmatprep.subr.mxu0 0.0
  %2334 = vmatpush2.msra.mxu0 %v1440
  %2335 = vmatprep.mubr.f32.mxu0 %v1872
  %2336 = vmatmul.mubr.f32.gmra.mxu0 %v1864
  %v2337 = vpop.f32.mrf.mxu0
  %v2338 = vadd.f32 %v2268, %v2337
  %v2339 = vpop.f32.mrf.mxu0
  %2340 = vdwg.mxu0
  %2341 = vmatprep.subr.mxu0 0.0
  %2342 = vmatpush1.msra.mxu0 %v1471
  %2343 = vmatprep.subr.mxu0 0.0
  %2344 = vmatpush1.msra.mxu0 %v1470
  %2345 = vmatprep.subr.mxu0 0.0
  %2346 = vmatpush1.msra.mxu0 %v1469
  %2347 = vmatprep.subr.mxu0 0.0
  %2348 = vmatpush1.msra.mxu0 %v1468
  %2349 = vmatprep.subr.mxu0 0.0
  %2350 = vmatpush1.msra.mxu0 %v1467
  %2351 = vmatprep.subr.mxu0 0.0
  %2352 = vmatpush1.msra.mxu0 %v1466
  %2353 = vmatprep.subr.mxu0 0.0
  %2354 = vmatpush1.msra.mxu0 %v1465
  %2355 = vmatprep.subr.mxu0 0.0
  %2356 = vmatpush1.msra.mxu0 %v1464
  %2357 = vmatprep.subr.mxu0 0.0
  %2358 = vmatpush1.msra.mxu0 %v1463
  %2359 = vmatprep.subr.mxu0 0.0
  %2360 = vmatpush1.msra.mxu0 %v1462
  %2361 = vmatprep.subr.mxu0 0.0
  %2362 = vmatpush1.msra.mxu0 %v1461
  %2363 = vmatprep.subr.mxu0 0.0
  %2364 = vmatpush1.msra.mxu0 %v1460
  %2365 = vmatprep.subr.mxu0 0.0
  %2366 = vmatpush1.msra.mxu0 %v1459
  %2367 = vmatprep.subr.mxu0 0.0
  %2368 = vmatpush1.msra.mxu0 %v1458
  %2369 = vmatprep.subr.mxu0 0.0
  %2370 = vmatpush1.msra.mxu0 %v1457
  %2371 = vmatprep.subr.mxu0 0.0
  %2372 = vmatpush1.msra.mxu0 %v1456
  %2373 = vmatprep.subr.mxu0 0.0
  %2374 = vmatpush2.msra.mxu0 %v1487
  %2375 = vmatprep.subr.mxu0 0.0
  %2376 = vmatpush2.msra.mxu0 %v1486
  %2377 = vmatprep.subr.mxu0 0.0
  %2378 = vmatpush2.msra.mxu0 %v1485
  %2379 = vmatprep.subr.mxu0 0.0
  %2380 = vmatpush2.msra.mxu0 %v1484
  %2381 = vmatprep.subr.mxu0 0.0
  %2382 = vmatpush2.msra.mxu0 %v1483
  %2383 = vmatprep.subr.mxu0 0.0
  %2384 = vmatpush2.msra.mxu0 %v1482
  %2385 = vmatprep.subr.mxu0 0.0
  %2386 = vmatpush2.msra.mxu0 %v1481
  %2387 = vmatprep.subr.mxu0 0.0
  %2388 = vmatpush2.msra.mxu0 %v1480
  %2389 = vmatprep.subr.mxu0 0.0
  %2390 = vmatpush2.msra.mxu0 %v1479
  %2391 = vmatprep.subr.mxu0 0.0
  %2392 = vmatpush2.msra.mxu0 %v1478
  %2393 = vmatprep.subr.mxu0 0.0
  %2394 = vmatpush2.msra.mxu0 %v1477
  %2395 = vmatprep.subr.mxu0 0.0
  %2396 = vmatpush2.msra.mxu0 %v1476
  %2397 = vmatprep.subr.mxu0 0.0
  %2398 = vmatpush2.msra.mxu0 %v1475
  %2399 = vmatprep.subr.mxu0 0.0
  %2400 = vmatpush2.msra.mxu0 %v1474
  %2401 = vmatprep.subr.mxu0 0.0
  %2402 = vmatpush2.msra.mxu0 %v1473
  %2403 = vmatprep.subr.mxu0 0.0
  %2404 = vmatpush2.msra.mxu0 %v1472
  %2405 = vmatprep.mubr.f32.mxu0 %v1873
  %2406 = vmatmul.mubr.f32.gmra.mxu0 %v1871
  %v2407 = vpop.f32.mrf.mxu0
  %v2408 = vadd.f32 %v2338, %v2407
  %v2409 = vpop.f32.mrf.mxu0
  %2410 = vdwg.mxu0
  %2411 = vmatprep.subr.mxu0 0.0
  %2412 = vmatpush1.msra.mxu0 %v1503
  %2413 = vmatprep.subr.mxu0 0.0
  %2414 = vmatpush1.msra.mxu0 %v1502
  %2415 = vmatprep.subr.mxu0 0.0
  %2416 = vmatpush1.msra.mxu0 %v1501
  %2417 = vmatprep.subr.mxu0 0.0
  %2418 = vmatpush1.msra.mxu0 %v1500
  %2419 = vmatprep.subr.mxu0 0.0
  %2420 = vmatpush1.msra.mxu0 %v1499
  %2421 = vmatprep.subr.mxu0 0.0
  %2422 = vmatpush1.msra.mxu0 %v1498
  %2423 = vmatprep.subr.mxu0 0.0
  %2424 = vmatpush1.msra.mxu0 %v1497
  %2425 = vmatprep.subr.mxu0 0.0
  %2426 = vmatpush1.msra.mxu0 %v1496
  %2427 = vmatprep.subr.mxu0 0.0
  %2428 = vmatpush1.msra.mxu0 %v1495
  %2429 = vmatprep.subr.mxu0 0.0
  %2430 = vmatpush1.msra.mxu0 %v1494
  %2431 = vmatprep.subr.mxu0 0.0
  %2432 = vmatpush1.msra.mxu0 %v1493
  %2433 = vmatprep.subr.mxu0 0.0
  %2434 = vmatpush1.msra.mxu0 %v1492
  %2435 = vmatprep.subr.mxu0 0.0
  %2436 = vmatpush1.msra.mxu0 %v1491
  %2437 = vmatprep.subr.mxu0 0.0
  %2438 = vmatpush1.msra.mxu0 %v1490
  %2439 = vmatprep.subr.mxu0 0.0
  %2440 = vmatpush1.msra.mxu0 %v1489
  %2441 = vmatprep.subr.mxu0 0.0
  %2442 = vmatpush1.msra.mxu0 %v1488
  %2443 = vmatprep.subr.mxu0 0.0
  %2444 = vmatpush2.msra.mxu0 %v1519
  %2445 = vmatprep.subr.mxu0 0.0
  %2446 = vmatpush2.msra.mxu0 %v1518
  %2447 = vmatprep.subr.mxu0 0.0
  %2448 = vmatpush2.msra.mxu0 %v1517
  %2449 = vmatprep.subr.mxu0 0.0
  %2450 = vmatpush2.msra.mxu0 %v1516
  %2451 = vmatprep.subr.mxu0 0.0
  %2452 = vmatpush2.msra.mxu0 %v1515
  %2453 = vmatprep.subr.mxu0 0.0
  %2454 = vmatpush2.msra.mxu0 %v1514
  %2455 = vmatprep.subr.mxu0 0.0
  %2456 = vmatpush2.msra.mxu0 %v1513
  %2457 = vmatprep.subr.mxu0 0.0
  %2458 = vmatpush2.msra.mxu0 %v1512
  %2459 = vmatprep.subr.mxu0 0.0
  %2460 = vmatpush2.msra.mxu0 %v1511
  %2461 = vmatprep.subr.mxu0 0.0
  %2462 = vmatpush2.msra.mxu0 %v1510
  %2463 = vmatprep.subr.mxu0 0.0
  %2464 = vmatpush2.msra.mxu0 %v1509
  %2465 = vmatprep.subr.mxu0 0.0
  %2466 = vmatpush2.msra.mxu0 %v1508
  %2467 = vmatprep.subr.mxu0 0.0
  %2468 = vmatpush2.msra.mxu0 %v1507
  %2469 = vmatprep.subr.mxu0 0.0
  %2470 = vmatpush2.msra.mxu0 %v1506
  %2471 = vmatprep.subr.mxu0 0.0
  %2472 = vmatpush2.msra.mxu0 %v1505
  %2473 = vmatprep.subr.mxu0 0.0
  %2474 = vmatpush2.msra.mxu0 %v1504
  %2475 = vmatprep.mubr.f32.mxu0 %v1889
  %2476 = vmatmul.mubr.f32.gmra.mxu0 %v1881
  %v2477 = vpop.f32.mrf.mxu0
  %v2478 = vadd.f32 %v2408, %v2477
  %v2479 = vpop.f32.mrf.mxu0
  %2480 = vdwg.mxu0
  %2481 = vmatprep.subr.mxu0 0.0
  %2482 = vmatpush1.msra.mxu0 %v1535
  %2483 = vmatprep.subr.mxu0 0.0
  %2484 = vmatpush1.msra.mxu0 %v1534
  %2485 = vmatprep.subr.mxu0 0.0
  %2486 = vmatpush1.msra.mxu0 %v1533
  %2487 = vmatprep.subr.mxu0 0.0
  %2488 = vmatpush1.msra.mxu0 %v1532
  %2489 = vmatprep.subr.mxu0 0.0
  %2490 = vmatpush1.msra.mxu0 %v1531
  %2491 = vmatprep.subr.mxu0 0.0
  %2492 = vmatpush1.msra.mxu0 %v1530
  %2493 = vmatprep.subr.mxu0 0.0
  %2494 = vmatpush1.msra.mxu0 %v1529
  %2495 = vmatprep.subr.mxu0 0.0
  %2496 = vmatpush1.msra.mxu0 %v1528
  %2497 = vmatprep.subr.mxu0 0.0
  %2498 = vmatpush1.msra.mxu0 %v1527
  %2499 = vmatprep.subr.mxu0 0.0
  %2500 = vmatpush1.msra.mxu0 %v1526
  %2501 = vmatprep.subr.mxu0 0.0
  %2502 = vmatpush1.msra.mxu0 %v1525
  %2503 = vmatprep.subr.mxu0 0.0
  %2504 = vmatpush1.msra.mxu0 %v1524
  %2505 = vmatprep.subr.mxu0 0.0
  %2506 = vmatpush1.msra.mxu0 %v1523
  %2507 = vmatprep.subr.mxu0 0.0
  %2508 = vmatpush1.msra.mxu0 %v1522
  %2509 = vmatprep.subr.mxu0 0.0
  %2510 = vmatpush1.msra.mxu0 %v1521
  %2511 = vmatprep.subr.mxu0 0.0
  %2512 = vmatpush1.msra.mxu0 %v1520
  %2513 = vmatprep.subr.mxu0 0.0
  %2514 = vmatpush2.msra.mxu0 %v1551
  %2515 = vmatprep.subr.mxu0 0.0
  %2516 = vmatpush2.msra.mxu0 %v1550
  %2517 = vmatprep.subr.mxu0 0.0
  %2518 = vmatpush2.msra.mxu0 %v1549
  %2519 = vmatprep.subr.mxu0 0.0
  %2520 = vmatpush2.msra.mxu0 %v1548
  %2521 = vmatprep.subr.mxu0 0.0
  %2522 = vmatpush2.msra.mxu0 %v1547
  %2523 = vmatprep.subr.mxu0 0.0
  %2524 = vmatpush2.msra.mxu0 %v1546
  %2525 = vmatprep.subr.mxu0 0.0
  %2526 = vmatpush2.msra.mxu0 %v1545
  %2527 = vmatprep.subr.mxu0 0.0
  %2528 = vmatpush2.msra.mxu0 %v1544
  %2529 = vmatprep.subr.mxu0 0.0
  %2530 = vmatpush2.msra.mxu0 %v1543
  %2531 = vmatprep.subr.mxu0 0.0
  %2532 = vmatpush2.msra.mxu0 %v1542
  %2533 = vmatprep.subr.mxu0 0.0
  %2534 = vmatpush2.msra.mxu0 %v1541
  %2535 = vmatprep.subr.mxu0 0.0
  %2536 = vmatpush2.msra.mxu0 %v1540
  %2537 = vmatprep.subr.mxu0 0.0
  %2538 = vmatpush2.msra.mxu0 %v1539
  %2539 = vmatprep.subr.mxu0 0.0
  %2540 = vmatpush2.msra.mxu0 %v1538
  %2541 = vmatprep.subr.mxu0 0.0
  %2542 = vmatpush2.msra.mxu0 %v1537
  %2543 = vmatprep.subr.mxu0 0.0
  %2544 = vmatpush2.msra.mxu0 %v1536
  %2545 = vmatprep.mubr.f32.mxu0 %v1890
  %2546 = vmatmul.mubr.f32.gmra.mxu0 %v1888
  %v2547 = vpop.f32.mrf.mxu0
  %v2548 = vadd.f32 %v2478, %v2547
  %v2549 = vpop.f32.mrf.mxu0
  %2550 = vdwg.mxu0
  %2551 = vmatprep.subr.mxu0 0.0
  %2552 = vmatpush1.msra.mxu0 %v1567
  %2553 = vmatprep.subr.mxu0 0.0
  %2554 = vmatpush1.msra.mxu0 %v1566
  %2555 = vmatprep.subr.mxu0 0.0
  %2556 = vmatpush1.msra.mxu0 %v1565
  %2557 = vmatprep.subr.mxu0 0.0
  %2558 = vmatpush1.msra.mxu0 %v1564
  %2559 = vmatprep.subr.mxu0 0.0
  %2560 = vmatpush1.msra.mxu0 %v1563
  %2561 = vmatprep.subr.mxu0 0.0
  %2562 = vmatpush1.msra.mxu0 %v1562
  %2563 = vmatprep.subr.mxu0 0.0
  %2564 = vmatpush1.msra.mxu0 %v1561
  %2565 = vmatprep.subr.mxu0 0.0
  %2566 = vmatpush1.msra.mxu0 %v1560
  %2567 = vmatprep.subr.mxu0 0.0
  %2568 = vmatpush1.msra.mxu0 %v1559
  %2569 = vmatprep.subr.mxu0 0.0
  %2570 = vmatpush1.msra.mxu0 %v1558
  %2571 = vmatprep.subr.mxu0 0.0
  %2572 = vmatpush1.msra.mxu0 %v1557
  %2573 = vmatprep.subr.mxu0 0.0
  %2574 = vmatpush1.msra.mxu0 %v1556
  %2575 = vmatprep.subr.mxu0 0.0
  %2576 = vmatpush1.msra.mxu0 %v1555
  %2577 = vmatprep.subr.mxu0 0.0
  %2578 = vmatpush1.msra.mxu0 %v1554
  %2579 = vmatprep.subr.mxu0 0.0
  %2580 = vmatpush1.msra.mxu0 %v1553
  %2581 = vmatprep.subr.mxu0 0.0
  %2582 = vmatpush1.msra.mxu0 %v1552
  %2583 = vmatprep.subr.mxu0 0.0
  %2584 = vmatpush2.msra.mxu0 %v1583
  %2585 = vmatprep.subr.mxu0 0.0
  %2586 = vmatpush2.msra.mxu0 %v1582
  %2587 = vmatprep.subr.mxu0 0.0
  %2588 = vmatpush2.msra.mxu0 %v1581
  %2589 = vmatprep.subr.mxu0 0.0
  %2590 = vmatpush2.msra.mxu0 %v1580
  %2591 = vmatprep.subr.mxu0 0.0
  %2592 = vmatpush2.msra.mxu0 %v1579
  %2593 = vmatprep.subr.mxu0 0.0
  %2594 = vmatpush2.msra.mxu0 %v1578
  %2595 = vmatprep.subr.mxu0 0.0
  %2596 = vmatpush2.msra.mxu0 %v1577
  %2597 = vmatprep.subr.mxu0 0.0
  %2598 = vmatpush2.msra.mxu0 %v1576
  %2599 = vmatprep.subr.mxu0 0.0
  %2600 = vmatpush2.msra.mxu0 %v1575
  %2601 = vmatprep.subr.mxu0 0.0
  %2602 = vmatpush2.msra.mxu0 %v1574
  %2603 = vmatprep.subr.mxu0 0.0
  %2604 = vmatpush2.msra.mxu0 %v1573
  %2605 = vmatprep.subr.mxu0 0.0
  %2606 = vmatpush2.msra.mxu0 %v1572
  %2607 = vmatprep.subr.mxu0 0.0
  %2608 = vmatpush2.msra.mxu0 %v1571
  %2609 = vmatprep.subr.mxu0 0.0
  %2610 = vmatpush2.msra.mxu0 %v1570
  %2611 = vmatprep.subr.mxu0 0.0
  %2612 = vmatpush2.msra.mxu0 %v1569
  %2613 = vmatprep.subr.mxu0 0.0
  %2614 = vmatpush2.msra.mxu0 %v1568
  %2615 = vmatprep.mubr.f32.mxu0 %v1906
  %2616 = vmatmul.mubr.f32.gmra.mxu0 %v1898
  %v2617 = vpop.f32.mrf.mxu0
  %v2618 = vadd.f32 %v2548, %v2617
  %v2619 = vpop.f32.mrf.mxu0
  %2620 = vdwg.mxu0
  %2621 = vmatprep.subr.mxu0 0.0
  %2622 = vmatpush1.msra.mxu0 %v1599
  %2623 = vmatprep.subr.mxu0 0.0
  %2624 = vmatpush1.msra.mxu0 %v1598
  %2625 = vmatprep.subr.mxu0 0.0
  %2626 = vmatpush1.msra.mxu0 %v1597
  %2627 = vmatprep.subr.mxu0 0.0
  %2628 = vmatpush1.msra.mxu0 %v1596
  %2629 = vmatprep.subr.mxu0 0.0
  %2630 = vmatpush1.msra.mxu0 %v1595
  %2631 = vmatprep.subr.mxu0 0.0
  %2632 = vmatpush1.msra.mxu0 %v1594
  %2633 = vmatprep.subr.mxu0 0.0
  %2634 = vmatpush1.msra.mxu0 %v1593
  %2635 = vmatprep.subr.mxu0 0.0
  %2636 = vmatpush1.msra.mxu0 %v1592
  %2637 = vmatprep.subr.mxu0 0.0
  %2638 = vmatpush1.msra.mxu0 %v1591
  %2639 = vmatprep.subr.mxu0 0.0
  %2640 = vmatpush1.msra.mxu0 %v1590
  %2641 = vmatprep.subr.mxu0 0.0
  %2642 = vmatpush1.msra.mxu0 %v1589
  %2643 = vmatprep.subr.mxu0 0.0
  %2644 = vmatpush1.msra.mxu0 %v1588
  %2645 = vmatprep.subr.mxu0 0.0
  %2646 = vmatpush1.msra.mxu0 %v1587
  %2647 = vmatprep.subr.mxu0 0.0
  %2648 = vmatpush1.msra.mxu0 %v1586
  %2649 = vmatprep.subr.mxu0 0.0
  %2650 = vmatpush1.msra.mxu0 %v1585
  %2651 = vmatprep.subr.mxu0 0.0
  %2652 = vmatpush1.msra.mxu0 %v1584
  %2653 = vmatprep.subr.mxu0 0.0
  %2654 = vmatpush2.msra.mxu0 %v1615
  %2655 = vmatprep.subr.mxu0 0.0
  %2656 = vmatpush2.msra.mxu0 %v1614
  %2657 = vmatprep.subr.mxu0 0.0
  %2658 = vmatpush2.msra.mxu0 %v1613
  %2659 = vmatprep.subr.mxu0 0.0
  %2660 = vmatpush2.msra.mxu0 %v1612
  %2661 = vmatprep.subr.mxu0 0.0
  %2662 = vmatpush2.msra.mxu0 %v1611
  %2663 = vmatprep.subr.mxu0 0.0
  %2664 = vmatpush2.msra.mxu0 %v1610
  %2665 = vmatprep.subr.mxu0 0.0
  %2666 = vmatpush2.msra.mxu0 %v1609
  %2667 = vmatprep.subr.mxu0 0.0
  %2668 = vmatpush2.msra.mxu0 %v1608
  %2669 = vmatprep.subr.mxu0 0.0
  %2670 = vmatpush2.msra.mxu0 %v1607
  %2671 = vmatprep.subr.mxu0 0.0
  %2672 = vmatpush2.msra.mxu0 %v1606
  %2673 = vmatprep.subr.mxu0 0.0
  %2674 = vmatpush2.msra.mxu0 %v1605
  %2675 = vmatprep.subr.mxu0 0.0
  %2676 = vmatpush2.msra.mxu0 %v1604
  %2677 = vmatprep.subr.mxu0 0.0
  %2678 = vmatpush2.msra.mxu0 %v1603
  %2679 = vmatprep.subr.mxu0 0.0
  %2680 = vmatpush2.msra.mxu0 %v1602
  %2681 = vmatprep.subr.mxu0 0.0
  %2682 = vmatpush2.msra.mxu0 %v1601
  %2683 = vmatprep.subr.mxu0 0.0
  %2684 = vmatpush2.msra.mxu0 %v1600
  %2685 = vmatprep.mubr.f32.mxu0 %v1907
  %2686 = vmatmul.mubr.f32.gmra.mxu0 %v1905
  %v2687 = vpop.f32.mrf.mxu0
  %v2688 = vadd.f32 %v2618, %v2687
  %v2689 = vpop.f32.mrf.mxu0
  %2690 = vdwg.mxu0
  %2691 = vmatprep.subr.mxu0 0.0
  %2692 = vmatpush1.msra.mxu0 %v1631
  %2693 = vmatprep.subr.mxu0 0.0
  %2694 = vmatpush1.msra.mxu0 %v1630
  %2695 = vmatprep.subr.mxu0 0.0
  %2696 = vmatpush1.msra.mxu0 %v1629
  %2697 = vmatprep.subr.mxu0 0.0
  %2698 = vmatpush1.msra.mxu0 %v1628
  %2699 = vmatprep.subr.mxu0 0.0
  %2700 = vmatpush1.msra.mxu0 %v1627
  %2701 = vmatprep.subr.mxu0 0.0
  %2702 = vmatpush1.msra.mxu0 %v1626
  %2703 = vmatprep.subr.mxu0 0.0
  %2704 = vmatpush1.msra.mxu0 %v1625
  %2705 = vmatprep.subr.mxu0 0.0
  %2706 = vmatpush1.msra.mxu0 %v1624
  %2707 = vmatprep.subr.mxu0 0.0
  %2708 = vmatpush1.msra.mxu0 %v1623
  %2709 = vmatprep.subr.mxu0 0.0
  %2710 = vmatpush1.msra.mxu0 %v1622
  %2711 = vmatprep.subr.mxu0 0.0
  %2712 = vmatpush1.msra.mxu0 %v1621
  %2713 = vmatprep.subr.mxu0 0.0
  %2714 = vmatpush1.msra.mxu0 %v1620
  %2715 = vmatprep.subr.mxu0 0.0
  %2716 = vmatpush1.msra.mxu0 %v1619
  %2717 = vmatprep.subr.mxu0 0.0
  %2718 = vmatpush1.msra.mxu0 %v1618
  %2719 = vmatprep.subr.mxu0 0.0
  %2720 = vmatpush1.msra.mxu0 %v1617
  %2721 = vmatprep.subr.mxu0 0.0
  %2722 = vmatpush1.msra.mxu0 %v1616
  %2723 = vmatprep.subr.mxu0 0.0
  %2724 = vmatpush2.msra.mxu0 %v1647
  %2725 = vmatprep.subr.mxu0 0.0
  %2726 = vmatpush2.msra.mxu0 %v1646
  %2727 = vmatprep.subr.mxu0 0.0
  %2728 = vmatpush2.msra.mxu0 %v1645
  %2729 = vmatprep.subr.mxu0 0.0
  %2730 = vmatpush2.msra.mxu0 %v1644
  %2731 = vmatprep.subr.mxu0 0.0
  %2732 = vmatpush2.msra.mxu0 %v1643
  %2733 = vmatprep.subr.mxu0 0.0
  %2734 = vmatpush2.msra.mxu0 %v1642
  %2735 = vmatprep.subr.mxu0 0.0
  %2736 = vmatpush2.msra.mxu0 %v1641
  %2737 = vmatprep.subr.mxu0 0.0
  %2738 = vmatpush2.msra.mxu0 %v1640
  %2739 = vmatprep.subr.mxu0 0.0
  %2740 = vmatpush2.msra.mxu0 %v1639
  %2741 = vmatprep.subr.mxu0 0.0
  %2742 = vmatpush2.msra.mxu0 %v1638
  %2743 = vmatprep.subr.mxu0 0.0
  %2744 = vmatpush2.msra.mxu0 %v1637
  %2745 = vmatprep.subr.mxu0 0.0
  %2746 = vmatpush2.msra.mxu0 %v1636
  %2747 = vmatprep.subr.mxu0 0.0
  %2748 = vmatpush2.msra.mxu0 %v1635
  %2749 = vmatprep.subr.mxu0 0.0
  %2750 = vmatpush2.msra.mxu0 %v1634
  %2751 = vmatprep.subr.mxu0 0.0
  %2752 = vmatpush2.msra.mxu0 %v1633
  %2753 = vmatprep.subr.mxu0 0.0
  %2754 = vmatpush2.msra.mxu0 %v1632
  %2755 = vmatprep.mubr.f32.mxu0 %v1923
  %2756 = vmatmul.mubr.f32.gmra.mxu0 %v1915
  %v2757 = vpop.f32.mrf.mxu0
  %v2758 = vadd.f32 %v2688, %v2757
  %v2759 = vpop.f32.mrf.mxu0
  %2760 = vdwg.mxu0
  %2761 = vmatprep.subr.mxu0 0.0
  %2762 = vmatpush1.msra.mxu0 %v1663
  %2763 = vmatprep.subr.mxu0 0.0
  %2764 = vmatpush1.msra.mxu0 %v1662
  %2765 = vmatprep.subr.mxu0 0.0
  %2766 = vmatpush1.msra.mxu0 %v1661
  %2767 = vmatprep.subr.mxu0 0.0
  %2768 = vmatpush1.msra.mxu0 %v1660
  %2769 = vmatprep.subr.mxu0 0.0
  %2770 = vmatpush1.msra.mxu0 %v1659
  %2771 = vmatprep.subr.mxu0 0.0
  %2772 = vmatpush1.msra.mxu0 %v1658
  %2773 = vmatprep.subr.mxu0 0.0
  %2774 = vmatpush1.msra.mxu0 %v1657
  %2775 = vmatprep.subr.mxu0 0.0
  %2776 = vmatpush1.msra.mxu0 %v1656
  %2777 = vmatprep.subr.mxu0 0.0
  %2778 = vmatpush1.msra.mxu0 %v1655
  %2779 = vmatprep.subr.mxu0 0.0
  %2780 = vmatpush1.msra.mxu0 %v1654
  %2781 = vmatprep.subr.mxu0 0.0
  %2782 = vmatpush1.msra.mxu0 %v1653
  %2783 = vmatprep.subr.mxu0 0.0
  %2784 = vmatpush1.msra.mxu0 %v1652
  %2785 = vmatprep.subr.mxu0 0.0
  %2786 = vmatpush1.msra.mxu0 %v1651
  %2787 = vmatprep.subr.mxu0 0.0
  %2788 = vmatpush1.msra.mxu0 %v1650
  %2789 = vmatprep.subr.mxu0 0.0
  %2790 = vmatpush1.msra.mxu0 %v1649
  %2791 = vmatprep.subr.mxu0 0.0
  %2792 = vmatpush1.msra.mxu0 %v1648
  %2793 = vmatprep.subr.mxu0 0.0
  %2794 = vmatpush2.msra.mxu0 %v1679
  %2795 = vmatprep.subr.mxu0 0.0
  %2796 = vmatpush2.msra.mxu0 %v1678
  %2797 = vmatprep.subr.mxu0 0.0
  %2798 = vmatpush2.msra.mxu0 %v1677
  %2799 = vmatprep.subr.mxu0 0.0
  %2800 = vmatpush2.msra.mxu0 %v1676
  %2801 = vmatprep.subr.mxu0 0.0
  %2802 = vmatpush2.msra.mxu0 %v1675
  %2803 = vmatprep.subr.mxu0 0.0
  %2804 = vmatpush2.msra.mxu0 %v1674
  %2805 = vmatprep.subr.mxu0 0.0
  %2806 = vmatpush2.msra.mxu0 %v1673
  %2807 = vmatprep.subr.mxu0 0.0
  %2808 = vmatpush2.msra.mxu0 %v1672
  %2809 = vmatprep.subr.mxu0 0.0
  %2810 = vmatpush2.msra.mxu0 %v1671
  %2811 = vmatprep.subr.mxu0 0.0
  %2812 = vmatpush2.msra.mxu0 %v1670
  %2813 = vmatprep.subr.mxu0 0.0
  %2814 = vmatpush2.msra.mxu0 %v1669
  %2815 = vmatprep.subr.mxu0 0.0
  %2816 = vmatpush2.msra.mxu0 %v1668
  %2817 = vmatprep.subr.mxu0 0.0
  %2818 = vmatpush2.msra.mxu0 %v1667
  %2819 = vmatprep.subr.mxu0 0.0
  %2820 = vmatpush2.msra.mxu0 %v1666
  %2821 = vmatprep.subr.mxu0 0.0
  %2822 = vmatpush2.msra.mxu0 %v1665
  %2823 = vmatprep.subr.mxu0 0.0
  %2824 = vmatpush2.msra.mxu0 %v1664
  %2825 = vmatprep.mubr.f32.mxu0 %v1924
  %2826 = vmatmul.mubr.f32.gmra.mxu0 %v1922
  %v2827 = vpop.f32.mrf.mxu0
  %v2828 = vadd.f32 %v2758, %v2827
  %v2829 = vpop.f32.mrf.mxu0
  %2830 = vdwg.mxu0
  %2831 = vmatprep.subr.mxu0 0.0
  %2832 = vmatpush1.msra.mxu0 %v1695
  %2833 = vmatprep.subr.mxu0 0.0
  %2834 = vmatpush1.msra.mxu0 %v1694
  %2835 = vmatprep.subr.mxu0 0.0
  %2836 = vmatpush1.msra.mxu0 %v1693
  %2837 = vmatprep.subr.mxu0 0.0
  %2838 = vmatpush1.msra.mxu0 %v1692
  %2839 = vmatprep.subr.mxu0 0.0
  %2840 = vmatpush1.msra.mxu0 %v1691
  %2841 = vmatprep.subr.mxu0 0.0
  %2842 = vmatpush1.msra.mxu0 %v1690
  %2843 = vmatprep.subr.mxu0 0.0
  %2844 = vmatpush1.msra.mxu0 %v1689
  %2845 = vmatprep.subr.mxu0 0.0
  %2846 = vmatpush1.msra.mxu0 %v1688
  %2847 = vmatprep.subr.mxu0 0.0
  %2848 = vmatpush1.msra.mxu0 %v1687
  %2849 = vmatprep.subr.mxu0 0.0
  %2850 = vmatpush1.msra.mxu0 %v1686
  %2851 = vmatprep.subr.mxu0 0.0
  %2852 = vmatpush1.msra.mxu0 %v1685
  %2853 = vmatprep.subr.mxu0 0.0
  %2854 = vmatpush1.msra.mxu0 %v1684
  %2855 = vmatprep.subr.mxu0 0.0
  %2856 = vmatpush1.msra.mxu0 %v1683
  %2857 = vmatprep.subr.mxu0 0.0
  %2858 = vmatpush1.msra.mxu0 %v1682
  %2859 = vmatprep.subr.mxu0 0.0
  %2860 = vmatpush1.msra.mxu0 %v1681
  %2861 = vmatprep.subr.mxu0 0.0
  %2862 = vmatpush1.msra.mxu0 %v1680
  %2863 = vmatprep.subr.mxu0 0.0
  %2864 = vmatpush2.msra.mxu0 %v1711
  %2865 = vmatprep.subr.mxu0 0.0
  %2866 = vmatpush2.msra.mxu0 %v1710
  %2867 = vmatprep.subr.mxu0 0.0
  %2868 = vmatpush2.msra.mxu0 %v1709
  %2869 = vmatprep.subr.mxu0 0.0
  %2870 = vmatpush2.msra.mxu0 %v1708
  %2871 = vmatprep.subr.mxu0 0.0
  %2872 = vmatpush2.msra.mxu0 %v1707
  %2873 = vmatprep.subr.mxu0 0.0
  %2874 = vmatpush2.msra.mxu0 %v1706
  %2875 = vmatprep.subr.mxu0 0.0
  %2876 = vmatpush2.msra.mxu0 %v1705
  %2877 = vmatprep.subr.mxu0 0.0
  %2878 = vmatpush2.msra.mxu0 %v1704
  %2879 = vmatprep.subr.mxu0 0.0
  %2880 = vmatpush2.msra.mxu0 %v1703
  %2881 = vmatprep.subr.mxu0 0.0
  %2882 = vmatpush2.msra.mxu0 %v1702
  %2883 = vmatprep.subr.mxu0 0.0
  %2884 = vmatpush2.msra.mxu0 %v1701
  %2885 = vmatprep.subr.mxu0 0.0
  %2886 = vmatpush2.msra.mxu0 %v1700
  %2887 = vmatprep.subr.mxu0 0.0
  %2888 = vmatpush2.msra.mxu0 %v1699
  %2889 = vmatprep.subr.mxu0 0.0
  %2890 = vmatpush2.msra.mxu0 %v1698
  %2891 = vmatprep.subr.mxu0 0.0
  %2892 = vmatpush2.msra.mxu0 %v1697
  %2893 = vmatprep.subr.mxu0 0.0
  %2894 = vmatpush2.msra.mxu0 %v1696
  %2895 = vmatprep.mubr.f32.mxu0 %v1940
  %2896 = vmatmul.mubr.f32.gmra.mxu0 %v1932
  %v2897 = vpop.f32.mrf.mxu0
  %v2898 = vadd.f32 %v2828, %v2897
  %v2899 = vpop.f32.mrf.mxu0
  %2900 = vdwg.mxu0
  %2901 = vmatprep.subr.mxu0 0.0
  %2902 = vmatpush1.msra.mxu0 %v1727
  %2903 = vmatprep.subr.mxu0 0.0
  %2904 = vmatpush1.msra.mxu0 %v1726
  %2905 = vmatprep.subr.mxu0 0.0
  %2906 = vmatpush1.msra.mxu0 %v1725
  %2907 = vmatprep.subr.mxu0 0.0
  %2908 = vmatpush1.msra.mxu0 %v1724
  %2909 = vmatprep.subr.mxu0 0.0
  %2910 = vmatpush1.msra.mxu0 %v1723
  %2911 = vmatprep.subr.mxu0 0.0
  %2912 = vmatpush1.msra.mxu0 %v1722
  %2913 = vmatprep.subr.mxu0 0.0
  %2914 = vmatpush1.msra.mxu0 %v1721
  %2915 = vmatprep.subr.mxu0 0.0
  %2916 = vmatpush1.msra.mxu0 %v1720
  %2917 = vmatprep.subr.mxu0 0.0
  %2918 = vmatpush1.msra.mxu0 %v1719
  %2919 = vmatprep.subr.mxu0 0.0
  %2920 = vmatpush1.msra.mxu0 %v1718
  %2921 = vmatprep.subr.mxu0 0.0
  %2922 = vmatpush1.msra.mxu0 %v1717
  %2923 = vmatprep.subr.mxu0 0.0
  %2924 = vmatpush1.msra.mxu0 %v1716
  %2925 = vmatprep.subr.mxu0 0.0
  %2926 = vmatpush1.msra.mxu0 %v1715
  %2927 = vmatprep.subr.mxu0 0.0
  %2928 = vmatpush1.msra.mxu0 %v1714
  %2929 = vmatprep.subr.mxu0 0.0
  %2930 = vmatpush1.msra.mxu0 %v1713
  %2931 = vmatprep.subr.mxu0 0.0
  %2932 = vmatpush1.msra.mxu0 %v1712
  %2933 = vmatprep.subr.mxu0 0.0
  %2934 = vmatpush2.msra.mxu0 %v1743
  %2935 = vmatprep.subr.mxu0 0.0
  %2936 = vmatpush2.msra.mxu0 %v1742
  %2937 = vmatprep.subr.mxu0 0.0
  %2938 = vmatpush2.msra.mxu0 %v1741
  %2939 = vmatprep.subr.mxu0 0.0
  %2940 = vmatpush2.msra.mxu0 %v1740
  %2941 = vmatprep.subr.mxu0 0.0
  %2942 = vmatpush2.msra.mxu0 %v1739
  %2943 = vmatprep.subr.mxu0 0.0
  %2944 = vmatpush2.msra.mxu0 %v1738
  %2945 = vmatprep.subr.mxu0 0.0
  %2946 = vmatpush2.msra.mxu0 %v1737
  %2947 = vmatprep.subr.mxu0 0.0
  %2948 = vmatpush2.msra.mxu0 %v1736
  %2949 = vmatprep.subr.mxu0 0.0
  %2950 = vmatpush2.msra.mxu0 %v1735
  %2951 = vmatprep.subr.mxu0 0.0
  %2952 = vmatpush2.msra.mxu0 %v1734
  %2953 = vmatprep.subr.mxu0 0.0
  %2954 = vmatpush2.msra.mxu0 %v1733
  %2955 = vmatprep.subr.mxu0 0.0
  %2956 = vmatpush2.msra.mxu0 %v1732
  %2957 = vmatprep.subr.mxu0 0.0
  %2958 = vmatpush2.msra.mxu0 %v1731
  %2959 = vmatprep.subr.mxu0 0.0
  %2960 = vmatpush2.msra.mxu0 %v1730
  %2961 = vmatprep.subr.mxu0 0.0
  %2962 = vmatpush2.msra.mxu0 %v1729
  %2963 = vmatprep.subr.mxu0 0.0
  %2964 = vmatpush2.msra.mxu0 %v1728
  %2965 = vmatprep.mubr.f32.mxu0 %v1941
  %2966 = vmatmul.mubr.f32.gmra.mxu0 %v1939
  %v2967 = vpop.f32.mrf.mxu0
  %v2968 = vadd.f32 %v2898, %v2967
  %v2969 = vpop.f32.mrf.mxu0
  %2970 = vdwg.mxu0
  %2971 = vmatprep.subr.mxu0 0.0
  %2972 = vmatpush1.msra.mxu0 %v1759
  %2973 = vmatprep.subr.mxu0 0.0
  %2974 = vmatpush1.msra.mxu0 %v1758
  %2975 = vmatprep.subr.mxu0 0.0
  %2976 = vmatpush1.msra.mxu0 %v1757
  %2977 = vmatprep.subr.mxu0 0.0
  %2978 = vmatpush1.msra.mxu0 %v1756
  %2979 = vmatprep.subr.mxu0 0.0
  %2980 = vmatpush1.msra.mxu0 %v1755
  %2981 = vmatprep.subr.mxu0 0.0
  %2982 = vmatpush1.msra.mxu0 %v1754
  %2983 = vmatprep.subr.mxu0 0.0
  %2984 = vmatpush1.msra.mxu0 %v1753
  %2985 = vmatprep.subr.mxu0 0.0
  %2986 = vmatpush1.msra.mxu0 %v1752
  %2987 = vmatprep.subr.mxu0 0.0
  %2988 = vmatpush1.msra.mxu0 %v1751
  %2989 = vmatprep.subr.mxu0 0.0
  %2990 = vmatpush1.msra.mxu0 %v1750
  %2991 = vmatprep.subr.mxu0 0.0
  %2992 = vmatpush1.msra.mxu0 %v1749
  %2993 = vmatprep.subr.mxu0 0.0
  %2994 = vmatpush1.msra.mxu0 %v1748
  %2995 = vmatprep.subr.mxu0 0.0
  %2996 = vmatpush1.msra.mxu0 %v1747
  %2997 = vmatprep.subr.mxu0 0.0
  %2998 = vmatpush1.msra.mxu0 %v1746
  %2999 = vmatprep.subr.mxu0 0.0
  %3000 = vmatpush1.msra.mxu0 %v1745
  %3001 = vmatprep.subr.mxu0 0.0
  %3002 = vmatpush1.msra.mxu0 %v1744
  %3003 = vmatprep.subr.mxu0 0.0
  %3004 = vmatpush2.msra.mxu0 %v1775
  %3005 = vmatprep.subr.mxu0 0.0
  %3006 = vmatpush2.msra.mxu0 %v1774
  %3007 = vmatprep.subr.mxu0 0.0
  %3008 = vmatpush2.msra.mxu0 %v1773
  %3009 = vmatprep.subr.mxu0 0.0
  %3010 = vmatpush2.msra.mxu0 %v1772
  %3011 = vmatprep.subr.mxu0 0.0
  %3012 = vmatpush2.msra.mxu0 %v1771
  %3013 = vmatprep.subr.mxu0 0.0
  %3014 = vmatpush2.msra.mxu0 %v1770
  %3015 = vmatprep.subr.mxu0 0.0
  %3016 = vmatpush2.msra.mxu0 %v1769
  %3017 = vmatprep.subr.mxu0 0.0
  %3018 = vmatpush2.msra.mxu0 %v1768
  %3019 = vmatprep.subr.mxu0 0.0
  %3020 = vmatpush2.msra.mxu0 %v1767
  %3021 = vmatprep.subr.mxu0 0.0
  %3022 = vmatpush2.msra.mxu0 %v1766
  %3023 = vmatprep.subr.mxu0 0.0
  %3024 = vmatpush2.msra.mxu0 %v1765
  %3025 = vmatprep.subr.mxu0 0.0
  %3026 = vmatpush2.msra.mxu0 %v1764
  %3027 = vmatprep.subr.mxu0 0.0
  %3028 = vmatpush2.msra.mxu0 %v1763
  %3029 = vmatprep.subr.mxu0 0.0
  %3030 = vmatpush2.msra.mxu0 %v1762
  %3031 = vmatprep.subr.mxu0 0.0
  %3032 = vmatpush2.msra.mxu0 %v1761
  %3033 = vmatprep.subr.mxu0 0.0
  %3034 = vmatpush2.msra.mxu0 %v1760
  %3035 = vmatprep.mubr.f32.mxu0 %v1957
  %3036 = vmatmul.mubr.f32.gmra.mxu0 %v1949
  %v3037 = vpop.f32.mrf.mxu0
  %v3038 = vadd.f32 %v2968, %v3037
  %v3039 = vpop.f32.mrf.mxu0
  %3040 = vdwg.mxu0
  %3041 = vmatprep.subr.mxu0 0.0
  %3042 = vmatpush1.msra.mxu0 %v1791
  %3043 = vmatprep.subr.mxu0 0.0
  %3044 = vmatpush1.msra.mxu0 %v1790
  %3045 = vmatprep.subr.mxu0 0.0
  %3046 = vmatpush1.msra.mxu0 %v1789
  %3047 = vmatprep.subr.mxu0 0.0
  %3048 = vmatpush1.msra.mxu0 %v1788
  %3049 = vmatprep.subr.mxu0 0.0
  %3050 = vmatpush1.msra.mxu0 %v1787
  %3051 = vmatprep.subr.mxu0 0.0
  %3052 = vmatpush1.msra.mxu0 %v1786
  %3053 = vmatprep.subr.mxu0 0.0
  %3054 = vmatpush1.msra.mxu0 %v1785
  %3055 = vmatprep.subr.mxu0 0.0
  %3056 = vmatpush1.msra.mxu0 %v1784
  %3057 = vmatprep.subr.mxu0 0.0
  %3058 = vmatpush1.msra.mxu0 %v1783
  %3059 = vmatprep.subr.mxu0 0.0
  %3060 = vmatpush1.msra.mxu0 %v1782
  %3061 = vmatprep.subr.mxu0 0.0
  %3062 = vmatpush1.msra.mxu0 %v1781
  %3063 = vmatprep.subr.mxu0 0.0
  %3064 = vmatpush1.msra.mxu0 %v1780
  %3065 = vmatprep.subr.mxu0 0.0
  %3066 = vmatpush1.msra.mxu0 %v1779
  %3067 = vmatprep.subr.mxu0 0.0
  %3068 = vmatpush1.msra.mxu0 %v1778
  %3069 = vmatprep.subr.mxu0 0.0
  %3070 = vmatpush1.msra.mxu0 %v1777
  %3071 = vmatprep.subr.mxu0 0.0
  %3072 = vmatpush1.msra.mxu0 %v1776
  %3073 = vmatprep.subr.mxu0 0.0
  %3074 = vmatpush2.msra.mxu0 %v1807
  %3075 = vmatprep.subr.mxu0 0.0
  %3076 = vmatpush2.msra.mxu0 %v1806
  %3077 = vmatprep.subr.mxu0 0.0
  %3078 = vmatpush2.msra.mxu0 %v1805
  %3079 = vmatprep.subr.mxu0 0.0
  %3080 = vmatpush2.msra.mxu0 %v1804
  %3081 = vmatprep.subr.mxu0 0.0
  %3082 = vmatpush2.msra.mxu0 %v1803
  %3083 = vmatprep.subr.mxu0 0.0
  %3084 = vmatpush2.msra.mxu0 %v1802
  %3085 = vmatprep.subr.mxu0 0.0
  %3086 = vmatpush2.msra.mxu0 %v1801
  %3087 = vmatprep.subr.mxu0 0.0
  %3088 = vmatpush2.msra.mxu0 %v1800
  %3089 = vmatprep.subr.mxu0 0.0
  %3090 = vmatpush2.msra.mxu0 %v1799
  %3091 = vmatprep.subr.mxu0 0.0
  %3092 = vmatpush2.msra.mxu0 %v1798
  %3093 = vmatprep.subr.mxu0 0.0
  %3094 = vmatpush2.msra.mxu0 %v1797
  %3095 = vmatprep.subr.mxu0 0.0
  %3096 = vmatpush2.msra.mxu0 %v1796
  %3097 = vmatprep.subr.mxu0 0.0
  %3098 = vmatpush2.msra.mxu0 %v1795
  %3099 = vmatprep.subr.mxu0 0.0
  %3100 = vmatpush2.msra.mxu0 %v1794
  %3101 = vmatprep.subr.mxu0 0.0
  %3102 = vmatpush2.msra.mxu0 %v1793
  %3103 = vmatprep.subr.mxu0 0.0
  %3104 = vmatpush2.msra.mxu0 %v1792
  %3105 = vmatprep.mubr.f32.mxu0 %v1958
  %3106 = vmatmul.mubr.f32.gmra.mxu0 %v1956
  %v3107 = vpop.f32.mrf.mxu0
  %v3108 = vadd.f32 %v3038, %v3107
  %v3109 = vpop.f32.mrf.mxu0
  %3110 = vdwg.mxu0
  %vm3111 = vcmp.ge.f32.partialorder %v3108, 0.0
  %v3112 = vmul.f32 %v3108, 0.2
  %v3113 = vsel %vm3111, %v3108, %v3112
  %v3114 = vld [vmem:[%s7] sm:$0xff]
  %v3115 = vld [vmem:[%s7 + $0x8] sm:$0xff]
  %v3116 = vld [vmem:[%s7 + $0x10] sm:$0xff]
  %v3117 = vld [vmem:[%s7 + $0x18] sm:$0xff]
  %v3118 = vld [vmem:[#allocation7] sm:$0x1]
  %v3120 = vlaneseq
  %v3121 = vshrl.u32 %v3120, 7
  %v3122 = vsub.s32 0, %v3121
  %v3123 = vrot.slane %v3118, %v3122
  %vm3125 = vcmask 261120
  %v3127 = vsel %vm3125, %v3113, 0
  %3129 = vmatprep.subr.mxu0 0.0
  %3130 = vmatpush1.msra.mxu0 0.0
  %3131 = vmatprep.subr.mxu0 0.0
  %3132 = vmatpush1.msra.mxu0 0.0
  %3133 = vmatprep.subr.mxu0 0.0
  %3134 = vmatpush1.msra.mxu0 0.0
  %3135 = vmatprep.subr.mxu0 0.0
  %3136 = vmatpush1.msra.mxu0 0.0
  %3137 = vmatprep.subr.mxu0 0.0
  %3138 = vmatpush1.msra.mxu0 0.0
  %3139 = vmatprep.subr.mxu0 0.0
  %3140 = vmatpush1.msra.mxu0 0.0
  %3141 = vmatprep.subr.mxu0 0.0
  %3142 = vmatpush1.msra.mxu0 0.0
  %3143 = vmatprep.subr.mxu0 0.0
  %3144 = vmatpush1.msra.mxu0 0.0
  %3145 = vmatprep.subr.mxu0 0.0
  %3146 = vmatpush1.msra.mxu0 0.0
  %3147 = vmatprep.subr.mxu0 0.0
  %3148 = vmatpush1.msra.mxu0 0.0
  %3149 = vmatprep.subr.mxu0 0.0
  %3150 = vmatpush1.msra.mxu0 0.0
  %3151 = vmatprep.subr.mxu0 0.0
  %3152 = vmatpush1.msra.mxu0 0.0
  %3153 = vmatprep.subr.mxu0 0.0
  %3154 = vmatpush1.msra.mxu0 %v3117
  %3155 = vmatprep.subr.mxu0 0.0
  %3156 = vmatpush1.msra.mxu0 %v3116
  %3157 = vmatprep.subr.mxu0 0.0
  %3158 = vmatpush1.msra.mxu0 %v3115
  %3159 = vmatprep.subr.mxu0 0.0
  %3160 = vmatpush1.msra.mxu0 %v3114
  %3161 = vmatprep.subr.mxu0 0.0
  %3162 = vmatpush2.msra.mxu0 0.0
  %3163 = vmatprep.subr.mxu0 0.0
  %3164 = vmatpush2.msra.mxu0 0.0
  %3165 = vmatprep.subr.mxu0 0.0
  %3166 = vmatpush2.msra.mxu0 0.0
  %3167 = vmatprep.subr.mxu0 0.0
  %3168 = vmatpush2.msra.mxu0 0.0
  %3169 = vmatprep.subr.mxu0 0.0
  %3170 = vmatpush2.msra.mxu0 0.0
  %3171 = vmatprep.subr.mxu0 0.0
  %3172 = vmatpush2.msra.mxu0 0.0
  %3173 = vmatprep.subr.mxu0 0.0
  %3174 = vmatpush2.msra.mxu0 0.0
  %3175 = vmatprep.subr.mxu0 0.0
  %3176 = vmatpush2.msra.mxu0 0.0
  %3177 = vmatprep.subr.mxu0 0.0
  %3178 = vmatpush2.msra.mxu0 0.0
  %3179 = vmatprep.subr.mxu0 0.0
  %3180 = vmatpush2.msra.mxu0 0.0
  %3181 = vmatprep.subr.mxu0 0.0
  %3182 = vmatpush2.msra.mxu0 0.0
  %3183 = vmatprep.subr.mxu0 0.0
  %3184 = vmatpush2.msra.mxu0 0.0
  %3185 = vmatprep.subr.mxu0 0.0
  %3186 = vmatpush2.msra.mxu0 0.0
  %3187 = vmatprep.subr.mxu0 0.0
  %3188 = vmatpush2.msra.mxu0 0.0
  %3189 = vmatprep.subr.mxu0 0.0
  %3190 = vmatpush2.msra.mxu0 0.0
  %3191 = vmatprep.subr.mxu0 0.0
  %3192 = vmatpush2.msra.mxu0 0.0
  %3193 = vmatprep.mubr.f32.mxu0 0.0
  %3194 = vmatmul.mubr.f32.gmra.mxu0 %v3127
  %v3195 = vpop.f32.mrf.mxu0
  %v3196 = vadd.f32 %v3123, %v3195
  %v3197 = vpop.f32.mrf.mxu0
  %3198 = vdwg.mxu0
  %vm3199 = vcmask 1024
  %3200 = vst.msk [vmem:[%s9] sm:$0x3] %vm3199, %v3196
  // Predicated region
  $region38: #{tpu_custom_call.1} parent=0 // pred_check
    _
  $region39: #{tpu_custom_call.1} parent=0 // pred_check_branch
    %3202 = sbr.rel (0) target = $region41
  $region40: #{tpu_custom_call.1} parent=0 // pred_region
    _
  $region41: #{tpu_custom_call.1} parent=0 // pred_fallthru
    _
  // Predicated region
  $region42: #{tpu_custom_call.1} parent=0 // pred_check
    _
  $region43: #{tpu_custom_call.1} parent=0 // pred_check_branch
    %3204 = sbr.rel (0) target = $region45
  $region44: #{tpu_custom_call.1} parent=0 // pred_region
    _
  $region45: #{tpu_custom_call.1} parent=0 // pred_fallthru
    _

</llo_original>
